<compile_context>
chip_gen: v5e
topology: v5e:2x2
jax: 0.10.0
libtpu: 0.0.40
codegen_flags: <defaults>
</compile_context>

<pallas_src>
import functools

import jax
import jax.numpy as jnp
from jax.experimental import pallas as pl
from jax.experimental.pallas import tpu as pltpu


# ---------------------------------------------------------------------------
# Pallas kernels
# ---------------------------------------------------------------------------
def _mm_bias_act_kernel(x_ref, w_ref, b_ref, o_ref, *, apply_relu):
    """o = x @ w + b (row-broadcast), optional ReLU.  bf16 in, f32 accumulate."""
    acc = jnp.dot(x_ref[...], w_ref[...], preferred_element_type=jnp.float32)
    acc = acc + b_ref[...]                         # (1, N) broadcast, f32
    if apply_relu:
        acc = jnp.maximum(acc, 0.0)
    o_ref[...] = acc.astype(o_ref.dtype)


def pallas_matmul(x, w, b, *, relu, out_dtype=jnp.bfloat16):
    """y = x @ w + b (optional ReLU).  x:(M,K)  w:(K,N)  b:(1,N).  grid=(1,)."""
    M, K = x.shape
    K2, N = w.shape
    assert K == K2 and b.shape == (1, N)
    kern = functools.partial(_mm_bias_act_kernel, apply_relu=relu)
    flops = 2 * M * K * N
    bytes_acc = (int(x.size) * x.dtype.itemsize + int(w.size) * w.dtype.itemsize
                 + int(b.size) * b.dtype.itemsize
                 + M * N * jnp.dtype(out_dtype).itemsize)
    return pl.pallas_call(
        kern,
        out_shape=jax.ShapeDtypeStruct((M, N), out_dtype),
        grid=(1,),
        in_specs=[
            pl.BlockSpec((M, K), lambda i: (0, 0)),
            pl.BlockSpec((K, N), lambda i: (0, 0)),
            pl.BlockSpec((1, N), lambda i: (0, 0)),
        ],
        out_specs=pl.BlockSpec((M, N), lambda i: (0, 0)),
        cost_estimate=pl.CostEstimate(flops=flops, transcendentals=0,
                                      bytes_accessed=bytes_acc),
    )(x, w, b)


def _fc_fused_kernel(x_ref, w1_ref, b1_ref, w2_ref, b2_ref, o_ref):
    """One 128-wide hidden block of  o = relu(x @ w1 + b1) @ w2 + b2.

    The grid axis tiles the 512 hidden units; the f32 output block stays
    resident (same block index every step) and acts as the fc2 accumulator.
    """
    j = pl.program_id(0)

    @pl.when(j == 0)
    def _():                                       # init with fc2 bias
        o_ref[...] = jnp.broadcast_to(b2_ref[...], o_ref.shape).astype(o_ref.dtype)

    h = jnp.dot(x_ref[...], w1_ref[...], preferred_element_type=jnp.float32)
    h = jnp.maximum(h + b1_ref[...], 0.0)          # (M, 128) f32
    o_ref[...] += jnp.dot(h.astype(w2_ref.dtype), w2_ref[...],
                          preferred_element_type=jnp.float32)


def pallas_fc_fused(x, w1, b1, w2, b2, *, tn1=128):
    """Fused fc1+ReLU+fc2, pipelined over 128-wide hidden blocks of w1/w2."""
    M, K1 = x.shape
    K1b, N1 = w1.shape
    N1b, N2 = w2.shape
    assert K1 == K1b and N1 == N1b and N1 % tn1 == 0
    nblk = N1 // tn1
    flops = 2 * M * K1 * N1 + 2 * M * N1 * N2
    bytes_acc = sum(int(a.size) * a.dtype.itemsize
                    for a in (x, w1, b1, w2, b2)) + M * N2 * 4
    return pl.pallas_call(
        _fc_fused_kernel,
        out_shape=jax.ShapeDtypeStruct((M, N2), jnp.float32),
        grid=(nblk,),
        in_specs=[
            pl.BlockSpec((M, K1), lambda j: (0, 0)),     # feat: resident
            pl.BlockSpec((K1, tn1), lambda j: (0, j)),   # wf1: streamed blocks
            pl.BlockSpec((1, tn1), lambda j: (0, j)),    # bf1 block
            pl.BlockSpec((tn1, N2), lambda j: (j, 0)),   # wf2: streamed blocks
            pl.BlockSpec((1, N2), lambda j: (0, 0)),     # bf2: resident
        ],
        out_specs=pl.BlockSpec((M, N2), lambda j: (0, 0)),   # resident accumulator
        compiler_params=pltpu.CompilerParams(
            dimension_semantics=("arbitrary",)),
        cost_estimate=pl.CostEstimate(flops=flops, transcendentals=0,
                                      bytes_accessed=bytes_acc),
    )(x, w1, b1, w2, b2)


# ---------------------------------------------------------------------------
# im2col glue (tiny plain-JAX strided slices / stack / reshape; no transposes)
# Activations stay NHWC end-to-end so every inter-layer reshape is contiguous.
# ---------------------------------------------------------------------------
def _im2col_nhwc(x_nhwc, kh, kw, stride):
    """(B,H,W,C) -> (B*Ho*Wo, kh*kw*C); columns ordered (i, j, c)."""
    B, H, W, C = x_nhwc.shape
    Ho = (H - kh) // stride + 1
    Wo = (W - kw) // stride + 1
    cols = [x_nhwc[:, i:i + stride * Ho:stride, j:j + stride * Wo:stride, :]
            for i in range(kh) for j in range(kw)]        # each (B, Ho, Wo, C)
    p = jnp.stack(cols, axis=3)                           # (B, Ho, Wo, kh*kw, C)
    return p.reshape(B * Ho * Wo, kh * kw * C), Ho, Wo


# ---------------------------------------------------------------------------
# DQN parameters (PyTorch layouts, deterministic uniform init)
# ---------------------------------------------------------------------------
def _conv_out(s, k, st):
    return (s - k) // st + 1


def init_dqn_params(key, input_shape, num_actions):
    c_in, H, W = input_shape

    def uni(k, shape, fan_in):
        bound = 1.0 / jnp.sqrt(jnp.float32(fan_in))
        return jax.random.uniform(k, shape, jnp.float32, -bound, bound)

    ks = jax.random.split(key, 10)
    params = {
        "w1": uni(ks[0], (16, c_in, 8, 8), c_in * 8 * 8),
        "b1": uni(ks[1], (16,), c_in * 8 * 8),
        "w2": uni(ks[2], (32, 16, 4, 4), 16 * 4 * 4),
        "b2": uni(ks[3], (32,), 16 * 4 * 4),
        "w3": uni(ks[4], (32, 32, 3, 3), 32 * 3 * 3),
        "b3": uni(ks[5], (32,), 32 * 3 * 3),
    }
    h = _conv_out(_conv_out(_conv_out(H, 8, 4), 4, 2), 3, 1)
    w_ = _conv_out(_conv_out(_conv_out(W, 8, 4), 4, 2), 3, 1)
    feat = 32 * h * w_                                     # == feature_size()
    params["wf1"] = uni(ks[6], (512, feat), feat)
    params["bf1"] = uni(ks[7], (512,), feat)
    params["wf2"] = uni(ks[8], (num_actions, 512), 512)
    params["bf2"] = uni(ks[9], (num_actions,), 512)
    return params


def prepare_kernel_params(p):
    """One-time (off the hot path) weight re-layout / dtype cast / padding."""
    bf16, f32 = jnp.bfloat16, jnp.float32

    def conv_w(w):
        # (Cout, Cin, kh, kw) -> (kh*kw*Cin, Cout), rows ordered (i, j, c)
        co, ci, kh, kw = w.shape
        return w.transpose(2, 3, 1, 0).reshape(kh * kw * ci, co).astype(bf16)

    c3 = p["w3"].shape[0]
    wf1 = p["wf1"]                                         # (512, feat)
    n_hidden, feat = wf1.shape
    hw3 = feat // c3                                       # H3*W3
    n_act = p["wf2"].shape[0]
    n_pad = max(128, ((n_act + 127) // 128) * 128)         # lane-dense padded out

    # Fold the PyTorch NCHW flatten order (c, h, w) into wf1's rows so that our
    # (hw, c)-ordered features need NO runtime permutation:
    #   wf1_perm[hw*c3 + c, n] = wf1[n, c*hw3 + hw]
    wf1_perm = wf1.reshape(n_hidden, c3, hw3).transpose(2, 1, 0).reshape(feat, n_hidden)

    return {
        "w1t": conv_w(p["w1"]),                                  # (64, 16)
        "b1m": p["b1"].reshape(1, -1).astype(f32),               # (1, 16)
        "w2t": conv_w(p["w2"]),                                  # (256, 32)
        "b2m": p["b2"].reshape(1, -1).astype(f32),               # (1, 32)
        "w3t": conv_w(p["w3"]),                                  # (288, 32)
        "b3m": p["b3"].reshape(1, -1).astype(f32),               # (1, 32)
        "wf1p": wf1_perm.astype(bf16),                           # (1568, 512)
        "bf1m": p["bf1"].reshape(1, -1).astype(f32),             # (1, 512)
        "wf2p": jnp.zeros((n_hidden, n_pad), bf16).at[:, :n_act].set(
            p["wf2"].T.astype(bf16)),                            # (512, 128)
        "bf2p": jnp.zeros((1, n_pad), f32).at[:, :n_act].set(
            p["bf2"].astype(f32)),                               # (1, 128)
    }


# ---------------------------------------------------------------------------
# Forward pass (Pallas) and pure-JAX f32 reference
# ---------------------------------------------------------------------------
def dqn_forward(kp, x, *, num_actions):
    B = x.shape[0]
    bf16 = jnp.bfloat16
    c3 = kp["w3t"].shape[1]

    # NHWC activations; bf16 matmul operands (f32 MXU accumulation).
    # (With unnormalized 0-255 frames, keep this cast in f32 for tighter parity.)
    xh = x.transpose(0, 2, 3, 1).astype(bf16)                    # (B, H, W, Cin)

    # conv1: (B*400, 64) @ (64, 16)
    p1, H1, W1 = _im2col_nhwc(xh, 8, 8, 4)
    y1 = pallas_matmul(p1, kp["w1t"], kp["b1m"], relu=True)      # (B*400, 16)

    # conv2: (B*81, 256) @ (256, 32)   -- reshape below is free (contiguous)
    p2, H2, W2 = _im2col_nhwc(y1.reshape(B, H1, W1, -1), 4, 4, 2)
    y2 = pallas_matmul(p2, kp["w2t"], kp["b2m"], relu=True)      # (B*81, 32)

    # conv3: (B*49, 288) @ (288, 32)
    p3, H3, W3 = _im2col_nhwc(y2.reshape(B, H2, W2, -1), 3, 3, 1)
    y3 = pallas_matmul(p3, kp["w3t"], kp["b3m"], relu=True)      # (B*49, 32)

    # x.view(B, -1): free contiguous reshape; the PyTorch (c,h,w) order lives
    # in the permuted wf1 rows built at init.
    feat = y3.reshape(B, H3 * W3 * c3)                           # (B, 1568)

    # fused fc1 + ReLU + fc2, pipelined over 128-wide hidden blocks
    out = pallas_fc_fused(feat, kp["wf1p"], kp["bf1m"], kp["wf2p"], kp["bf2p"])
    return out[:, :num_actions]


def dqn_forward_ref(params, x):
    """Pure-JAX f32 reference with PyTorch semantics (NCHW convs, .view flatten)."""
    def conv(x, w, b, s):
        y = jax.lax.conv_general_dilated(
            x, w, window_strides=(s, s), padding="VALID",
            dimension_numbers=("NCHW", "OIHW", "NCHW"))
        return jnp.maximum(y + b.reshape(1, -1, 1, 1), 0.0)

    x = conv(x, params["w1"], params["b1"], 4)
    x = conv(x, params["w2"], params["b2"], 2)
    x = conv(x, params["w3"], params["b3"], 1)
    x = x.reshape(x.shape[0], -1)
    x = jnp.maximum(x @ params["wf1"].T + params["bf1"], 0.0)
    return x @ params["wf2"].T + params["bf2"]


# ---------------------------------------------------------------------------
if __name__ == "__main__":
    input_shape = (1, 84, 84)     # WarpFrame produces (1, 84, 84) observations
    num_actions = 6
    batch = 2

    key = jax.random.PRNGKey(0)
    kparam_key, kx = jax.random.split(key)
    params = init_dqn_params(kparam_key, input_shape, num_actions)
    kparams = prepare_kernel_params(params)     # one-time re-layout, off hot path
    x = jax.random.uniform(kx, (batch,) + input_shape, jnp.float32)

    fwd = jax.jit(functools.partial(dqn_forward, num_actions=num_actions))
    out = fwd(kparams, x)
    out = jax.block_until_ready(out)

    ref = dqn_forward_ref(params, x)
    assert out.shape == (batch, num_actions), out.shape
    max_err = float(jnp.max(jnp.abs(out - ref)))
    assert jnp.allclose(out, ref, atol=1e-2, rtol=1e-2), (
        f"mismatch vs reference: max abs err {max_err}"
    )
    print("KERNEL_OK")
</pallas_src>

<mosaic_0001>
module attributes {stable_mosaic.version = 11 : i64} {
  func.func @_mm_bias_act_kernel(%arg0: i32, %arg1: memref<800x64xbf16, #tpu.memory_space<vmem>>, %arg2: memref<64x16xbf16, #tpu.memory_space<vmem>>, %arg3: memref<1x16xf32, #tpu.memory_space<vmem>>, %arg4: memref<800x16xbf16, #tpu.memory_space<vmem>>) attributes {dimension_semantics = [#tpu.dimension_semantics<arbitrary>], iteration_bounds = array<i64: 1>, scalar_prefetch = 0 : i64, scratch_operands = 0 : i64, tpu.core_type = #tpu.core_type<tc>, window_params = [{pipeline_mode = #tpu.pipeline_mode<synchronous>, transform_indices = @transform_0, window_bounds = array<i64: 800, 64>}, {pipeline_mode = #tpu.pipeline_mode<synchronous>, transform_indices = @transform_1, window_bounds = array<i64: 64, 16>}, {pipeline_mode = #tpu.pipeline_mode<synchronous>, transform_indices = @transform_2, window_bounds = array<i64: 1, 16>}, {pipeline_mode = #tpu.pipeline_mode<synchronous>, transform_indices = @transform_3, window_bounds = array<i64: 800, 16>}]} {
    %c0 = arith.constant 0 : index
    %c0_0 = arith.constant 0 : index
    %0 = vector.load %arg1[%c0, %c0_0] : memref<800x64xbf16, #tpu.memory_space<vmem>>, vector<800x64xbf16>
    %c0_1 = arith.constant 0 : index
    %c0_2 = arith.constant 0 : index
    %1 = vector.load %arg2[%c0_1, %c0_2] : memref<64x16xbf16, #tpu.memory_space<vmem>>, vector<64x16xbf16>
    %cst = arith.constant dense<0.000000e+00> : vector<800x16xf32>
    %2 = tpu.matmul %0, %1, %cst {dimension_numbers = #tpu.dot_dimension_numbers<[1], [0], [0], [1], [0, 0, 1, 1], [], []>} : vector<800x64xbf16>, vector<64x16xbf16>, vector<800x16xf32> -> vector<800x16xf32>
    %c0_3 = arith.constant 0 : index
    %c0_4 = arith.constant 0 : index
    %3 = vector.load %arg3[%c0_3, %c0_4] : memref<1x16xf32, #tpu.memory_space<vmem>>, vector<1x16xf32>
    %4 = vector.broadcast %3 : vector<1x16xf32> to vector<800x16xf32>
    %5 = arith.addf %2, %4 : vector<800x16xf32>
    %cst_5 = arith.constant 0.000000e+00 : f32
    %6 = vector.broadcast %cst_5 : f32 to vector<800x16xf32>
    %7 = arith.maximumf %5, %6 : vector<800x16xf32>
    %8 = arith.truncf %7 : vector<800x16xf32> to vector<800x16xbf16>
    %c0_6 = arith.constant 0 : index
    %c0_7 = arith.constant 0 : index
    %9 = vector.load %arg4[%c0_6, %c0_7] : memref<800x16xbf16, #tpu.memory_space<vmem>>, vector<800x16xbf16>
    tpu.vector_store %arg4[%c0_6, %c0_7], %8 {strides = array<i32>} : memref<800x16xbf16, #tpu.memory_space<vmem>>, vector<800x16xbf16>,
    return
  }
  func.func @transform_0(%arg0: i32) -> (i32, i32) {
    %c0_i32 = arith.constant 0 : i32
    %c0_i32_0 = arith.constant 0 : i32
    %c0_i32_1 = arith.constant 0 : i32
    return %c0_i32, %c0_i32_0 : i32, i32
  }
  func.func @transform_1(%arg0: i32) -> (i32, i32) {
    %c0_i32 = arith.constant 0 : i32
    %c0_i32_0 = arith.constant 0 : i32
    %c0_i32_1 = arith.constant 0 : i32
    return %c0_i32, %c0_i32_0 : i32, i32
  }
  func.func @transform_2(%arg0: i32) -> (i32, i32) {
    %c0_i32 = arith.constant 0 : i32
    %c0_i32_0 = arith.constant 0 : i32
    %c0_i32_1 = arith.constant 0 : i32
    return %c0_i32, %c0_i32_0 : i32, i32
  }
  func.func @transform_3(%arg0: i32) -> (i32, i32) {
    %c0_i32 = arith.constant 0 : i32
    %c0_i32_0 = arith.constant 0 : i32
    %c0_i32_1 = arith.constant 0 : i32
    return %c0_i32, %c0_i32_0 : i32, i32
  }
}

module attributes {stable_mosaic.version = 11 : i64} {
  func.func @_mm_bias_act_kernel(%arg0: i32, %arg1: memref<162x256xbf16, #tpu.memory_space<vmem>>, %arg2: memref<256x32xbf16, #tpu.memory_space<vmem>>, %arg3: memref<1x32xf32, #tpu.memory_space<vmem>>, %arg4: memref<162x32xbf16, #tpu.memory_space<vmem>>) attributes {dimension_semantics = [#tpu.dimension_semantics<arbitrary>], iteration_bounds = array<i64: 1>, scalar_prefetch = 0 : i64, scratch_operands = 0 : i64, tpu.core_type = #tpu.core_type<tc>, window_params = [{pipeline_mode = #tpu.pipeline_mode<synchronous>, transform_indices = @transform_0, window_bounds = array<i64: 162, 256>}, {pipeline_mode = #tpu.pipeline_mode<synchronous>, transform_indices = @transform_1, window_bounds = array<i64: 256, 32>}, {pipeline_mode = #tpu.pipeline_mode<synchronous>, transform_indices = @transform_2, window_bounds = array<i64: 1, 32>}, {pipeline_mode = #tpu.pipeline_mode<synchronous>, transform_indices = @transform_3, window_bounds = array<i64: 162, 32>}]} {
    %c0 = arith.constant 0 : index
    %c0_0 = arith.constant 0 : index
    %0 = vector.load %arg1[%c0, %c0_0] : memref<162x256xbf16, #tpu.memory_space<vmem>>, vector<162x256xbf16>
    %c0_1 = arith.constant 0 : index
    %c0_2 = arith.constant 0 : index
    %1 = vector.load %arg2[%c0_1, %c0_2] : memref<256x32xbf16, #tpu.memory_space<vmem>>, vector<256x32xbf16>
    %cst = arith.constant dense<0.000000e+00> : vector<162x32xf32>
    %2 = tpu.matmul %0, %1, %cst {dimension_numbers = #tpu.dot_dimension_numbers<[1], [0], [0], [1], [0, 0, 1, 1], [], []>} : vector<162x256xbf16>, vector<256x32xbf16>, vector<162x32xf32> -> vector<162x32xf32>
    %c0_3 = arith.constant 0 : index
    %c0_4 = arith.constant 0 : index
    %3 = vector.load %arg3[%c0_3, %c0_4] : memref<1x32xf32, #tpu.memory_space<vmem>>, vector<1x32xf32>
    %4 = vector.broadcast %3 : vector<1x32xf32> to vector<162x32xf32>
    %5 = arith.addf %2, %4 : vector<162x32xf32>
    %cst_5 = arith.constant 0.000000e+00 : f32
    %6 = vector.broadcast %cst_5 : f32 to vector<162x32xf32>
    %7 = arith.maximumf %5, %6 : vector<162x32xf32>
    %8 = arith.truncf %7 : vector<162x32xf32> to vector<162x32xbf16>
    %c0_6 = arith.constant 0 : index
    %c0_7 = arith.constant 0 : index
    %9 = vector.load %arg4[%c0_6, %c0_7] : memref<162x32xbf16, #tpu.memory_space<vmem>>, vector<162x32xbf16>
    tpu.vector_store %arg4[%c0_6, %c0_7], %8 {strides = array<i32>} : memref<162x32xbf16, #tpu.memory_space<vmem>>, vector<162x32xbf16>,
    return
  }
  func.func @transform_0(%arg0: i32) -> (i32, i32) {
    %c0_i32 = arith.constant 0 : i32
    %c0_i32_0 = arith.constant 0 : i32
    %c0_i32_1 = arith.constant 0 : i32
    return %c0_i32, %c0_i32_0 : i32, i32
  }
  func.func @transform_1(%arg0: i32) -> (i32, i32) {
    %c0_i32 = arith.constant 0 : i32
    %c0_i32_0 = arith.constant 0 : i32
    %c0_i32_1 = arith.constant 0 : i32
    return %c0_i32, %c0_i32_0 : i32, i32
  }
  func.func @transform_2(%arg0: i32) -> (i32, i32) {
    %c0_i32 = arith.constant 0 : i32
    %c0_i32_0 = arith.constant 0 : i32
    %c0_i32_1 = arith.constant 0 : i32
    return %c0_i32, %c0_i32_0 : i32, i32
  }
  func.func @transform_3(%arg0: i32) -> (i32, i32) {
    %c0_i32 = arith.constant 0 : i32
    %c0_i32_0 = arith.constant 0 : i32
    %c0_i32_1 = arith.constant 0 : i32
    return %c0_i32, %c0_i32_0 : i32, i32
  }
}

module attributes {stable_mosaic.version = 11 : i64} {
  func.func @_mm_bias_act_kernel(%arg0: i32, %arg1: memref<98x288xbf16, #tpu.memory_space<vmem>>, %arg2: memref<288x32xbf16, #tpu.memory_space<vmem>>, %arg3: memref<1x32xf32, #tpu.memory_space<vmem>>, %arg4: memref<98x32xbf16, #tpu.memory_space<vmem>>) attributes {dimension_semantics = [#tpu.dimension_semantics<arbitrary>], iteration_bounds = array<i64: 1>, scalar_prefetch = 0 : i64, scratch_operands = 0 : i64, tpu.core_type = #tpu.core_type<tc>, window_params = [{pipeline_mode = #tpu.pipeline_mode<synchronous>, transform_indices = @transform_0, window_bounds = array<i64: 98, 288>}, {pipeline_mode = #tpu.pipeline_mode<synchronous>, transform_indices = @transform_1, window_bounds = array<i64: 288, 32>}, {pipeline_mode = #tpu.pipeline_mode<synchronous>, transform_indices = @transform_2, window_bounds = array<i64: 1, 32>}, {pipeline_mode = #tpu.pipeline_mode<synchronous>, transform_indices = @transform_3, window_bounds = array<i64: 98, 32>}]} {
    %c0 = arith.constant 0 : index
    %c0_0 = arith.constant 0 : index
    %0 = vector.load %arg1[%c0, %c0_0] : memref<98x288xbf16, #tpu.memory_space<vmem>>, vector<98x288xbf16>
    %c0_1 = arith.constant 0 : index
    %c0_2 = arith.constant 0 : index
    %1 = vector.load %arg2[%c0_1, %c0_2] : memref<288x32xbf16, #tpu.memory_space<vmem>>, vector<288x32xbf16>
    %cst = arith.constant dense<0.000000e+00> : vector<98x32xf32>
    %2 = tpu.matmul %0, %1, %cst {dimension_numbers = #tpu.dot_dimension_numbers<[1], [0], [0], [1], [0, 0, 1, 1], [], []>} : vector<98x288xbf16>, vector<288x32xbf16>, vector<98x32xf32> -> vector<98x32xf32>
    %c0_3 = arith.constant 0 : index
    %c0_4 = arith.constant 0 : index
    %3 = vector.load %arg3[%c0_3, %c0_4] : memref<1x32xf32, #tpu.memory_space<vmem>>, vector<1x32xf32>
    %4 = vector.broadcast %3 : vector<1x32xf32> to vector<98x32xf32>
    %5 = arith.addf %2, %4 : vector<98x32xf32>
    %cst_5 = arith.constant 0.000000e+00 : f32
    %6 = vector.broadcast %cst_5 : f32 to vector<98x32xf32>
    %7 = arith.maximumf %5, %6 : vector<98x32xf32>
    %8 = arith.truncf %7 : vector<98x32xf32> to vector<98x32xbf16>
    %c0_6 = arith.constant 0 : index
    %c0_7 = arith.constant 0 : index
    %9 = vector.load %arg4[%c0_6, %c0_7] : memref<98x32xbf16, #tpu.memory_space<vmem>>, vector<98x32xbf16>
    tpu.vector_store %arg4[%c0_6, %c0_7], %8 {strides = array<i32>} : memref<98x32xbf16, #tpu.memory_space<vmem>>, vector<98x32xbf16>,
    return
  }
  func.func @transform_0(%arg0: i32) -> (i32, i32) {
    %c0_i32 = arith.constant 0 : i32
    %c0_i32_0 = arith.constant 0 : i32
    %c0_i32_1 = arith.constant 0 : i32
    return %c0_i32, %c0_i32_0 : i32, i32
  }
  func.func @transform_1(%arg0: i32) -> (i32, i32) {
    %c0_i32 = arith.constant 0 : i32
    %c0_i32_0 = arith.constant 0 : i32
    %c0_i32_1 = arith.constant 0 : i32
    return %c0_i32, %c0_i32_0 : i32, i32
  }
  func.func @transform_2(%arg0: i32) -> (i32, i32) {
    %c0_i32 = arith.constant 0 : i32
    %c0_i32_0 = arith.constant 0 : i32
    %c0_i32_1 = arith.constant 0 : i32
    return %c0_i32, %c0_i32_0 : i32, i32
  }
  func.func @transform_3(%arg0: i32) -> (i32, i32) {
    %c0_i32 = arith.constant 0 : i32
    %c0_i32_0 = arith.constant 0 : i32
    %c0_i32_1 = arith.constant 0 : i32
    return %c0_i32, %c0_i32_0 : i32, i32
  }
}

module attributes {stable_mosaic.version = 11 : i64} {
  func.func @_fc_fused_kernel(%arg0: i32, %arg1: memref<2x1568xbf16, #tpu.memory_space<vmem>>, %arg2: memref<1568x128xbf16, #tpu.memory_space<vmem>>, %arg3: memref<1x128xf32, #tpu.memory_space<vmem>>, %arg4: memref<128x128xbf16, #tpu.memory_space<vmem>>, %arg5: memref<1x128xf32, #tpu.memory_space<vmem>>, %arg6: memref<2x128xf32, #tpu.memory_space<vmem>>) attributes {dimension_semantics = [#tpu.dimension_semantics<arbitrary>], iteration_bounds = array<i64: 4>, scalar_prefetch = 0 : i64, scratch_operands = 0 : i64, tpu.core_type = #tpu.core_type<tc>, window_params = [{pipeline_mode = #tpu.pipeline_mode<synchronous>, transform_indices = @transform_0, window_bounds = array<i64: 2, 1568>}, {transform_indices = @transform_1, window_bounds = array<i64: 1568, 128>}, {transform_indices = @transform_2, window_bounds = array<i64: 1, 128>}, {transform_indices = @transform_3, window_bounds = array<i64: 128, 128>}, {pipeline_mode = #tpu.pipeline_mode<synchronous>, transform_indices = @transform_4, window_bounds = array<i64: 1, 128>}, {pipeline_mode = #tpu.pipeline_mode<synchronous>, transform_indices = @transform_5, window_bounds = array<i64: 2, 128>}]} {
    %c0_i32 = arith.constant 0 : i32
    %0 = arith.cmpi eq, %arg0, %c0_i32 : i32
    %1 = arith.extui %0 : i1 to i32
    %c0_i32_0 = arith.constant 0 : i32
    %2 = arith.cmpi ne, %1, %c0_i32_0 : i32
    scf.if %2 {
      %c0_14 = arith.constant 0 : index
      %c0_15 = arith.constant 0 : index
      %17 = vector.load %arg5[%c0_14, %c0_15] : memref<1x128xf32, #tpu.memory_space<vmem>>, vector<1x128xf32>
      %18 = vector.shape_cast %17 : vector<1x128xf32> to vector<1x128xf32>
      %19 = vector.broadcast %18 : vector<1x128xf32> to vector<2x128xf32>
      %c0_16 = arith.constant 0 : index
      %c0_17 = arith.constant 0 : index
      %20 = vector.load %arg6[%c0_16, %c0_17] : memref<2x128xf32, #tpu.memory_space<vmem>>, vector<2x128xf32>
      tpu.vector_store %arg6[%c0_16, %c0_17], %19 {strides = array<i32>} : memref<2x128xf32, #tpu.memory_space<vmem>>, vector<2x128xf32>,
    } else {
    }
    %c0 = arith.constant 0 : index
    %c0_1 = arith.constant 0 : index
    %3 = vector.load %arg1[%c0, %c0_1] : memref<2x1568xbf16, #tpu.memory_space<vmem>>, vector<2x1568xbf16>
    %c0_2 = arith.constant 0 : index
    %c0_3 = arith.constant 0 : index
    %4 = vector.load %arg2[%c0_2, %c0_3] : memref<1568x128xbf16, #tpu.memory_space<vmem>>, vector<1568x128xbf16>
    %cst = arith.constant dense<0.000000e+00> : vector<2x128xf32>
    %5 = tpu.matmul %3, %4, %cst {dimension_numbers = #tpu.dot_dimension_numbers<[1], [0], [0], [1], [0, 0, 1, 1], [], []>} : vector<2x1568xbf16>, vector<1568x128xbf16>, vector<2x128xf32> -> vector<2x128xf32>
    %c0_4 = arith.constant 0 : index
    %c0_5 = arith.constant 0 : index
    %6 = vector.load %arg3[%c0_4, %c0_5] : memref<1x128xf32, #tpu.memory_space<vmem>>, vector<1x128xf32>
    %7 = vector.broadcast %6 : vector<1x128xf32> to vector<2x128xf32>
    %8 = arith.addf %5, %7 : vector<2x128xf32>
    %cst_6 = arith.constant 0.000000e+00 : f32
    %9 = vector.broadcast %cst_6 : f32 to vector<2x128xf32>
    %10 = arith.maximumf %8, %9 : vector<2x128xf32>
    %c0_7 = arith.constant 0 : index
    %c0_8 = arith.constant 0 : index
    %11 = vector.load %arg6[%c0_7, %c0_8] : memref<2x128xf32, #tpu.memory_space<vmem>>, vector<2x128xf32>
    %12 = arith.truncf %10 : vector<2x128xf32> to vector<2x128xbf16>
    %c0_9 = arith.constant 0 : index
    %c0_10 = arith.constant 0 : index
    %13 = vector.load %arg4[%c0_9, %c0_10] : memref<128x128xbf16, #tpu.memory_space<vmem>>, vector<128x128xbf16>
    %cst_11 = arith.constant dense<0.000000e+00> : vector<2x128xf32>
    %14 = tpu.matmul %12, %13, %cst_11 {dimension_numbers = #tpu.dot_dimension_numbers<[1], [0], [0], [1], [0, 0, 1, 1], [], []>} : vector<2x128xbf16>, vector<128x128xbf16>, vector<2x128xf32> -> vector<2x128xf32>
    %15 = arith.addf %11, %14 : vector<2x128xf32>
    %c0_12 = arith.constant 0 : index
    %c0_13 = arith.constant 0 : index
    %16 = vector.load %arg6[%c0_12, %c0_13] : memref<2x128xf32, #tpu.memory_space<vmem>>, vector<2x128xf32>
    tpu.vector_store %arg6[%c0_12, %c0_13], %15 {strides = array<i32>} : memref<2x128xf32, #tpu.memory_space<vmem>>, vector<2x128xf32>,
    return
  }
  func.func @transform_0(%arg0: i32) -> (i32, i32) {
    %c0_i32 = arith.constant 0 : i32
    %c0_i32_0 = arith.constant 0 : i32
    %c0_i32_1 = arith.constant 0 : i32
    return %c0_i32, %c0_i32_0 : i32, i32
  }
  func.func @transform_1(%arg0: i32) -> (i32, i32) {
    %c0_i32 = arith.constant 0 : i32
    %c0_i32_0 = arith.constant 0 : i32
    return %c0_i32, %arg0 : i32, i32
  }
  func.func @transform_2(%arg0: i32) -> (i32, i32) {
    %c0_i32 = arith.constant 0 : i32
    %c0_i32_0 = arith.constant 0 : i32
    return %c0_i32, %arg0 : i32, i32
  }
  func.func @transform_3(%arg0: i32) -> (i32, i32) {
    %c0_i32 = arith.constant 0 : i32
    %c0_i32_0 = arith.constant 0 : i32
    return %arg0, %c0_i32 : i32, i32
  }
  func.func @transform_4(%arg0: i32) -> (i32, i32) {
    %c0_i32 = arith.constant 0 : i32
    %c0_i32_0 = arith.constant 0 : i32
    %c0_i32_1 = arith.constant 0 : i32
    return %c0_i32, %c0_i32_0 : i32, i32
  }
  func.func @transform_5(%arg0: i32) -> (i32, i32) {
    %c0_i32 = arith.constant 0 : i32
    %c0_i32_0 = arith.constant 0 : i32
    %c0_i32_1 = arith.constant 0 : i32
    return %c0_i32, %c0_i32_0 : i32, i32
  }
}

</mosaic_0001>

<llo_original>
// kernel: dqn_forward.4
$region0: #{dqn_forward.4}
  #allocation0 [shape = 'u32[]', space=smem, size = 0x4, offset = 0x4, fixed_abs, tag = 'smem constant byte address 0x4 - core index']
  #allocation1 [shape = 'u32[72,128]{1,0:T(1,128)}', space=vmem, size = 0x9000, scoped, tag = 'internal scratch']
  %s0 = inlined_call_operand.vmem [shape: bf16[800,64], index: 0, kind: input, shape index: {}]
  %s1 = inlined_call_operand.vmem [shape: bf16[64,16], index: 1, kind: input, shape index: {}]
  %s2 = inlined_call_operand.vmem [shape: f32[1,16], index: 2, kind: input, shape index: {}]
  %s3 = inlined_call_operand.vmem [shape: bf16[800,16], index: 3, kind: output, shape index: {}]
  %s4 = sld [smem:[#allocation0]]
  $region22: #{dqn_forward.4} parent=0
    _
  %s6 = ssub.s32 1, %s4
  %s7 = scalar_select 0, %s6, %s4
  // Predicated region
  $region2: #{dqn_forward.4} parent=0 // pred_check
    _
  $region3: #{dqn_forward.4} parent=0 // pred_check_branch
    %9 = sbr.rel (0) target = $region5
  $region4: #{dqn_forward.4} parent=0 // pred_region
    _
  $region5: #{dqn_forward.4} parent=0 // pred_fallthru
    _
  // Predicated region
  $region6: #{dqn_forward.4} parent=0 // pred_check
    _
  $region7: #{dqn_forward.4} parent=0 // pred_check_branch
    %11 = sbr.rel (0) target = $region9
  $region8: #{dqn_forward.4} parent=0 // pred_region
    _
  $region9: #{dqn_forward.4} parent=0 // pred_fallthru
    _
  // Predicated region
  $region10: #{dqn_forward.4} parent=0 // pred_check
    _
  $region11: #{dqn_forward.4} parent=0 // pred_check_branch
    %13 = sbr.rel (0) target = $region13
  $region12: #{dqn_forward.4} parent=0 // pred_region
    _
  $region13: #{dqn_forward.4} parent=0 // pred_fallthru
    _
  %v15 = vld [vmem:[%s0] sm:$0xf]
  %v16 = vld [vmem:[%s0 + $0x4] sm:$0xf]
  %v17 = vld [vmem:[%s0 + $0x8] sm:$0xf]
  %v18 = vld [vmem:[%s0 + $0xc] sm:$0xf]
  %v19 = vld [vmem:[%s0 + $0x10] sm:$0xf]
  %v20 = vld [vmem:[%s0 + $0x14] sm:$0xf]
  %v21 = vld [vmem:[%s0 + $0x18] sm:$0xf]
  %v22 = vld [vmem:[%s0 + $0x1c] sm:$0xf]
  %v23 = vld [vmem:[%s0 + $0x20] sm:$0xf]
  %v24 = vld [vmem:[%s0 + $0x24] sm:$0xf]
  %v25 = vld [vmem:[%s0 + $0x28] sm:$0xf]
  %v26 = vld [vmem:[%s0 + $0x2c] sm:$0xf]
  %v27 = vld [vmem:[%s0 + $0x30] sm:$0xf]
  %v28 = vld [vmem:[%s0 + $0x34] sm:$0xf]
  %v29 = vld [vmem:[%s0 + $0x38] sm:$0xf]
  %v30 = vld [vmem:[%s0 + $0x3c] sm:$0xf]
  %v31 = vld [vmem:[%s0 + $0x40] sm:$0xf]
  %v32 = vld [vmem:[%s0 + $0x44] sm:$0xf]
  %v33 = vld [vmem:[%s0 + $0x48] sm:$0xf]
  %v34 = vld [vmem:[%s0 + $0x4c] sm:$0xf]
  %v35 = vld [vmem:[%s0 + $0x50] sm:$0xf]
  %v36 = vld [vmem:[%s0 + $0x54] sm:$0xf]
  %v37 = vld [vmem:[%s0 + $0x58] sm:$0xf]
  %v38 = vld [vmem:[%s0 + $0x5c] sm:$0xf]
  %v39 = vld [vmem:[%s0 + $0x60] sm:$0xf]
  %v40 = vld [vmem:[%s0 + $0x64] sm:$0xf]
  %v41 = vld [vmem:[%s0 + $0x68] sm:$0xf]
  %v42 = vld [vmem:[%s0 + $0x6c] sm:$0xf]
  %v43 = vld [vmem:[%s0 + $0x70] sm:$0xf]
  %v44 = vld [vmem:[%s0 + $0x74] sm:$0xf]
  %v45 = vld [vmem:[%s0 + $0x78] sm:$0xf]
  %v46 = vld [vmem:[%s0 + $0x7c] sm:$0xf]
  %v47 = vld [vmem:[%s0 + $0x80] sm:$0xf]
  %v48 = vld [vmem:[%s0 + $0x84] sm:$0xf]
  %v49 = vld [vmem:[%s0 + $0x88] sm:$0xf]
  %v50 = vld [vmem:[%s0 + $0x8c] sm:$0xf]
  %v51 = vld [vmem:[%s0 + $0x90] sm:$0xf]
  %v52 = vld [vmem:[%s0 + $0x94] sm:$0xf]
  %v53 = vld [vmem:[%s0 + $0x98] sm:$0xf]
  %v54 = vld [vmem:[%s0 + $0x9c] sm:$0xf]
  %v55 = vld [vmem:[%s0 + $0xa0] sm:$0xf]
  %v56 = vld [vmem:[%s0 + $0xa4] sm:$0xf]
  %v57 = vld [vmem:[%s0 + $0xa8] sm:$0xf]
  %v58 = vld [vmem:[%s0 + $0xac] sm:$0xf]
  %v59 = vld [vmem:[%s0 + $0xb0] sm:$0xf]
  %v60 = vld [vmem:[%s0 + $0xb4] sm:$0xf]
  %v61 = vld [vmem:[%s0 + $0xb8] sm:$0xf]
  %v62 = vld [vmem:[%s0 + $0xbc] sm:$0xf]
  %v63 = vld [vmem:[%s0 + $0xc0] sm:$0xf]
  %v64 = vld [vmem:[%s0 + $0xc4] sm:$0xf]
  %v65 = vld [vmem:[%s0 + $0xc8] sm:$0xf]
  %v66 = vld [vmem:[%s0 + $0xcc] sm:$0xf]
  %v67 = vld [vmem:[%s0 + $0xd0] sm:$0xf]
  %v68 = vld [vmem:[%s0 + $0xd4] sm:$0xf]
  %v69 = vld [vmem:[%s0 + $0xd8] sm:$0xf]
  %v70 = vld [vmem:[%s0 + $0xdc] sm:$0xf]
  %v71 = vld [vmem:[%s0 + $0xe0] sm:$0xf]
  %v72 = vld [vmem:[%s0 + $0xe4] sm:$0xf]
  %v73 = vld [vmem:[%s0 + $0xe8] sm:$0xf]
  %v74 = vld [vmem:[%s0 + $0xec] sm:$0xf]
  %v75 = vld [vmem:[%s0 + $0xf0] sm:$0xf]
  %v76 = vld [vmem:[%s0 + $0xf4] sm:$0xf]
  %v77 = vld [vmem:[%s0 + $0xf8] sm:$0xf]
  %v78 = vld [vmem:[%s0 + $0xfc] sm:$0xf]
  %v79 = vld [vmem:[%s0 + $0x100] sm:$0xf]
  %v80 = vld [vmem:[%s0 + $0x104] sm:$0xf]
  %v81 = vld [vmem:[%s0 + $0x108] sm:$0xf]
  %v82 = vld [vmem:[%s0 + $0x10c] sm:$0xf]
  %v83 = vld [vmem:[%s0 + $0x110] sm:$0xf]
  %v84 = vld [vmem:[%s0 + $0x114] sm:$0xf]
  %v85 = vld [vmem:[%s0 + $0x118] sm:$0xf]
  %v86 = vld [vmem:[%s0 + $0x11c] sm:$0xf]
  %v87 = vld [vmem:[%s0 + $0x120] sm:$0xf]
  %v88 = vld [vmem:[%s0 + $0x124] sm:$0xf]
  %v89 = vld [vmem:[%s0 + $0x128] sm:$0xf]
  %v90 = vld [vmem:[%s0 + $0x12c] sm:$0xf]
  %v91 = vld [vmem:[%s0 + $0x130] sm:$0xf]
  %v92 = vld [vmem:[%s0 + $0x134] sm:$0xf]
  %v93 = vld [vmem:[%s0 + $0x138] sm:$0xf]
  %v94 = vld [vmem:[%s0 + $0x13c] sm:$0xf]
  %v95 = vld [vmem:[%s0 + $0x140] sm:$0xf]
  %v96 = vld [vmem:[%s0 + $0x144] sm:$0xf]
  %v97 = vld [vmem:[%s0 + $0x148] sm:$0xf]
  %v98 = vld [vmem:[%s0 + $0x14c] sm:$0xf]
  %v99 = vld [vmem:[%s0 + $0x150] sm:$0xf]
  %v100 = vld [vmem:[%s0 + $0x154] sm:$0xf]
  %v101 = vld [vmem:[%s0 + $0x158] sm:$0xf]
  %v102 = vld [vmem:[%s0 + $0x15c] sm:$0xf]
  %v103 = vld [vmem:[%s0 + $0x160] sm:$0xf]
  %v104 = vld [vmem:[%s0 + $0x164] sm:$0xf]
  %v105 = vld [vmem:[%s0 + $0x168] sm:$0xf]
  %v106 = vld [vmem:[%s0 + $0x16c] sm:$0xf]
  %v107 = vld [vmem:[%s0 + $0x170] sm:$0xf]
  %v108 = vld [vmem:[%s0 + $0x174] sm:$0xf]
  %v109 = vld [vmem:[%s0 + $0x178] sm:$0xf]
  %v110 = vld [vmem:[%s0 + $0x17c] sm:$0xf]
  %v111 = vld [vmem:[%s0 + $0x180] sm:$0xf]
  %v112 = vld [vmem:[%s0 + $0x184] sm:$0xf]
  %v113 = vld [vmem:[%s0 + $0x188] sm:$0xf]
  %v114 = vld [vmem:[%s0 + $0x18c] sm:$0xf]
  %v115 = vld [vmem:[%s1] sm:$0xf]
  %v116 = vld [vmem:[%s1 + $0x4] sm:$0xf]
  %v117 = vld [vmem:[%s1 + $0x8] sm:$0xf]
  %v118 = vld [vmem:[%s1 + $0xc] sm:$0xf]
  %v119 = vld [vmem:[%s1 + $0x10] sm:$0xf]
  %v120 = vld [vmem:[%s1 + $0x14] sm:$0xf]
  %v121 = vld [vmem:[%s1 + $0x18] sm:$0xf]
  %v122 = vld [vmem:[%s1 + $0x1c] sm:$0xf]
  %v123 = vld [vmem:[%s2] sm:$0x1]
  %v125 = vperm.slane %v123, 0
  %v227 = vunpack.c.l.b16 %v15
  %v228 = vunpack.c.l.b16 %v16
  %v229 = vunpack.c.l.b16 %v17
  %v230 = vunpack.c.l.b16 %v18
  %v231 = vunpack.c.l.b16 %v19
  %v232 = vunpack.c.l.b16 %v20
  %v233 = vunpack.c.l.b16 %v21
  %v234 = vunpack.c.l.b16 %v22
  %v235 = vunpack.c.l.b16 %v23
  %v236 = vunpack.c.l.b16 %v24
  %v237 = vunpack.c.l.b16 %v25
  %v238 = vunpack.c.l.b16 %v26
  %v239 = vunpack.c.l.b16 %v27
  %v240 = vunpack.c.l.b16 %v28
  %v241 = vunpack.c.l.b16 %v29
  %v242 = vunpack.c.l.b16 %v30
  %v243 = vunpack.c.l.b16 %v31
  %v244 = vunpack.c.l.b16 %v32
  %v245 = vunpack.c.l.b16 %v33
  %v246 = vunpack.c.l.b16 %v34
  %v247 = vunpack.c.l.b16 %v35
  %v248 = vunpack.c.l.b16 %v36
  %v249 = vunpack.c.l.b16 %v37
  %v250 = vunpack.c.l.b16 %v38
  %v251 = vunpack.c.l.b16 %v39
  %v252 = vunpack.c.l.b16 %v40
  %v253 = vunpack.c.l.b16 %v41
  %v254 = vunpack.c.l.b16 %v42
  %v255 = vunpack.c.l.b16 %v43
  %v256 = vunpack.c.l.b16 %v44
  %v257 = vunpack.c.l.b16 %v45
  %v258 = vunpack.c.l.b16 %v46
  %v259 = vunpack.c.l.b16 %v47
  %v260 = vunpack.c.l.b16 %v48
  %v261 = vunpack.c.l.b16 %v49
  %v262 = vunpack.c.l.b16 %v50
  %v263 = vunpack.c.l.b16 %v51
  %v264 = vunpack.c.l.b16 %v52
  %v265 = vunpack.c.l.b16 %v53
  %v266 = vunpack.c.l.b16 %v54
  %v267 = vunpack.c.l.b16 %v55
  %v268 = vunpack.c.l.b16 %v56
  %v269 = vunpack.c.l.b16 %v57
  %v270 = vunpack.c.l.b16 %v58
  %v271 = vunpack.c.l.b16 %v59
  %v272 = vunpack.c.l.b16 %v60
  %v273 = vunpack.c.l.b16 %v61
  %v274 = vunpack.c.l.b16 %v62
  %v275 = vunpack.c.l.b16 %v63
  %v276 = vunpack.c.l.b16 %v64
  %v277 = vunpack.c.l.b16 %v65
  %v278 = vunpack.c.l.b16 %v66
  %v279 = vunpack.c.l.b16 %v67
  %v280 = vunpack.c.l.b16 %v68
  %v281 = vunpack.c.l.b16 %v69
  %v282 = vunpack.c.l.b16 %v70
  %v283 = vunpack.c.l.b16 %v71
  %v284 = vunpack.c.l.b16 %v72
  %v285 = vunpack.c.l.b16 %v73
  %v286 = vunpack.c.l.b16 %v74
  %v287 = vunpack.c.l.b16 %v75
  %v288 = vunpack.c.l.b16 %v76
  %v289 = vunpack.c.l.b16 %v77
  %v290 = vunpack.c.l.b16 %v78
  %v291 = vunpack.c.l.b16 %v79
  %v292 = vunpack.c.l.b16 %v80
  %v293 = vunpack.c.l.b16 %v81
  %v294 = vunpack.c.l.b16 %v82
  %v295 = vunpack.c.l.b16 %v83
  %v296 = vunpack.c.l.b16 %v84
  %v297 = vunpack.c.l.b16 %v85
  %v298 = vunpack.c.l.b16 %v86
  %v299 = vunpack.c.l.b16 %v87
  %v300 = vunpack.c.l.b16 %v88
  %v301 = vunpack.c.l.b16 %v89
  %v302 = vunpack.c.l.b16 %v90
  %v303 = vunpack.c.l.b16 %v91
  %v304 = vunpack.c.l.b16 %v92
  %v305 = vunpack.c.l.b16 %v93
  %v306 = vunpack.c.l.b16 %v94
  %v307 = vunpack.c.l.b16 %v95
  %v308 = vunpack.c.l.b16 %v96
  %v309 = vunpack.c.l.b16 %v97
  %v310 = vunpack.c.l.b16 %v98
  %v311 = vunpack.c.l.b16 %v99
  %v312 = vunpack.c.l.b16 %v100
  %v313 = vunpack.c.l.b16 %v101
  %v314 = vunpack.c.l.b16 %v102
  %v315 = vunpack.c.l.b16 %v103
  %v316 = vunpack.c.l.b16 %v104
  %v317 = vunpack.c.l.b16 %v105
  %v318 = vunpack.c.l.b16 %v106
  %v319 = vunpack.c.l.b16 %v107
  %v320 = vunpack.c.l.b16 %v108
  %v321 = vunpack.c.l.b16 %v109
  %v322 = vunpack.c.l.b16 %v110
  %v323 = vunpack.c.l.b16 %v111
  %v324 = vunpack.c.l.b16 %v112
  %v325 = vunpack.c.l.b16 %v113
  %v326 = vunpack.c.l.b16 %v114
  %v327 = vpack.c.b16 %v228, %v227
  %v328 = vpack.c.b16 %v230, %v229
  %v329 = vpack.c.b16 %v232, %v231
  %v330 = vpack.c.b16 %v234, %v233
  %v331 = vpack.c.b16 %v236, %v235
  %v332 = vpack.c.b16 %v238, %v237
  %v333 = vpack.c.b16 %v240, %v239
  %v334 = vpack.c.b16 %v242, %v241
  %v335 = vpack.c.b16 %v244, %v243
  %v336 = vpack.c.b16 %v246, %v245
  %v337 = vpack.c.b16 %v248, %v247
  %v338 = vpack.c.b16 %v250, %v249
  %v339 = vpack.c.b16 %v252, %v251
  %v340 = vpack.c.b16 %v254, %v253
  %v341 = vpack.c.b16 %v256, %v255
  %v342 = vpack.c.b16 %v258, %v257
  %v343 = vpack.c.b16 %v260, %v259
  %v344 = vpack.c.b16 %v262, %v261
  %v345 = vpack.c.b16 %v264, %v263
  %v346 = vpack.c.b16 %v266, %v265
  %v347 = vpack.c.b16 %v268, %v267
  %v348 = vpack.c.b16 %v270, %v269
  %v349 = vpack.c.b16 %v272, %v271
  %v350 = vpack.c.b16 %v274, %v273
  %v351 = vpack.c.b16 %v276, %v275
  %v352 = vpack.c.b16 %v278, %v277
  %v353 = vpack.c.b16 %v280, %v279
  %v354 = vpack.c.b16 %v282, %v281
  %v355 = vpack.c.b16 %v284, %v283
  %v356 = vpack.c.b16 %v286, %v285
  %v357 = vpack.c.b16 %v288, %v287
  %v358 = vpack.c.b16 %v290, %v289
  %v359 = vpack.c.b16 %v292, %v291
  %v360 = vpack.c.b16 %v294, %v293
  %v361 = vpack.c.b16 %v296, %v295
  %v362 = vpack.c.b16 %v298, %v297
  %v363 = vpack.c.b16 %v300, %v299
  %v364 = vpack.c.b16 %v302, %v301
  %v365 = vpack.c.b16 %v304, %v303
  %v366 = vpack.c.b16 %v306, %v305
  %v367 = vpack.c.b16 %v308, %v307
  %v368 = vpack.c.b16 %v310, %v309
  %v369 = vpack.c.b16 %v312, %v311
  %v370 = vpack.c.b16 %v314, %v313
  %v371 = vpack.c.b16 %v316, %v315
  %v372 = vpack.c.b16 %v318, %v317
  %v373 = vpack.c.b16 %v320, %v319
  %v374 = vpack.c.b16 %v322, %v321
  %v375 = vpack.c.b16 %v324, %v323
  %v376 = vpack.c.b16 %v326, %v325
  %v385 = vunpack.c.l.b16 %v115
  %v386 = vunpack.c.l.b16 %v116
  %v387 = vunpack.c.l.b16 %v117
  %v388 = vunpack.c.l.b16 %v118
  %v389 = vunpack.c.l.b16 %v119
  %v390 = vunpack.c.l.b16 %v120
  %v391 = vunpack.c.l.b16 %v121
  %v392 = vunpack.c.l.b16 %v122
  %v393 = vpack.c.b16 %v386, %v385
  %v394 = vpack.c.b16 %v388, %v387
  %v395 = vpack.c.b16 %v390, %v389
  %v396 = vpack.c.b16 %v392, %v391
  %vm401 = vcmask 523264
  %v403 = vsel %vm401, %v327, 0
  %v406 = vsel %vm401, %v328, 0
  %v409 = vsel %vm401, %v329, 0
  %v412 = vsel %vm401, %v330, 0
  %v415 = vsel %vm401, %v331, 0
  %v418 = vsel %vm401, %v332, 0
  %v421 = vsel %vm401, %v333, 0
  %v424 = vsel %vm401, %v334, 0
  %v427 = vsel %vm401, %v335, 0
  %v430 = vsel %vm401, %v336, 0
  %v433 = vsel %vm401, %v337, 0
  %v436 = vsel %vm401, %v338, 0
  %v439 = vsel %vm401, %v339, 0
  %v442 = vsel %vm401, %v340, 0
  %v445 = vsel %vm401, %v341, 0
  %v448 = vsel %vm401, %v342, 0
  %v451 = vsel %vm401, %v343, 0
  %v454 = vsel %vm401, %v344, 0
  %v457 = vsel %vm401, %v345, 0
  %v460 = vsel %vm401, %v346, 0
  %v463 = vsel %vm401, %v347, 0
  %v466 = vsel %vm401, %v348, 0
  %v469 = vsel %vm401, %v349, 0
  %v472 = vsel %vm401, %v350, 0
  %v475 = vsel %vm401, %v351, 0
  %v478 = vsel %vm401, %v352, 0
  %v481 = vsel %vm401, %v353, 0
  %v484 = vsel %vm401, %v354, 0
  %v487 = vsel %vm401, %v355, 0
  %v490 = vsel %vm401, %v356, 0
  %v493 = vsel %vm401, %v357, 0
  %v496 = vsel %vm401, %v358, 0
  %v499 = vsel %vm401, %v359, 0
  %v502 = vsel %vm401, %v360, 0
  %v505 = vsel %vm401, %v361, 0
  %v508 = vsel %vm401, %v362, 0
  %v511 = vsel %vm401, %v363, 0
  %v514 = vsel %vm401, %v364, 0
  %v517 = vsel %vm401, %v365, 0
  %v520 = vsel %vm401, %v366, 0
  %v523 = vsel %vm401, %v367, 0
  %v526 = vsel %vm401, %v368, 0
  %v529 = vsel %vm401, %v369, 0
  %v532 = vsel %vm401, %v370, 0
  %v535 = vsel %vm401, %v371, 0
  %v538 = vsel %vm401, %v372, 0
  %v541 = vsel %vm401, %v373, 0
  %v544 = vsel %vm401, %v374, 0
  %v547 = vsel %vm401, %v375, 0
  %v550 = vsel %vm401, %v376, 0
  %552 = vmatpush.bf16.msra.mxu0 0
  %553 = vmatpush.bf16.msra.mxu0 0
  %554 = vmatpush.bf16.msra.mxu0 0
  %555 = vmatpush.bf16.msra.mxu0 0
  %556 = vmatpush.bf16.msra.mxu0 %v396
  %557 = vmatpush.bf16.msra.mxu0 %v395
  %558 = vmatpush.bf16.msra.mxu0 %v394
  %559 = vmatpush.bf16.msra.mxu0 %v393
  %560 = vmatmul.bf16.gmra.mxu0 %v403
  %v561 = vpop.f32.mrf.mxu0
  %v562 = vadd.f32 %v125, %v561
  %v563 = vpop.f32.mrf.mxu0
  %v564 = vadd.f32 %v125, %v563
  %565 = vmatmul.bf16.gmra.mxu0 %v406
  %v566 = vpop.f32.mrf.mxu0
  %v567 = vadd.f32 %v125, %v566
  %v568 = vpop.f32.mrf.mxu0
  %v569 = vadd.f32 %v125, %v568
  %570 = vmatmul.bf16.gmra.mxu0 %v409
  %v571 = vpop.f32.mrf.mxu0
  %v572 = vadd.f32 %v125, %v571
  %v573 = vpop.f32.mrf.mxu0
  %v574 = vadd.f32 %v125, %v573
  %575 = vmatmul.bf16.gmra.mxu0 %v412
  %v576 = vpop.f32.mrf.mxu0
  %v577 = vadd.f32 %v125, %v576
  %v578 = vpop.f32.mrf.mxu0
  %v579 = vadd.f32 %v125, %v578
  %580 = vmatmul.bf16.gmra.mxu0 %v415
  %v581 = vpop.f32.mrf.mxu0
  %v582 = vadd.f32 %v125, %v581
  %v583 = vpop.f32.mrf.mxu0
  %v584 = vadd.f32 %v125, %v583
  %585 = vmatmul.bf16.gmra.mxu0 %v418
  %v586 = vpop.f32.mrf.mxu0
  %v587 = vadd.f32 %v125, %v586
  %v588 = vpop.f32.mrf.mxu0
  %v589 = vadd.f32 %v125, %v588
  %590 = vmatmul.bf16.gmra.mxu0 %v421
  %v591 = vpop.f32.mrf.mxu0
  %v592 = vadd.f32 %v125, %v591
  %v593 = vpop.f32.mrf.mxu0
  %v594 = vadd.f32 %v125, %v593
  %595 = vmatmul.bf16.gmra.mxu0 %v424
  %v596 = vpop.f32.mrf.mxu0
  %v597 = vadd.f32 %v125, %v596
  %v598 = vpop.f32.mrf.mxu0
  %v599 = vadd.f32 %v125, %v598
  %600 = vmatmul.bf16.gmra.mxu0 %v427
  %v601 = vpop.f32.mrf.mxu0
  %v602 = vadd.f32 %v125, %v601
  %v603 = vpop.f32.mrf.mxu0
  %v604 = vadd.f32 %v125, %v603
  %605 = vmatmul.bf16.gmra.mxu0 %v430
  %v606 = vpop.f32.mrf.mxu0
  %v607 = vadd.f32 %v125, %v606
  %v608 = vpop.f32.mrf.mxu0
  %v609 = vadd.f32 %v125, %v608
  %610 = vmatmul.bf16.gmra.mxu0 %v433
  %v611 = vpop.f32.mrf.mxu0
  %v612 = vadd.f32 %v125, %v611
  %v613 = vpop.f32.mrf.mxu0
  %v614 = vadd.f32 %v125, %v613
  %615 = vmatmul.bf16.gmra.mxu0 %v436
  %v616 = vpop.f32.mrf.mxu0
  %v617 = vadd.f32 %v125, %v616
  %v618 = vpop.f32.mrf.mxu0
  %v619 = vadd.f32 %v125, %v618
  %620 = vmatmul.bf16.gmra.mxu0 %v439
  %v621 = vpop.f32.mrf.mxu0
  %v622 = vadd.f32 %v125, %v621
  %v623 = vpop.f32.mrf.mxu0
  %v624 = vadd.f32 %v125, %v623
  %625 = vmatmul.bf16.gmra.mxu0 %v442
  %v626 = vpop.f32.mrf.mxu0
  %v627 = vadd.f32 %v125, %v626
  %v628 = vpop.f32.mrf.mxu0
  %v629 = vadd.f32 %v125, %v628
  %630 = vmatmul.bf16.gmra.mxu0 %v445
  %v631 = vpop.f32.mrf.mxu0
  %v632 = vadd.f32 %v125, %v631
  %v633 = vpop.f32.mrf.mxu0
  %v634 = vadd.f32 %v125, %v633
  %635 = vmatmul.bf16.gmra.mxu0 %v448
  %v636 = vpop.f32.mrf.mxu0
  %v637 = vadd.f32 %v125, %v636
  %v638 = vpop.f32.mrf.mxu0
  %v639 = vadd.f32 %v125, %v638
  %640 = vmatmul.bf16.gmra.mxu0 %v451
  %v641 = vpop.f32.mrf.mxu0
  %v642 = vadd.f32 %v125, %v641
  %v643 = vpop.f32.mrf.mxu0
  %v644 = vadd.f32 %v125, %v643
  %645 = vmatmul.bf16.gmra.mxu0 %v454
  %v646 = vpop.f32.mrf.mxu0
  %v647 = vadd.f32 %v125, %v646
  %v648 = vpop.f32.mrf.mxu0
  %v649 = vadd.f32 %v125, %v648
  %650 = vmatmul.bf16.gmra.mxu0 %v457
  %v651 = vpop.f32.mrf.mxu0
  %v652 = vadd.f32 %v125, %v651
  %v653 = vpop.f32.mrf.mxu0
  %v654 = vadd.f32 %v125, %v653
  %655 = vmatmul.bf16.gmra.mxu0 %v460
  %v656 = vpop.f32.mrf.mxu0
  %v657 = vadd.f32 %v125, %v656
  %v658 = vpop.f32.mrf.mxu0
  %v659 = vadd.f32 %v125, %v658
  %660 = vmatmul.bf16.gmra.mxu0 %v463
  %v661 = vpop.f32.mrf.mxu0
  %v662 = vadd.f32 %v125, %v661
  %v663 = vpop.f32.mrf.mxu0
  %v664 = vadd.f32 %v125, %v663
  %665 = vmatmul.bf16.gmra.mxu0 %v466
  %v666 = vpop.f32.mrf.mxu0
  %v667 = vadd.f32 %v125, %v666
  %v668 = vpop.f32.mrf.mxu0
  %v669 = vadd.f32 %v125, %v668
  %670 = vmatmul.bf16.gmra.mxu0 %v469
  %v671 = vpop.f32.mrf.mxu0
  %v672 = vadd.f32 %v125, %v671
  %v673 = vpop.f32.mrf.mxu0
  %v674 = vadd.f32 %v125, %v673
  %675 = vmatmul.bf16.gmra.mxu0 %v472
  %v676 = vpop.f32.mrf.mxu0
  %v677 = vadd.f32 %v125, %v676
  %v678 = vpop.f32.mrf.mxu0
  %v679 = vadd.f32 %v125, %v678
  %680 = vmatmul.bf16.gmra.mxu0 %v475
  %v681 = vpop.f32.mrf.mxu0
  %v682 = vadd.f32 %v125, %v681
  %v683 = vpop.f32.mrf.mxu0
  %v684 = vadd.f32 %v125, %v683
  %685 = vmatmul.bf16.gmra.mxu0 %v478
  %v686 = vpop.f32.mrf.mxu0
  %v687 = vadd.f32 %v125, %v686
  %v688 = vpop.f32.mrf.mxu0
  %v689 = vadd.f32 %v125, %v688
  %690 = vmatmul.bf16.gmra.mxu0 %v481
  %v691 = vpop.f32.mrf.mxu0
  %v692 = vadd.f32 %v125, %v691
  %v693 = vpop.f32.mrf.mxu0
  %v694 = vadd.f32 %v125, %v693
  %695 = vmatmul.bf16.gmra.mxu0 %v484
  %v696 = vpop.f32.mrf.mxu0
  %v697 = vadd.f32 %v125, %v696
  %v698 = vpop.f32.mrf.mxu0
  %v699 = vadd.f32 %v125, %v698
  %700 = vmatmul.bf16.gmra.mxu0 %v487
  %v701 = vpop.f32.mrf.mxu0
  %v702 = vadd.f32 %v125, %v701
  %v703 = vpop.f32.mrf.mxu0
  %v704 = vadd.f32 %v125, %v703
  %705 = vmatmul.bf16.gmra.mxu0 %v490
  %v706 = vpop.f32.mrf.mxu0
  %v707 = vadd.f32 %v125, %v706
  %v708 = vpop.f32.mrf.mxu0
  %v709 = vadd.f32 %v125, %v708
  %710 = vmatmul.bf16.gmra.mxu0 %v493
  %v711 = vpop.f32.mrf.mxu0
  %v712 = vadd.f32 %v125, %v711
  %v713 = vpop.f32.mrf.mxu0
  %v714 = vadd.f32 %v125, %v713
  %715 = vmatmul.bf16.gmra.mxu0 %v496
  %v716 = vpop.f32.mrf.mxu0
  %v717 = vadd.f32 %v125, %v716
  %v718 = vpop.f32.mrf.mxu0
  %v719 = vadd.f32 %v125, %v718
  %720 = vmatmul.bf16.gmra.mxu0 %v499
  %v721 = vpop.f32.mrf.mxu0
  %v722 = vadd.f32 %v125, %v721
  %v723 = vpop.f32.mrf.mxu0
  %v724 = vadd.f32 %v125, %v723
  %725 = vmatmul.bf16.gmra.mxu0 %v502
  %v726 = vpop.f32.mrf.mxu0
  %v727 = vadd.f32 %v125, %v726
  %v728 = vpop.f32.mrf.mxu0
  %v729 = vadd.f32 %v125, %v728
  %730 = vmatmul.bf16.gmra.mxu0 %v505
  %v731 = vpop.f32.mrf.mxu0
  %v732 = vadd.f32 %v125, %v731
  %v733 = vpop.f32.mrf.mxu0
  %v734 = vadd.f32 %v125, %v733
  %735 = vmatmul.bf16.gmra.mxu0 %v508
  %v736 = vpop.f32.mrf.mxu0
  %v737 = vadd.f32 %v125, %v736
  %v738 = vpop.f32.mrf.mxu0
  %v739 = vadd.f32 %v125, %v738
  %740 = vmatmul.bf16.gmra.mxu0 %v511
  %v741 = vpop.f32.mrf.mxu0
  %v742 = vadd.f32 %v125, %v741
  %v743 = vpop.f32.mrf.mxu0
  %v744 = vadd.f32 %v125, %v743
  %745 = vmatmul.bf16.gmra.mxu0 %v514
  %v746 = vpop.f32.mrf.mxu0
  %v747 = vadd.f32 %v125, %v746
  %v748 = vpop.f32.mrf.mxu0
  %v749 = vadd.f32 %v125, %v748
  %750 = vmatmul.bf16.gmra.mxu0 %v517
  %v751 = vpop.f32.mrf.mxu0
  %v752 = vadd.f32 %v125, %v751
  %v753 = vpop.f32.mrf.mxu0
  %v754 = vadd.f32 %v125, %v753
  %755 = vmatmul.bf16.gmra.mxu0 %v520
  %v756 = vpop.f32.mrf.mxu0
  %v757 = vadd.f32 %v125, %v756
  %v758 = vpop.f32.mrf.mxu0
  %v759 = vadd.f32 %v125, %v758
  %760 = vmatmul.bf16.gmra.mxu0 %v523
  %v761 = vpop.f32.mrf.mxu0
  %v762 = vadd.f32 %v125, %v761
  %v763 = vpop.f32.mrf.mxu0
  %v764 = vadd.f32 %v125, %v763
  %765 = vmatmul.bf16.gmra.mxu0 %v526
  %v766 = vpop.f32.mrf.mxu0
  %v767 = vadd.f32 %v125, %v766
  %v768 = vpop.f32.mrf.mxu0
  %v769 = vadd.f32 %v125, %v768
  %770 = vmatmul.bf16.gmra.mxu0 %v529
  %v771 = vpop.f32.mrf.mxu0
  %v772 = vadd.f32 %v125, %v771
  %v773 = vpop.f32.mrf.mxu0
  %v774 = vadd.f32 %v125, %v773
  %775 = vmatmul.bf16.gmra.mxu0 %v532
  %v776 = vpop.f32.mrf.mxu0
  %v777 = vadd.f32 %v125, %v776
  %v778 = vpop.f32.mrf.mxu0
  %v779 = vadd.f32 %v125, %v778
  %780 = vmatmul.bf16.gmra.mxu0 %v535
  %v781 = vpop.f32.mrf.mxu0
  %v782 = vadd.f32 %v125, %v781
  %v783 = vpop.f32.mrf.mxu0
  %v784 = vadd.f32 %v125, %v783
  %785 = vmatmul.bf16.gmra.mxu0 %v538
  %v786 = vpop.f32.mrf.mxu0
  %v787 = vadd.f32 %v125, %v786
  %v788 = vpop.f32.mrf.mxu0
  %v789 = vadd.f32 %v125, %v788
  %790 = vmatmul.bf16.gmra.mxu0 %v541
  %v791 = vpop.f32.mrf.mxu0
  %v792 = vadd.f32 %v125, %v791
  %v793 = vpop.f32.mrf.mxu0
  %v794 = vadd.f32 %v125, %v793
  %795 = vmatmul.bf16.gmra.mxu0 %v544
  %v796 = vpop.f32.mrf.mxu0
  %v797 = vadd.f32 %v125, %v796
  %v798 = vpop.f32.mrf.mxu0
  %v799 = vadd.f32 %v125, %v798
  %800 = vmatmul.bf16.gmra.mxu0 %v547
  %v801 = vpop.f32.mrf.mxu0
  %v802 = vadd.f32 %v125, %v801
  %v803 = vpop.f32.mrf.mxu0
  %v804 = vadd.f32 %v125, %v803
  %805 = vmatmul.bf16.gmra.mxu0 %v550
  %v806 = vpop.f32.mrf.mxu0
  %v807 = vadd.f32 %v125, %v806
  %v808 = vpop.f32.mrf.mxu0
  %v809 = vadd.f32 %v125, %v808
  %810 = vdwg.mxu0
  %v811 = vmax.f32 %v562, 0.0
  %v812 = vmax.f32 %v564, 0.0
  %v813 = vmax.f32 %v567, 0.0
  %v814 = vmax.f32 %v569, 0.0
  %v815 = vmax.f32 %v572, 0.0
  %v816 = vmax.f32 %v574, 0.0
  %v817 = vmax.f32 %v577, 0.0
  %v818 = vmax.f32 %v579, 0.0
  %v819 = vmax.f32 %v582, 0.0
  %v820 = vmax.f32 %v584, 0.0
  %v821 = vmax.f32 %v587, 0.0
  %v822 = vmax.f32 %v589, 0.0
  %v823 = vmax.f32 %v592, 0.0
  %v824 = vmax.f32 %v594, 0.0
  %v825 = vmax.f32 %v597, 0.0
  %v826 = vmax.f32 %v599, 0.0
  %v827 = vmax.f32 %v602, 0.0
  %v828 = vmax.f32 %v604, 0.0
  %v829 = vmax.f32 %v607, 0.0
  %v830 = vmax.f32 %v609, 0.0
  %v831 = vmax.f32 %v612, 0.0
  %v832 = vmax.f32 %v614, 0.0
  %v833 = vmax.f32 %v617, 0.0
  %v834 = vmax.f32 %v619, 0.0
  %v835 = vmax.f32 %v622, 0.0
  %v836 = vmax.f32 %v624, 0.0
  %v837 = vmax.f32 %v627, 0.0
  %v838 = vmax.f32 %v629, 0.0
  %v839 = vmax.f32 %v632, 0.0
  %v840 = vmax.f32 %v634, 0.0
  %v841 = vmax.f32 %v637, 0.0
  %v842 = vmax.f32 %v639, 0.0
  %v843 = vmax.f32 %v642, 0.0
  %v844 = vmax.f32 %v644, 0.0
  %v845 = vmax.f32 %v647, 0.0
  %v846 = vmax.f32 %v649, 0.0
  %v847 = vmax.f32 %v652, 0.0
  %v848 = vmax.f32 %v654, 0.0
  %v849 = vmax.f32 %v657, 0.0
  %v850 = vmax.f32 %v659, 0.0
  %v851 = vmax.f32 %v662, 0.0
  %v852 = vmax.f32 %v664, 0.0
  %v853 = vmax.f32 %v667, 0.0
  %v854 = vmax.f32 %v669, 0.0
  %v855 = vmax.f32 %v672, 0.0
  %v856 = vmax.f32 %v674, 0.0
  %v857 = vmax.f32 %v677, 0.0
  %v858 = vmax.f32 %v679, 0.0
  %v859 = vmax.f32 %v682, 0.0
  %v860 = vmax.f32 %v684, 0.0
  %v861 = vmax.f32 %v687, 0.0
  %v862 = vmax.f32 %v689, 0.0
  %v863 = vmax.f32 %v692, 0.0
  %v864 = vmax.f32 %v694, 0.0
  %v865 = vmax.f32 %v697, 0.0
  %v866 = vmax.f32 %v699, 0.0
  %v867 = vmax.f32 %v702, 0.0
  %v868 = vmax.f32 %v704, 0.0
  %v869 = vmax.f32 %v707, 0.0
  %v870 = vmax.f32 %v709, 0.0
  %v871 = vmax.f32 %v712, 0.0
  %v872 = vmax.f32 %v714, 0.0
  %v873 = vmax.f32 %v717, 0.0
  %v874 = vmax.f32 %v719, 0.0
  %v875 = vmax.f32 %v722, 0.0
  %v876 = vmax.f32 %v724, 0.0
  %v877 = vmax.f32 %v727, 0.0
  %v878 = vmax.f32 %v729, 0.0
  %v879 = vmax.f32 %v732, 0.0
  %v880 = vmax.f32 %v734, 0.0
  %v881 = vmax.f32 %v737, 0.0
  %v882 = vmax.f32 %v739, 0.0
  %v883 = vmax.f32 %v742, 0.0
  %v884 = vmax.f32 %v744, 0.0
  %v885 = vmax.f32 %v747, 0.0
  %v886 = vmax.f32 %v749, 0.0
  %v887 = vmax.f32 %v752, 0.0
  %v888 = vmax.f32 %v754, 0.0
  %v889 = vmax.f32 %v757, 0.0
  %v890 = vmax.f32 %v759, 0.0
  %v891 = vmax.f32 %v762, 0.0
  %v892 = vmax.f32 %v764, 0.0
  %v893 = vmax.f32 %v767, 0.0
  %v894 = vmax.f32 %v769, 0.0
  %v895 = vmax.f32 %v772, 0.0
  %v896 = vmax.f32 %v774, 0.0
  %v897 = vmax.f32 %v777, 0.0
  %v898 = vmax.f32 %v779, 0.0
  %v899 = vmax.f32 %v782, 0.0
  %v900 = vmax.f32 %v784, 0.0
  %v901 = vmax.f32 %v787, 0.0
  %v902 = vmax.f32 %v789, 0.0
  %v903 = vmax.f32 %v792, 0.0
  %v904 = vmax.f32 %v794, 0.0
  %v905 = vmax.f32 %v797, 0.0
  %v906 = vmax.f32 %v799, 0.0
  %v907 = vmax.f32 %v802, 0.0
  %v908 = vmax.f32 %v804, 0.0
  %v909 = vmax.f32 %v807, 0.0
  %v910 = vmax.f32 %v809, 0.0
  %v911 = vpack.c.bf16 %v811, %v811
  %v912 = vpack.c.bf16 %v812, %v812
  %v913 = vpack.c.bf16 %v813, %v813
  %v914 = vpack.c.bf16 %v814, %v814
  %v915 = vpack.c.bf16 %v815, %v815
  %v916 = vpack.c.bf16 %v816, %v816
  %v917 = vpack.c.bf16 %v817, %v817
  %v918 = vpack.c.bf16 %v818, %v818
  %v919 = vpack.c.bf16 %v819, %v819
  %v920 = vpack.c.bf16 %v820, %v820
  %v921 = vpack.c.bf16 %v821, %v821
  %v922 = vpack.c.bf16 %v822, %v822
  %v923 = vpack.c.bf16 %v823, %v823
  %v924 = vpack.c.bf16 %v824, %v824
  %v925 = vpack.c.bf16 %v825, %v825
  %v926 = vpack.c.bf16 %v826, %v826
  %v927 = vpack.c.bf16 %v827, %v827
  %v928 = vpack.c.bf16 %v828, %v828
  %v929 = vpack.c.bf16 %v829, %v829
  %v930 = vpack.c.bf16 %v830, %v830
  %v931 = vpack.c.bf16 %v831, %v831
  %v932 = vpack.c.bf16 %v832, %v832
  %v933 = vpack.c.bf16 %v833, %v833
  %v934 = vpack.c.bf16 %v834, %v834
  %v935 = vpack.c.bf16 %v835, %v835
  %v936 = vpack.c.bf16 %v836, %v836
  %v937 = vpack.c.bf16 %v837, %v837
  %v938 = vpack.c.bf16 %v838, %v838
  %v939 = vpack.c.bf16 %v839, %v839
  %v940 = vpack.c.bf16 %v840, %v840
  %v941 = vpack.c.bf16 %v841, %v841
  %v942 = vpack.c.bf16 %v842, %v842
  %v943 = vpack.c.bf16 %v843, %v843
  %v944 = vpack.c.bf16 %v844, %v844
  %v945 = vpack.c.bf16 %v845, %v845
  %v946 = vpack.c.bf16 %v846, %v846
  %v947 = vpack.c.bf16 %v847, %v847
  %v948 = vpack.c.bf16 %v848, %v848
  %v949 = vpack.c.bf16 %v849, %v849
  %v950 = vpack.c.bf16 %v850, %v850
  %v951 = vpack.c.bf16 %v851, %v851
  %v952 = vpack.c.bf16 %v852, %v852
  %v953 = vpack.c.bf16 %v853, %v853
  %v954 = vpack.c.bf16 %v854, %v854
  %v955 = vpack.c.bf16 %v855, %v855
  %v956 = vpack.c.bf16 %v856, %v856
  %v957 = vpack.c.bf16 %v857, %v857
  %v958 = vpack.c.bf16 %v858, %v858
  %v959 = vpack.c.bf16 %v859, %v859
  %v960 = vpack.c.bf16 %v860, %v860
  %v961 = vpack.c.bf16 %v861, %v861
  %v962 = vpack.c.bf16 %v862, %v862
  %v963 = vpack.c.bf16 %v863, %v863
  %v964 = vpack.c.bf16 %v864, %v864
  %v965 = vpack.c.bf16 %v865, %v865
  %v966 = vpack.c.bf16 %v866, %v866
  %v967 = vpack.c.bf16 %v867, %v867
  %v968 = vpack.c.bf16 %v868, %v868
  %v969 = vpack.c.bf16 %v869, %v869
  %v970 = vpack.c.bf16 %v870, %v870
  %v971 = vpack.c.bf16 %v871, %v871
  %v972 = vpack.c.bf16 %v872, %v872
  %v973 = vpack.c.bf16 %v873, %v873
  %v974 = vpack.c.bf16 %v874, %v874
  %v975 = vpack.c.bf16 %v875, %v875
  %v976 = vpack.c.bf16 %v876, %v876
  %v977 = vpack.c.bf16 %v877, %v877
  %v978 = vpack.c.bf16 %v878, %v878
  %v979 = vpack.c.bf16 %v879, %v879
  %v980 = vpack.c.bf16 %v880, %v880
  %v981 = vpack.c.bf16 %v881, %v881
  %v982 = vpack.c.bf16 %v882, %v882
  %v983 = vpack.c.bf16 %v883, %v883
  %v984 = vpack.c.bf16 %v884, %v884
  %v985 = vpack.c.bf16 %v885, %v885
  %v986 = vpack.c.bf16 %v886, %v886
  %v987 = vpack.c.bf16 %v887, %v887
  %v988 = vpack.c.bf16 %v888, %v888
  %v989 = vpack.c.bf16 %v889, %v889
  %v990 = vpack.c.bf16 %v890, %v890
  %v991 = vpack.c.bf16 %v891, %v891
  %v992 = vpack.c.bf16 %v892, %v892
  %v993 = vpack.c.bf16 %v893, %v893
  %v994 = vpack.c.bf16 %v894, %v894
  %v995 = vpack.c.bf16 %v895, %v895
  %v996 = vpack.c.bf16 %v896, %v896
  %v997 = vpack.c.bf16 %v897, %v897
  %v998 = vpack.c.bf16 %v898, %v898
  %v999 = vpack.c.bf16 %v899, %v899
  %v1000 = vpack.c.bf16 %v900, %v900
  %v1001 = vpack.c.bf16 %v901, %v901
  %v1002 = vpack.c.bf16 %v902, %v902
  %v1003 = vpack.c.bf16 %v903, %v903
  %v1004 = vpack.c.bf16 %v904, %v904
  %v1005 = vpack.c.bf16 %v905, %v905
  %v1006 = vpack.c.bf16 %v906, %v906
  %v1007 = vpack.c.bf16 %v907, %v907
  %v1008 = vpack.c.bf16 %v908, %v908
  %v1009 = vpack.c.bf16 %v909, %v909
  %v1010 = vpack.c.bf16 %v910, %v910
  %vm1011 = vcmask 125952
  %1012 = vst.msk [vmem:[%s3] sm:$0xf] %vm1011, %v911
  %1013 = vst.msk [vmem:[%s3 + $0x4] sm:$0xf] %vm1011, %v912
  %1014 = vst.msk [vmem:[%s3 + $0x8] sm:$0xf] %vm1011, %v913
  %1015 = vst.msk [vmem:[%s3 + $0xc] sm:$0xf] %vm1011, %v914
  %1016 = vst.msk [vmem:[%s3 + $0x10] sm:$0xf] %vm1011, %v915
  %1017 = vst.msk [vmem:[%s3 + $0x14] sm:$0xf] %vm1011, %v916
  %1018 = vst.msk [vmem:[%s3 + $0x18] sm:$0xf] %vm1011, %v917
  %1019 = vst.msk [vmem:[%s3 + $0x1c] sm:$0xf] %vm1011, %v918
  %1020 = vst.msk [vmem:[%s3 + $0x20] sm:$0xf] %vm1011, %v919
  %1021 = vst.msk [vmem:[%s3 + $0x24] sm:$0xf] %vm1011, %v920
  %1022 = vst.msk [vmem:[%s3 + $0x28] sm:$0xf] %vm1011, %v921
  %1023 = vst.msk [vmem:[%s3 + $0x2c] sm:$0xf] %vm1011, %v922
  %1024 = vst.msk [vmem:[%s3 + $0x30] sm:$0xf] %vm1011, %v923
  %1025 = vst.msk [vmem:[%s3 + $0x34] sm:$0xf] %vm1011, %v924
  %1026 = vst.msk [vmem:[%s3 + $0x38] sm:$0xf] %vm1011, %v925
  %1027 = vst.msk [vmem:[%s3 + $0x3c] sm:$0xf] %vm1011, %v926
  %1028 = vst.msk [vmem:[%s3 + $0x40] sm:$0xf] %vm1011, %v927
  %1029 = vst.msk [vmem:[%s3 + $0x44] sm:$0xf] %vm1011, %v928
  %1030 = vst.msk [vmem:[%s3 + $0x48] sm:$0xf] %vm1011, %v929
  %1031 = vst.msk [vmem:[%s3 + $0x4c] sm:$0xf] %vm1011, %v930
  %1032 = vst.msk [vmem:[%s3 + $0x50] sm:$0xf] %vm1011, %v931
  %1033 = vst.msk [vmem:[%s3 + $0x54] sm:$0xf] %vm1011, %v932
  %1034 = vst.msk [vmem:[%s3 + $0x58] sm:$0xf] %vm1011, %v933
  %1035 = vst.msk [vmem:[%s3 + $0x5c] sm:$0xf] %vm1011, %v934
  %1036 = vst.msk [vmem:[%s3 + $0x60] sm:$0xf] %vm1011, %v935
  %1037 = vst.msk [vmem:[%s3 + $0x64] sm:$0xf] %vm1011, %v936
  %1038 = vst.msk [vmem:[%s3 + $0x68] sm:$0xf] %vm1011, %v937
  %1039 = vst.msk [vmem:[%s3 + $0x6c] sm:$0xf] %vm1011, %v938
  %1040 = vst.msk [vmem:[%s3 + $0x70] sm:$0xf] %vm1011, %v939
  %1041 = vst.msk [vmem:[%s3 + $0x74] sm:$0xf] %vm1011, %v940
  %1042 = vst.msk [vmem:[%s3 + $0x78] sm:$0xf] %vm1011, %v941
  %1043 = vst.msk [vmem:[%s3 + $0x7c] sm:$0xf] %vm1011, %v942
  %1044 = vst.msk [vmem:[%s3 + $0x80] sm:$0xf] %vm1011, %v943
  %1045 = vst.msk [vmem:[%s3 + $0x84] sm:$0xf] %vm1011, %v944
  %1046 = vst.msk [vmem:[%s3 + $0x88] sm:$0xf] %vm1011, %v945
  %1047 = vst.msk [vmem:[%s3 + $0x8c] sm:$0xf] %vm1011, %v946
  %1048 = vst.msk [vmem:[%s3 + $0x90] sm:$0xf] %vm1011, %v947
  %1049 = vst.msk [vmem:[%s3 + $0x94] sm:$0xf] %vm1011, %v948
  %1050 = vst.msk [vmem:[%s3 + $0x98] sm:$0xf] %vm1011, %v949
  %1051 = vst.msk [vmem:[%s3 + $0x9c] sm:$0xf] %vm1011, %v950
  %1052 = vst.msk [vmem:[%s3 + $0xa0] sm:$0xf] %vm1011, %v951
  %1053 = vst.msk [vmem:[%s3 + $0xa4] sm:$0xf] %vm1011, %v952
  %1054 = vst.msk [vmem:[%s3 + $0xa8] sm:$0xf] %vm1011, %v953
  %1055 = vst.msk [vmem:[%s3 + $0xac] sm:$0xf] %vm1011, %v954
  %1056 = vst.msk [vmem:[%s3 + $0xb0] sm:$0xf] %vm1011, %v955
  %1057 = vst.msk [vmem:[%s3 + $0xb4] sm:$0xf] %vm1011, %v956
  %1058 = vst.msk [vmem:[%s3 + $0xb8] sm:$0xf] %vm1011, %v957
  %1059 = vst.msk [vmem:[%s3 + $0xbc] sm:$0xf] %vm1011, %v958
  %1060 = vst.msk [vmem:[%s3 + $0xc0] sm:$0xf] %vm1011, %v959
  %1061 = vst.msk [vmem:[%s3 + $0xc4] sm:$0xf] %vm1011, %v960
  %1062 = vst.msk [vmem:[%s3 + $0xc8] sm:$0xf] %vm1011, %v961
  %1063 = vst.msk [vmem:[%s3 + $0xcc] sm:$0xf] %vm1011, %v962
  %1064 = vst.msk [vmem:[%s3 + $0xd0] sm:$0xf] %vm1011, %v963
  %1065 = vst.msk [vmem:[%s3 + $0xd4] sm:$0xf] %vm1011, %v964
  %1066 = vst.msk [vmem:[%s3 + $0xd8] sm:$0xf] %vm1011, %v965
  %1067 = vst.msk [vmem:[%s3 + $0xdc] sm:$0xf] %vm1011, %v966
  %1068 = vst.msk [vmem:[%s3 + $0xe0] sm:$0xf] %vm1011, %v967
  %1069 = vst.msk [vmem:[%s3 + $0xe4] sm:$0xf] %vm1011, %v968
  %1070 = vst.msk [vmem:[%s3 + $0xe8] sm:$0xf] %vm1011, %v969
  %1071 = vst.msk [vmem:[%s3 + $0xec] sm:$0xf] %vm1011, %v970
  %1072 = vst.msk [vmem:[%s3 + $0xf0] sm:$0xf] %vm1011, %v971
  %1073 = vst.msk [vmem:[%s3 + $0xf4] sm:$0xf] %vm1011, %v972
  %1074 = vst.msk [vmem:[%s3 + $0xf8] sm:$0xf] %vm1011, %v973
  %1075 = vst.msk [vmem:[%s3 + $0xfc] sm:$0xf] %vm1011, %v974
  %1076 = vst.msk [vmem:[%s3 + $0x100] sm:$0xf] %vm1011, %v975
  %1077 = vst.msk [vmem:[%s3 + $0x104] sm:$0xf] %vm1011, %v976
  %1078 = vst.msk [vmem:[%s3 + $0x108] sm:$0xf] %vm1011, %v977
  %1079 = vst.msk [vmem:[%s3 + $0x10c] sm:$0xf] %vm1011, %v978
  %1080 = vst.msk [vmem:[%s3 + $0x110] sm:$0xf] %vm1011, %v979
  %1081 = vst.msk [vmem:[%s3 + $0x114] sm:$0xf] %vm1011, %v980
  %1082 = vst.msk [vmem:[%s3 + $0x118] sm:$0xf] %vm1011, %v981
  %1083 = vst.msk [vmem:[%s3 + $0x11c] sm:$0xf] %vm1011, %v982
  %1084 = vst.msk [vmem:[%s3 + $0x120] sm:$0xf] %vm1011, %v983
  %1085 = vst.msk [vmem:[%s3 + $0x124] sm:$0xf] %vm1011, %v984
  %1086 = vst.msk [vmem:[%s3 + $0x128] sm:$0xf] %vm1011, %v985
  %1087 = vst.msk [vmem:[%s3 + $0x12c] sm:$0xf] %vm1011, %v986
  %1088 = vst.msk [vmem:[%s3 + $0x130] sm:$0xf] %vm1011, %v987
  %1089 = vst.msk [vmem:[%s3 + $0x134] sm:$0xf] %vm1011, %v988
  %1090 = vst.msk [vmem:[%s3 + $0x138] sm:$0xf] %vm1011, %v989
  %1091 = vst.msk [vmem:[%s3 + $0x13c] sm:$0xf] %vm1011, %v990
  %1092 = vst.msk [vmem:[%s3 + $0x140] sm:$0xf] %vm1011, %v991
  %1093 = vst.msk [vmem:[%s3 + $0x144] sm:$0xf] %vm1011, %v992
  %1094 = vst.msk [vmem:[%s3 + $0x148] sm:$0xf] %vm1011, %v993
  %1095 = vst.msk [vmem:[%s3 + $0x14c] sm:$0xf] %vm1011, %v994
  %1096 = vst.msk [vmem:[%s3 + $0x150] sm:$0xf] %vm1011, %v995
  %1097 = vst.msk [vmem:[%s3 + $0x154] sm:$0xf] %vm1011, %v996
  %1098 = vst.msk [vmem:[%s3 + $0x158] sm:$0xf] %vm1011, %v997
  %1099 = vst.msk [vmem:[%s3 + $0x15c] sm:$0xf] %vm1011, %v998
  %1100 = vst.msk [vmem:[%s3 + $0x160] sm:$0xf] %vm1011, %v999
  %1101 = vst.msk [vmem:[%s3 + $0x164] sm:$0xf] %vm1011, %v1000
  %1102 = vst.msk [vmem:[%s3 + $0x168] sm:$0xf] %vm1011, %v1001
  %1103 = vst.msk [vmem:[%s3 + $0x16c] sm:$0xf] %vm1011, %v1002
  %1104 = vst.msk [vmem:[%s3 + $0x170] sm:$0xf] %vm1011, %v1003
  %1105 = vst.msk [vmem:[%s3 + $0x174] sm:$0xf] %vm1011, %v1004
  %1106 = vst.msk [vmem:[%s3 + $0x178] sm:$0xf] %vm1011, %v1005
  %1107 = vst.msk [vmem:[%s3 + $0x17c] sm:$0xf] %vm1011, %v1006
  %1108 = vst.msk [vmem:[%s3 + $0x180] sm:$0xf] %vm1011, %v1007
  %1109 = vst.msk [vmem:[%s3 + $0x184] sm:$0xf] %vm1011, %v1008
  %1110 = vst.msk [vmem:[%s3 + $0x188] sm:$0xf] %vm1011, %v1009
  %1111 = vst.msk [vmem:[%s3 + $0x18c] sm:$0xf] %vm1011, %v1010
  // Predicated region
  $region14: #{dqn_forward.4} parent=0 // pred_check
    _
  $region15: #{dqn_forward.4} parent=0 // pred_check_branch
    %1113 = sbr.rel (0) target = $region17
  $region16: #{dqn_forward.4} parent=0 // pred_region
    _
  $region17: #{dqn_forward.4} parent=0 // pred_fallthru
    _
  // Predicated region
  $region18: #{dqn_forward.4} parent=0 // pred_check
    _
  $region19: #{dqn_forward.4} parent=0 // pred_check_branch
    %1115 = sbr.rel (0) target = $region21
  $region20: #{dqn_forward.4} parent=0 // pred_region
    _
  $region21: #{dqn_forward.4} parent=0 // pred_fallthru
    _

// kernel: dqn_forward.5
$region0: #{dqn_forward.5}
  #allocation0 [shape = 'u32[]', space=smem, size = 0x4, offset = 0x4, fixed_abs, tag = 'smem constant byte address 0x4 - core index']
  #allocation1 [shape = 'u32[72,128]{1,0:T(1,128)}', space=vmem, size = 0x9000, scoped, tag = 'internal scratch']
  %s0 = inlined_call_operand.vmem [shape: bf16[162,256], index: 0, kind: input, shape index: {}]
  %s1 = inlined_call_operand.vmem [shape: bf16[256,32], index: 1, kind: input, shape index: {}]
  %s2 = inlined_call_operand.vmem [shape: f32[1,32], index: 2, kind: input, shape index: {}]
  %s3 = inlined_call_operand.vmem [shape: bf16[162,32], index: 3, kind: output, shape index: {}]
  %s4 = sld [smem:[#allocation0]]
  $region22: #{dqn_forward.5} parent=0
    _
  %s6 = ssub.s32 1, %s4
  %s7 = scalar_select 0, %s6, %s4
  // Predicated region
  $region2: #{dqn_forward.5} parent=0 // pred_check
    _
  $region3: #{dqn_forward.5} parent=0 // pred_check_branch
    %9 = sbr.rel (0) target = $region5
  $region4: #{dqn_forward.5} parent=0 // pred_region
    _
  $region5: #{dqn_forward.5} parent=0 // pred_fallthru
    _
  // Predicated region
  $region6: #{dqn_forward.5} parent=0 // pred_check
    _
  $region7: #{dqn_forward.5} parent=0 // pred_check_branch
    %11 = sbr.rel (0) target = $region9
  $region8: #{dqn_forward.5} parent=0 // pred_region
    _
  $region9: #{dqn_forward.5} parent=0 // pred_fallthru
    _
  // Predicated region
  $region10: #{dqn_forward.5} parent=0 // pred_check
    _
  $region11: #{dqn_forward.5} parent=0 // pred_check_branch
    %13 = sbr.rel (0) target = $region13
  $region12: #{dqn_forward.5} parent=0 // pred_region
    _
  $region13: #{dqn_forward.5} parent=0 // pred_fallthru
    _
  %v14 = vld [vmem:[%s0] sm:$0xff]
  %v15 = vld [vmem:[%s0 + $0x8] sm:$0xff]
  %v16 = vld [vmem:[%s0 + $0x10] sm:$0xff]
  %v17 = vld [vmem:[%s0 + $0x18] sm:$0xff]
  %v18 = vld [vmem:[%s0 + $0x20] sm:$0xff]
  %v19 = vld [vmem:[%s0 + $0x28] sm:$0xff]
  %v20 = vld [vmem:[%s0 + $0x30] sm:$0xff]
  %v21 = vld [vmem:[%s0 + $0x38] sm:$0xff]
  %v22 = vld [vmem:[%s0 + $0x40] sm:$0xff]
  %v23 = vld [vmem:[%s0 + $0x48] sm:$0xff]
  %v24 = vld [vmem:[%s0 + $0x50] sm:$0xff]
  %v25 = vld [vmem:[%s0 + $0x58] sm:$0xff]
  %v26 = vld [vmem:[%s0 + $0x60] sm:$0xff]
  %v27 = vld [vmem:[%s0 + $0x68] sm:$0xff]
  %v28 = vld [vmem:[%s0 + $0x70] sm:$0xff]
  %v29 = vld [vmem:[%s0 + $0x78] sm:$0xff]
  %v30 = vld [vmem:[%s0 + $0x80] sm:$0xff]
  %v31 = vld [vmem:[%s0 + $0x88] sm:$0xff]
  %v32 = vld [vmem:[%s0 + $0x90] sm:$0xff]
  %v33 = vld [vmem:[%s0 + $0x98] sm:$0xff]
  %v34 = vld [vmem:[%s0 + $0xa0] sm:$0x11]
  %v35 = vld [vmem:[%s1] sm:$0xf]
  %v36 = vld [vmem:[%s1 + $0x4] sm:$0xf]
  %v37 = vld [vmem:[%s1 + $0x8] sm:$0xf]
  %v38 = vld [vmem:[%s1 + $0xc] sm:$0xf]
  %v39 = vld [vmem:[%s1 + $0x10] sm:$0xf]
  %v40 = vld [vmem:[%s1 + $0x14] sm:$0xf]
  %v41 = vld [vmem:[%s1 + $0x18] sm:$0xf]
  %v42 = vld [vmem:[%s1 + $0x1c] sm:$0xf]
  %v43 = vld [vmem:[%s1 + $0x20] sm:$0xf]
  %v44 = vld [vmem:[%s1 + $0x24] sm:$0xf]
  %v45 = vld [vmem:[%s1 + $0x28] sm:$0xf]
  %v46 = vld [vmem:[%s1 + $0x2c] sm:$0xf]
  %v47 = vld [vmem:[%s1 + $0x30] sm:$0xf]
  %v48 = vld [vmem:[%s1 + $0x34] sm:$0xf]
  %v49 = vld [vmem:[%s1 + $0x38] sm:$0xf]
  %v50 = vld [vmem:[%s1 + $0x3c] sm:$0xf]
  %v51 = vld [vmem:[%s1 + $0x40] sm:$0xf]
  %v52 = vld [vmem:[%s1 + $0x44] sm:$0xf]
  %v53 = vld [vmem:[%s1 + $0x48] sm:$0xf]
  %v54 = vld [vmem:[%s1 + $0x4c] sm:$0xf]
  %v55 = vld [vmem:[%s1 + $0x50] sm:$0xf]
  %v56 = vld [vmem:[%s1 + $0x54] sm:$0xf]
  %v57 = vld [vmem:[%s1 + $0x58] sm:$0xf]
  %v58 = vld [vmem:[%s1 + $0x5c] sm:$0xf]
  %v59 = vld [vmem:[%s1 + $0x60] sm:$0xf]
  %v60 = vld [vmem:[%s1 + $0x64] sm:$0xf]
  %v61 = vld [vmem:[%s1 + $0x68] sm:$0xf]
  %v62 = vld [vmem:[%s1 + $0x6c] sm:$0xf]
  %v63 = vld [vmem:[%s1 + $0x70] sm:$0xf]
  %v64 = vld [vmem:[%s1 + $0x74] sm:$0xf]
  %v65 = vld [vmem:[%s1 + $0x78] sm:$0xf]
  %v66 = vld [vmem:[%s1 + $0x7c] sm:$0xf]
  %v67 = vld [vmem:[%s2] sm:$0x1]
  %v69 = vperm.slane %v67, 0
  %v92 = vunpack.c.l.b16 %v14
  %v93 = vunpack.c.h.b16 %v14
  %v94 = vunpack.c.l.b16 %v15
  %v95 = vunpack.c.h.b16 %v15
  %v96 = vunpack.c.l.b16 %v16
  %v97 = vunpack.c.h.b16 %v16
  %v98 = vunpack.c.l.b16 %v17
  %v99 = vunpack.c.h.b16 %v17
  %v100 = vunpack.c.l.b16 %v18
  %v101 = vunpack.c.h.b16 %v18
  %v102 = vunpack.c.l.b16 %v19
  %v103 = vunpack.c.h.b16 %v19
  %v104 = vunpack.c.l.b16 %v20
  %v105 = vunpack.c.h.b16 %v20
  %v106 = vunpack.c.l.b16 %v21
  %v107 = vunpack.c.h.b16 %v21
  %v108 = vunpack.c.l.b16 %v22
  %v109 = vunpack.c.h.b16 %v22
  %v110 = vunpack.c.l.b16 %v23
  %v111 = vunpack.c.h.b16 %v23
  %v112 = vunpack.c.l.b16 %v24
  %v113 = vunpack.c.h.b16 %v24
  %v114 = vunpack.c.l.b16 %v25
  %v115 = vunpack.c.h.b16 %v25
  %v116 = vunpack.c.l.b16 %v26
  %v117 = vunpack.c.h.b16 %v26
  %v118 = vunpack.c.l.b16 %v27
  %v119 = vunpack.c.h.b16 %v27
  %v120 = vunpack.c.l.b16 %v28
  %v121 = vunpack.c.h.b16 %v28
  %v122 = vunpack.c.l.b16 %v29
  %v123 = vunpack.c.h.b16 %v29
  %v124 = vunpack.c.l.b16 %v30
  %v125 = vunpack.c.h.b16 %v30
  %v126 = vunpack.c.l.b16 %v31
  %v127 = vunpack.c.h.b16 %v31
  %v128 = vunpack.c.l.b16 %v32
  %v129 = vunpack.c.h.b16 %v32
  %v130 = vunpack.c.l.b16 %v33
  %v131 = vunpack.c.h.b16 %v33
  %v132 = vunpack.c.l.b16 %v34
  %v133 = vunpack.c.h.b16 %v34
  %v134 = vpack.c.b16 %v94, %v92
  %v135 = vpack.c.b16 %v95, %v93
  %v136 = vpack.c.b16 %v98, %v96
  %v137 = vpack.c.b16 %v99, %v97
  %v138 = vpack.c.b16 %v102, %v100
  %v139 = vpack.c.b16 %v103, %v101
  %v140 = vpack.c.b16 %v106, %v104
  %v141 = vpack.c.b16 %v107, %v105
  %v142 = vpack.c.b16 %v110, %v108
  %v143 = vpack.c.b16 %v111, %v109
  %v144 = vpack.c.b16 %v114, %v112
  %v145 = vpack.c.b16 %v115, %v113
  %v146 = vpack.c.b16 %v118, %v116
  %v147 = vpack.c.b16 %v119, %v117
  %v148 = vpack.c.b16 %v122, %v120
  %v149 = vpack.c.b16 %v123, %v121
  %v150 = vpack.c.b16 %v126, %v124
  %v151 = vpack.c.b16 %v127, %v125
  %v152 = vpack.c.b16 %v130, %v128
  %v153 = vpack.c.b16 %v131, %v129
  %v154 = vpack.c.b16 %v132, %v132
  %v155 = vpack.c.b16 %v133, %v133
  %v210 = vunpack.c.l.b16 %v35
  %v211 = vunpack.c.l.b16 %v36
  %v212 = vunpack.c.l.b16 %v37
  %v213 = vunpack.c.l.b16 %v38
  %v214 = vunpack.c.l.b16 %v39
  %v215 = vunpack.c.l.b16 %v40
  %v216 = vunpack.c.l.b16 %v41
  %v217 = vunpack.c.l.b16 %v42
  %v218 = vunpack.c.l.b16 %v43
  %v219 = vunpack.c.l.b16 %v44
  %v220 = vunpack.c.l.b16 %v45
  %v221 = vunpack.c.l.b16 %v46
  %v222 = vunpack.c.l.b16 %v47
  %v223 = vunpack.c.l.b16 %v48
  %v224 = vunpack.c.l.b16 %v49
  %v225 = vunpack.c.l.b16 %v50
  %v226 = vunpack.c.l.b16 %v51
  %v227 = vunpack.c.l.b16 %v52
  %v228 = vunpack.c.l.b16 %v53
  %v229 = vunpack.c.l.b16 %v54
  %v230 = vunpack.c.l.b16 %v55
  %v231 = vunpack.c.l.b16 %v56
  %v232 = vunpack.c.l.b16 %v57
  %v233 = vunpack.c.l.b16 %v58
  %v234 = vunpack.c.l.b16 %v59
  %v235 = vunpack.c.l.b16 %v60
  %v236 = vunpack.c.l.b16 %v61
  %v237 = vunpack.c.l.b16 %v62
  %v238 = vunpack.c.l.b16 %v63
  %v239 = vunpack.c.l.b16 %v64
  %v240 = vunpack.c.l.b16 %v65
  %v241 = vunpack.c.l.b16 %v66
  %v242 = vpack.c.b16 %v211, %v210
  %v243 = vpack.c.b16 %v213, %v212
  %v244 = vpack.c.b16 %v215, %v214
  %v245 = vpack.c.b16 %v217, %v216
  %v246 = vpack.c.b16 %v219, %v218
  %v247 = vpack.c.b16 %v221, %v220
  %v248 = vpack.c.b16 %v223, %v222
  %v249 = vpack.c.b16 %v225, %v224
  %v250 = vpack.c.b16 %v227, %v226
  %v251 = vpack.c.b16 %v229, %v228
  %v252 = vpack.c.b16 %v231, %v230
  %v253 = vpack.c.b16 %v233, %v232
  %v254 = vpack.c.b16 %v235, %v234
  %v255 = vpack.c.b16 %v237, %v236
  %v256 = vpack.c.b16 %v239, %v238
  %v257 = vpack.c.b16 %v241, %v240
  %274 = vmatpush.bf16.msra.mxu0 %v249
  %275 = vmatpush.bf16.msra.mxu0 %v248
  %276 = vmatpush.bf16.msra.mxu0 %v247
  %277 = vmatpush.bf16.msra.mxu0 %v246
  %278 = vmatpush.bf16.msra.mxu0 %v245
  %279 = vmatpush.bf16.msra.mxu0 %v244
  %280 = vmatpush.bf16.msra.mxu0 %v243
  %281 = vmatpush.bf16.msra.mxu0 %v242
  %282 = vmatmul.bf16.gmra.mxu0 %v134
  %v283 = vpop.f32.mrf.mxu0
  %v284 = vadd.f32 %v69, %v283
  %v285 = vpop.f32.mrf.mxu0
  %v286 = vadd.f32 %v69, %v285
  %287 = vmatmul.bf16.gmra.mxu0 %v136
  %v288 = vpop.f32.mrf.mxu0
  %v289 = vadd.f32 %v69, %v288
  %v290 = vpop.f32.mrf.mxu0
  %v291 = vadd.f32 %v69, %v290
  %292 = vmatmul.bf16.gmra.mxu0 %v138
  %v293 = vpop.f32.mrf.mxu0
  %v294 = vadd.f32 %v69, %v293
  %v295 = vpop.f32.mrf.mxu0
  %v296 = vadd.f32 %v69, %v295
  %297 = vmatmul.bf16.gmra.mxu0 %v140
  %v298 = vpop.f32.mrf.mxu0
  %v299 = vadd.f32 %v69, %v298
  %v300 = vpop.f32.mrf.mxu0
  %v301 = vadd.f32 %v69, %v300
  %302 = vmatmul.bf16.gmra.mxu0 %v142
  %v303 = vpop.f32.mrf.mxu0
  %v304 = vadd.f32 %v69, %v303
  %v305 = vpop.f32.mrf.mxu0
  %v306 = vadd.f32 %v69, %v305
  %307 = vmatmul.bf16.gmra.mxu0 %v144
  %v308 = vpop.f32.mrf.mxu0
  %v309 = vadd.f32 %v69, %v308
  %v310 = vpop.f32.mrf.mxu0
  %v311 = vadd.f32 %v69, %v310
  %312 = vmatmul.bf16.gmra.mxu0 %v146
  %v313 = vpop.f32.mrf.mxu0
  %v314 = vadd.f32 %v69, %v313
  %v315 = vpop.f32.mrf.mxu0
  %v316 = vadd.f32 %v69, %v315
  %317 = vmatmul.bf16.gmra.mxu0 %v148
  %v318 = vpop.f32.mrf.mxu0
  %v319 = vadd.f32 %v69, %v318
  %v320 = vpop.f32.mrf.mxu0
  %v321 = vadd.f32 %v69, %v320
  %322 = vmatmul.bf16.gmra.mxu0 %v150
  %v323 = vpop.f32.mrf.mxu0
  %v324 = vadd.f32 %v69, %v323
  %v325 = vpop.f32.mrf.mxu0
  %v326 = vadd.f32 %v69, %v325
  %327 = vmatmul.bf16.gmra.mxu0 %v152
  %v328 = vpop.f32.mrf.mxu0
  %v329 = vadd.f32 %v69, %v328
  %v330 = vpop.f32.mrf.mxu0
  %v331 = vadd.f32 %v69, %v330
  %332 = vmatmul.bf16.gmra.mxu0 %v154
  %v333 = vpop.f32.mrf.mxu0
  %v334 = vadd.f32 %v69, %v333
  %v335 = vpop.f32.mrf.mxu0
  %336 = vdwg.mxu0
  %337 = vmatpush.bf16.msra.mxu0 %v257
  %338 = vmatpush.bf16.msra.mxu0 %v256
  %339 = vmatpush.bf16.msra.mxu0 %v255
  %340 = vmatpush.bf16.msra.mxu0 %v254
  %341 = vmatpush.bf16.msra.mxu0 %v253
  %342 = vmatpush.bf16.msra.mxu0 %v252
  %343 = vmatpush.bf16.msra.mxu0 %v251
  %344 = vmatpush.bf16.msra.mxu0 %v250
  %345 = vmatmul.bf16.gmra.mxu0 %v135
  %v346 = vpop.f32.mrf.mxu0
  %v347 = vadd.f32 %v284, %v346
  %v348 = vpop.f32.mrf.mxu0
  %v349 = vadd.f32 %v286, %v348
  %350 = vmatmul.bf16.gmra.mxu0 %v137
  %v351 = vpop.f32.mrf.mxu0
  %v352 = vadd.f32 %v289, %v351
  %v353 = vpop.f32.mrf.mxu0
  %v354 = vadd.f32 %v291, %v353
  %355 = vmatmul.bf16.gmra.mxu0 %v139
  %v356 = vpop.f32.mrf.mxu0
  %v357 = vadd.f32 %v294, %v356
  %v358 = vpop.f32.mrf.mxu0
  %v359 = vadd.f32 %v296, %v358
  %360 = vmatmul.bf16.gmra.mxu0 %v141
  %v361 = vpop.f32.mrf.mxu0
  %v362 = vadd.f32 %v299, %v361
  %v363 = vpop.f32.mrf.mxu0
  %v364 = vadd.f32 %v301, %v363
  %365 = vmatmul.bf16.gmra.mxu0 %v143
  %v366 = vpop.f32.mrf.mxu0
  %v367 = vadd.f32 %v304, %v366
  %v368 = vpop.f32.mrf.mxu0
  %v369 = vadd.f32 %v306, %v368
  %370 = vmatmul.bf16.gmra.mxu0 %v145
  %v371 = vpop.f32.mrf.mxu0
  %v372 = vadd.f32 %v309, %v371
  %v373 = vpop.f32.mrf.mxu0
  %v374 = vadd.f32 %v311, %v373
  %375 = vmatmul.bf16.gmra.mxu0 %v147
  %v376 = vpop.f32.mrf.mxu0
  %v377 = vadd.f32 %v314, %v376
  %v378 = vpop.f32.mrf.mxu0
  %v379 = vadd.f32 %v316, %v378
  %380 = vmatmul.bf16.gmra.mxu0 %v149
  %v381 = vpop.f32.mrf.mxu0
  %v382 = vadd.f32 %v319, %v381
  %v383 = vpop.f32.mrf.mxu0
  %v384 = vadd.f32 %v321, %v383
  %385 = vmatmul.bf16.gmra.mxu0 %v151
  %v386 = vpop.f32.mrf.mxu0
  %v387 = vadd.f32 %v324, %v386
  %v388 = vpop.f32.mrf.mxu0
  %v389 = vadd.f32 %v326, %v388
  %390 = vmatmul.bf16.gmra.mxu0 %v153
  %v391 = vpop.f32.mrf.mxu0
  %v392 = vadd.f32 %v329, %v391
  %v393 = vpop.f32.mrf.mxu0
  %v394 = vadd.f32 %v331, %v393
  %395 = vmatmul.bf16.gmra.mxu0 %v155
  %v396 = vpop.f32.mrf.mxu0
  %v397 = vadd.f32 %v334, %v396
  %v398 = vpop.f32.mrf.mxu0
  %399 = vdwg.mxu0
  %v400 = vmax.f32 %v347, 0.0
  %v401 = vmax.f32 %v349, 0.0
  %v402 = vmax.f32 %v352, 0.0
  %v403 = vmax.f32 %v354, 0.0
  %v404 = vmax.f32 %v357, 0.0
  %v405 = vmax.f32 %v359, 0.0
  %v406 = vmax.f32 %v362, 0.0
  %v407 = vmax.f32 %v364, 0.0
  %v408 = vmax.f32 %v367, 0.0
  %v409 = vmax.f32 %v369, 0.0
  %v410 = vmax.f32 %v372, 0.0
  %v411 = vmax.f32 %v374, 0.0
  %v412 = vmax.f32 %v377, 0.0
  %v413 = vmax.f32 %v379, 0.0
  %v414 = vmax.f32 %v382, 0.0
  %v415 = vmax.f32 %v384, 0.0
  %v416 = vmax.f32 %v387, 0.0
  %v417 = vmax.f32 %v389, 0.0
  %v418 = vmax.f32 %v392, 0.0
  %v419 = vmax.f32 %v394, 0.0
  %v420 = vmax.f32 %v397, 0.0
  %v421 = vpack.c.bf16 %v400, %v400
  %v422 = vpack.c.bf16 %v401, %v401
  %v423 = vpack.c.bf16 %v402, %v402
  %v424 = vpack.c.bf16 %v403, %v403
  %v425 = vpack.c.bf16 %v404, %v404
  %v426 = vpack.c.bf16 %v405, %v405
  %v427 = vpack.c.bf16 %v406, %v406
  %v428 = vpack.c.bf16 %v407, %v407
  %v429 = vpack.c.bf16 %v408, %v408
  %v430 = vpack.c.bf16 %v409, %v409
  %v431 = vpack.c.bf16 %v410, %v410
  %v432 = vpack.c.bf16 %v411, %v411
  %v433 = vpack.c.bf16 %v412, %v412
  %v434 = vpack.c.bf16 %v413, %v413
  %v435 = vpack.c.bf16 %v414, %v414
  %v436 = vpack.c.bf16 %v415, %v415
  %v437 = vpack.c.bf16 %v416, %v416
  %v438 = vpack.c.bf16 %v417, %v417
  %v439 = vpack.c.bf16 %v418, %v418
  %v440 = vpack.c.bf16 %v419, %v419
  %v441 = vpack.c.bf16 %v420, %v420
  %vm442 = vcmask 257024
  %443 = vst.msk [vmem:[%s3] sm:$0xf] %vm442, %v421
  %444 = vst.msk [vmem:[%s3 + $0x4] sm:$0xf] %vm442, %v422
  %445 = vst.msk [vmem:[%s3 + $0x8] sm:$0xf] %vm442, %v423
  %446 = vst.msk [vmem:[%s3 + $0xc] sm:$0xf] %vm442, %v424
  %447 = vst.msk [vmem:[%s3 + $0x10] sm:$0xf] %vm442, %v425
  %448 = vst.msk [vmem:[%s3 + $0x14] sm:$0xf] %vm442, %v426
  %449 = vst.msk [vmem:[%s3 + $0x18] sm:$0xf] %vm442, %v427
  %450 = vst.msk [vmem:[%s3 + $0x1c] sm:$0xf] %vm442, %v428
  %451 = vst.msk [vmem:[%s3 + $0x20] sm:$0xf] %vm442, %v429
  %452 = vst.msk [vmem:[%s3 + $0x24] sm:$0xf] %vm442, %v430
  %453 = vst.msk [vmem:[%s3 + $0x28] sm:$0xf] %vm442, %v431
  %454 = vst.msk [vmem:[%s3 + $0x2c] sm:$0xf] %vm442, %v432
  %455 = vst.msk [vmem:[%s3 + $0x30] sm:$0xf] %vm442, %v433
  %456 = vst.msk [vmem:[%s3 + $0x34] sm:$0xf] %vm442, %v434
  %457 = vst.msk [vmem:[%s3 + $0x38] sm:$0xf] %vm442, %v435
  %458 = vst.msk [vmem:[%s3 + $0x3c] sm:$0xf] %vm442, %v436
  %459 = vst.msk [vmem:[%s3 + $0x40] sm:$0xf] %vm442, %v437
  %460 = vst.msk [vmem:[%s3 + $0x44] sm:$0xf] %vm442, %v438
  %461 = vst.msk [vmem:[%s3 + $0x48] sm:$0xf] %vm442, %v439
  %462 = vst.msk [vmem:[%s3 + $0x4c] sm:$0xf] %vm442, %v440
  %vm463 = vcmask 253952
  %464 = vst.msk [vmem:[%s3 + $0x50] sm:$0x1] %vm463, %v441
  // Predicated region
  $region14: #{dqn_forward.5} parent=0 // pred_check
    _
  $region15: #{dqn_forward.5} parent=0 // pred_check_branch
    %466 = sbr.rel (0) target = $region17
  $region16: #{dqn_forward.5} parent=0 // pred_region
    _
  $region17: #{dqn_forward.5} parent=0 // pred_fallthru
    _
  // Predicated region
  $region18: #{dqn_forward.5} parent=0 // pred_check
    _
  $region19: #{dqn_forward.5} parent=0 // pred_check_branch
    %468 = sbr.rel (0) target = $region21
  $region20: #{dqn_forward.5} parent=0 // pred_region
    _
  $region21: #{dqn_forward.5} parent=0 // pred_fallthru
    _

// kernel: dqn_forward.6
$region0: #{dqn_forward.6}
  #allocation0 [shape = 'u32[]', space=smem, size = 0x4, offset = 0x4, fixed_abs, tag = 'smem constant byte address 0x4 - core index']
  #allocation1 [shape = 'u32[72,128]{1,0:T(1,128)}', space=vmem, size = 0x9000, scoped, tag = 'internal scratch']
  %s0 = inlined_call_operand.vmem [shape: bf16[98,288], index: 0, kind: input, shape index: {}]
  %s1 = inlined_call_operand.vmem [shape: bf16[288,32], index: 1, kind: input, shape index: {}]
  %s2 = inlined_call_operand.vmem [shape: f32[1,32], index: 2, kind: input, shape index: {}]
  %s3 = inlined_call_operand.vmem [shape: bf16[98,32], index: 3, kind: output, shape index: {}]
  %s4 = sld [smem:[#allocation0]]
  $region22: #{dqn_forward.6} parent=0
    _
  %s6 = ssub.s32 1, %s4
  %s7 = scalar_select 0, %s6, %s4
  // Predicated region
  $region2: #{dqn_forward.6} parent=0 // pred_check
    _
  $region3: #{dqn_forward.6} parent=0 // pred_check_branch
    %9 = sbr.rel (0) target = $region5
  $region4: #{dqn_forward.6} parent=0 // pred_region
    _
  $region5: #{dqn_forward.6} parent=0 // pred_fallthru
    _
  // Predicated region
  $region6: #{dqn_forward.6} parent=0 // pred_check
    _
  $region7: #{dqn_forward.6} parent=0 // pred_check_branch
    %11 = sbr.rel (0) target = $region9
  $region8: #{dqn_forward.6} parent=0 // pred_region
    _
  $region9: #{dqn_forward.6} parent=0 // pred_fallthru
    _
  // Predicated region
  $region10: #{dqn_forward.6} parent=0 // pred_check
    _
  $region11: #{dqn_forward.6} parent=0 // pred_check_branch
    %13 = sbr.rel (0) target = $region13
  $region12: #{dqn_forward.6} parent=0 // pred_region
    _
  $region13: #{dqn_forward.6} parent=0 // pred_fallthru
    _
  %v15 = vld [vmem:[%s0] sm:$0xff]
  %v16 = vld [vmem:[%s0 + $0x8] sm:$0xf]
  %v17 = vld [vmem:[%s0 + $0xc] sm:$0xff]
  %v18 = vld [vmem:[%s0 + $0x14] sm:$0xf]
  %v19 = vld [vmem:[%s0 + $0x18] sm:$0xff]
  %v20 = vld [vmem:[%s0 + $0x20] sm:$0xf]
  %v21 = vld [vmem:[%s0 + $0x24] sm:$0xff]
  %v22 = vld [vmem:[%s0 + $0x2c] sm:$0xf]
  %v23 = vld [vmem:[%s0 + $0x30] sm:$0xff]
  %v24 = vld [vmem:[%s0 + $0x38] sm:$0xf]
  %v25 = vld [vmem:[%s0 + $0x3c] sm:$0xff]
  %v26 = vld [vmem:[%s0 + $0x44] sm:$0xf]
  %v27 = vld [vmem:[%s0 + $0x48] sm:$0xff]
  %v28 = vld [vmem:[%s0 + $0x50] sm:$0xf]
  %v29 = vld [vmem:[%s0 + $0x54] sm:$0xff]
  %v30 = vld [vmem:[%s0 + $0x5c] sm:$0xf]
  %v31 = vld [vmem:[%s0 + $0x60] sm:$0xff]
  %v32 = vld [vmem:[%s0 + $0x68] sm:$0xf]
  %v33 = vld [vmem:[%s0 + $0x6c] sm:$0xff]
  %v34 = vld [vmem:[%s0 + $0x74] sm:$0xf]
  %v35 = vld [vmem:[%s0 + $0x78] sm:$0xff]
  %v36 = vld [vmem:[%s0 + $0x80] sm:$0xf]
  %v37 = vld [vmem:[%s0 + $0x84] sm:$0xff]
  %v38 = vld [vmem:[%s0 + $0x8c] sm:$0xf]
  %v39 = vld [vmem:[%s0 + $0x90] sm:$0x11]
  %v40 = vld [vmem:[%s0 + $0x98] sm:$0x1]
  %v41 = vld [vmem:[%s1] sm:$0xf]
  %v42 = vld [vmem:[%s1 + $0x4] sm:$0xf]
  %v43 = vld [vmem:[%s1 + $0x8] sm:$0xf]
  %v44 = vld [vmem:[%s1 + $0xc] sm:$0xf]
  %v45 = vld [vmem:[%s1 + $0x10] sm:$0xf]
  %v46 = vld [vmem:[%s1 + $0x14] sm:$0xf]
  %v47 = vld [vmem:[%s1 + $0x18] sm:$0xf]
  %v48 = vld [vmem:[%s1 + $0x1c] sm:$0xf]
  %v49 = vld [vmem:[%s1 + $0x20] sm:$0xf]
  %v50 = vld [vmem:[%s1 + $0x24] sm:$0xf]
  %v51 = vld [vmem:[%s1 + $0x28] sm:$0xf]
  %v52 = vld [vmem:[%s1 + $0x2c] sm:$0xf]
  %v53 = vld [vmem:[%s1 + $0x30] sm:$0xf]
  %v54 = vld [vmem:[%s1 + $0x34] sm:$0xf]
  %v55 = vld [vmem:[%s1 + $0x38] sm:$0xf]
  %v56 = vld [vmem:[%s1 + $0x3c] sm:$0xf]
  %v57 = vld [vmem:[%s1 + $0x40] sm:$0xf]
  %v58 = vld [vmem:[%s1 + $0x44] sm:$0xf]
  %v59 = vld [vmem:[%s1 + $0x48] sm:$0xf]
  %v60 = vld [vmem:[%s1 + $0x4c] sm:$0xf]
  %v61 = vld [vmem:[%s1 + $0x50] sm:$0xf]
  %v62 = vld [vmem:[%s1 + $0x54] sm:$0xf]
  %v63 = vld [vmem:[%s1 + $0x58] sm:$0xf]
  %v64 = vld [vmem:[%s1 + $0x5c] sm:$0xf]
  %v65 = vld [vmem:[%s1 + $0x60] sm:$0xf]
  %v66 = vld [vmem:[%s1 + $0x64] sm:$0xf]
  %v67 = vld [vmem:[%s1 + $0x68] sm:$0xf]
  %v68 = vld [vmem:[%s1 + $0x6c] sm:$0xf]
  %v69 = vld [vmem:[%s1 + $0x70] sm:$0xf]
  %v70 = vld [vmem:[%s1 + $0x74] sm:$0xf]
  %v71 = vld [vmem:[%s1 + $0x78] sm:$0xf]
  %v72 = vld [vmem:[%s1 + $0x7c] sm:$0xf]
  %v73 = vld [vmem:[%s1 + $0x80] sm:$0xf]
  %v74 = vld [vmem:[%s1 + $0x84] sm:$0xf]
  %v75 = vld [vmem:[%s1 + $0x88] sm:$0xf]
  %v76 = vld [vmem:[%s1 + $0x8c] sm:$0xf]
  %v77 = vld [vmem:[%s2] sm:$0x1]
  %v79 = vperm.slane %v77, 0
  %v107 = vunpack.c.l.b16 %v15
  %v108 = vunpack.c.h.b16 %v15
  %v109 = vunpack.c.l.b16 %v16
  %v110 = vunpack.c.l.b16 %v17
  %v111 = vunpack.c.h.b16 %v17
  %v112 = vunpack.c.l.b16 %v18
  %v113 = vunpack.c.l.b16 %v19
  %v114 = vunpack.c.h.b16 %v19
  %v115 = vunpack.c.l.b16 %v20
  %v116 = vunpack.c.l.b16 %v21
  %v117 = vunpack.c.h.b16 %v21
  %v118 = vunpack.c.l.b16 %v22
  %v119 = vunpack.c.l.b16 %v23
  %v120 = vunpack.c.h.b16 %v23
  %v121 = vunpack.c.l.b16 %v24
  %v122 = vunpack.c.l.b16 %v25
  %v123 = vunpack.c.h.b16 %v25
  %v124 = vunpack.c.l.b16 %v26
  %v125 = vunpack.c.l.b16 %v27
  %v126 = vunpack.c.h.b16 %v27
  %v127 = vunpack.c.l.b16 %v28
  %v128 = vunpack.c.l.b16 %v29
  %v129 = vunpack.c.h.b16 %v29
  %v130 = vunpack.c.l.b16 %v30
  %v131 = vunpack.c.l.b16 %v31
  %v132 = vunpack.c.h.b16 %v31
  %v133 = vunpack.c.l.b16 %v32
  %v134 = vunpack.c.l.b16 %v33
  %v135 = vunpack.c.h.b16 %v33
  %v136 = vunpack.c.l.b16 %v34
  %v137 = vunpack.c.l.b16 %v35
  %v138 = vunpack.c.h.b16 %v35
  %v139 = vunpack.c.l.b16 %v36
  %v140 = vunpack.c.l.b16 %v37
  %v141 = vunpack.c.h.b16 %v37
  %v142 = vunpack.c.l.b16 %v38
  %v143 = vunpack.c.l.b16 %v39
  %v144 = vunpack.c.h.b16 %v39
  %v145 = vunpack.c.l.b16 %v40
  %v146 = vpack.c.b16 %v110, %v107
  %v147 = vpack.c.b16 %v111, %v108
  %v148 = vpack.c.b16 %v112, %v109
  %v149 = vpack.c.b16 %v116, %v113
  %v150 = vpack.c.b16 %v117, %v114
  %v151 = vpack.c.b16 %v118, %v115
  %v152 = vpack.c.b16 %v122, %v119
  %v153 = vpack.c.b16 %v123, %v120
  %v154 = vpack.c.b16 %v124, %v121
  %v155 = vpack.c.b16 %v128, %v125
  %v156 = vpack.c.b16 %v129, %v126
  %v157 = vpack.c.b16 %v130, %v127
  %v158 = vpack.c.b16 %v134, %v131
  %v159 = vpack.c.b16 %v135, %v132
  %v160 = vpack.c.b16 %v136, %v133
  %v161 = vpack.c.b16 %v140, %v137
  %v162 = vpack.c.b16 %v141, %v138
  %v163 = vpack.c.b16 %v142, %v139
  %v164 = vpack.c.b16 %v143, %v143
  %v165 = vpack.c.b16 %v144, %v144
  %v166 = vpack.c.b16 %v145, %v145
  %v217 = vunpack.c.l.b16 %v41
  %v218 = vunpack.c.l.b16 %v42
  %v219 = vunpack.c.l.b16 %v43
  %v220 = vunpack.c.l.b16 %v44
  %v221 = vunpack.c.l.b16 %v45
  %v222 = vunpack.c.l.b16 %v46
  %v223 = vunpack.c.l.b16 %v47
  %v224 = vunpack.c.l.b16 %v48
  %v225 = vunpack.c.l.b16 %v49
  %v226 = vunpack.c.l.b16 %v50
  %v227 = vunpack.c.l.b16 %v51
  %v228 = vunpack.c.l.b16 %v52
  %v229 = vunpack.c.l.b16 %v53
  %v230 = vunpack.c.l.b16 %v54
  %v231 = vunpack.c.l.b16 %v55
  %v232 = vunpack.c.l.b16 %v56
  %v233 = vunpack.c.l.b16 %v57
  %v234 = vunpack.c.l.b16 %v58
  %v235 = vunpack.c.l.b16 %v59
  %v236 = vunpack.c.l.b16 %v60
  %v237 = vunpack.c.l.b16 %v61
  %v238 = vunpack.c.l.b16 %v62
  %v239 = vunpack.c.l.b16 %v63
  %v240 = vunpack.c.l.b16 %v64
  %v241 = vunpack.c.l.b16 %v65
  %v242 = vunpack.c.l.b16 %v66
  %v243 = vunpack.c.l.b16 %v67
  %v244 = vunpack.c.l.b16 %v68
  %v245 = vunpack.c.l.b16 %v69
  %v246 = vunpack.c.l.b16 %v70
  %v247 = vunpack.c.l.b16 %v71
  %v248 = vunpack.c.l.b16 %v72
  %v249 = vunpack.c.l.b16 %v73
  %v250 = vunpack.c.l.b16 %v74
  %v251 = vunpack.c.l.b16 %v75
  %v252 = vunpack.c.l.b16 %v76
  %v253 = vpack.c.b16 %v218, %v217
  %v254 = vpack.c.b16 %v220, %v219
  %v255 = vpack.c.b16 %v222, %v221
  %v256 = vpack.c.b16 %v224, %v223
  %v257 = vpack.c.b16 %v226, %v225
  %v258 = vpack.c.b16 %v228, %v227
  %v259 = vpack.c.b16 %v230, %v229
  %v260 = vpack.c.b16 %v232, %v231
  %v261 = vpack.c.b16 %v234, %v233
  %v262 = vpack.c.b16 %v236, %v235
  %v263 = vpack.c.b16 %v238, %v237
  %v264 = vpack.c.b16 %v240, %v239
  %v265 = vpack.c.b16 %v242, %v241
  %v266 = vpack.c.b16 %v244, %v243
  %v267 = vpack.c.b16 %v246, %v245
  %v268 = vpack.c.b16 %v248, %v247
  %v269 = vpack.c.b16 %v250, %v249
  %v270 = vpack.c.b16 %v252, %v251
  %vm289 = vcmask 261120
  %v291 = vsel %vm289, %v148, 0
  %v294 = vsel %vm289, %v151, 0
  %v297 = vsel %vm289, %v154, 0
  %v300 = vsel %vm289, %v157, 0
  %v303 = vsel %vm289, %v160, 0
  %v306 = vsel %vm289, %v163, 0
  %v309 = vsel %vm289, %v166, 0
  %311 = vmatpush.bf16.msra.mxu0 %v260
  %312 = vmatpush.bf16.msra.mxu0 %v259
  %313 = vmatpush.bf16.msra.mxu0 %v258
  %314 = vmatpush.bf16.msra.mxu0 %v257
  %315 = vmatpush.bf16.msra.mxu0 %v256
  %316 = vmatpush.bf16.msra.mxu0 %v255
  %317 = vmatpush.bf16.msra.mxu0 %v254
  %318 = vmatpush.bf16.msra.mxu0 %v253
  %319 = vmatmul.bf16.gmra.mxu0 %v146
  %v320 = vpop.f32.mrf.mxu0
  %v321 = vadd.f32 %v79, %v320
  %v322 = vpop.f32.mrf.mxu0
  %v323 = vadd.f32 %v79, %v322
  %324 = vmatmul.bf16.gmra.mxu0 %v149
  %v325 = vpop.f32.mrf.mxu0
  %v326 = vadd.f32 %v79, %v325
  %v327 = vpop.f32.mrf.mxu0
  %v328 = vadd.f32 %v79, %v327
  %329 = vmatmul.bf16.gmra.mxu0 %v152
  %v330 = vpop.f32.mrf.mxu0
  %v331 = vadd.f32 %v79, %v330
  %v332 = vpop.f32.mrf.mxu0
  %v333 = vadd.f32 %v79, %v332
  %334 = vmatmul.bf16.gmra.mxu0 %v155
  %v335 = vpop.f32.mrf.mxu0
  %v336 = vadd.f32 %v79, %v335
  %v337 = vpop.f32.mrf.mxu0
  %v338 = vadd.f32 %v79, %v337
  %339 = vmatmul.bf16.gmra.mxu0 %v158
  %v340 = vpop.f32.mrf.mxu0
  %v341 = vadd.f32 %v79, %v340
  %v342 = vpop.f32.mrf.mxu0
  %v343 = vadd.f32 %v79, %v342
  %344 = vmatmul.bf16.gmra.mxu0 %v161
  %v345 = vpop.f32.mrf.mxu0
  %v346 = vadd.f32 %v79, %v345
  %v347 = vpop.f32.mrf.mxu0
  %v348 = vadd.f32 %v79, %v347
  %349 = vmatmul.bf16.gmra.mxu0 %v164
  %v350 = vpop.f32.mrf.mxu0
  %v351 = vadd.f32 %v79, %v350
  %v352 = vpop.f32.mrf.mxu0
  %353 = vdwg.mxu0
  %354 = vmatpush.bf16.msra.mxu0 %v268
  %355 = vmatpush.bf16.msra.mxu0 %v267
  %356 = vmatpush.bf16.msra.mxu0 %v266
  %357 = vmatpush.bf16.msra.mxu0 %v265
  %358 = vmatpush.bf16.msra.mxu0 %v264
  %359 = vmatpush.bf16.msra.mxu0 %v263
  %360 = vmatpush.bf16.msra.mxu0 %v262
  %361 = vmatpush.bf16.msra.mxu0 %v261
  %362 = vmatmul.bf16.gmra.mxu0 %v147
  %v363 = vpop.f32.mrf.mxu0
  %v364 = vadd.f32 %v321, %v363
  %v365 = vpop.f32.mrf.mxu0
  %v366 = vadd.f32 %v323, %v365
  %367 = vmatmul.bf16.gmra.mxu0 %v150
  %v368 = vpop.f32.mrf.mxu0
  %v369 = vadd.f32 %v326, %v368
  %v370 = vpop.f32.mrf.mxu0
  %v371 = vadd.f32 %v328, %v370
  %372 = vmatmul.bf16.gmra.mxu0 %v153
  %v373 = vpop.f32.mrf.mxu0
  %v374 = vadd.f32 %v331, %v373
  %v375 = vpop.f32.mrf.mxu0
  %v376 = vadd.f32 %v333, %v375
  %377 = vmatmul.bf16.gmra.mxu0 %v156
  %v378 = vpop.f32.mrf.mxu0
  %v379 = vadd.f32 %v336, %v378
  %v380 = vpop.f32.mrf.mxu0
  %v381 = vadd.f32 %v338, %v380
  %382 = vmatmul.bf16.gmra.mxu0 %v159
  %v383 = vpop.f32.mrf.mxu0
  %v384 = vadd.f32 %v341, %v383
  %v385 = vpop.f32.mrf.mxu0
  %v386 = vadd.f32 %v343, %v385
  %387 = vmatmul.bf16.gmra.mxu0 %v162
  %v388 = vpop.f32.mrf.mxu0
  %v389 = vadd.f32 %v346, %v388
  %v390 = vpop.f32.mrf.mxu0
  %v391 = vadd.f32 %v348, %v390
  %392 = vmatmul.bf16.gmra.mxu0 %v165
  %v393 = vpop.f32.mrf.mxu0
  %v394 = vadd.f32 %v351, %v393
  %v395 = vpop.f32.mrf.mxu0
  %396 = vdwg.mxu0
  %397 = vmatpush.bf16.msra.mxu0 0
  %398 = vmatpush.bf16.msra.mxu0 0
  %399 = vmatpush.bf16.msra.mxu0 0
  %400 = vmatpush.bf16.msra.mxu0 0
  %401 = vmatpush.bf16.msra.mxu0 0
  %402 = vmatpush.bf16.msra.mxu0 0
  %403 = vmatpush.bf16.msra.mxu0 %v270
  %404 = vmatpush.bf16.msra.mxu0 %v269
  %405 = vmatmul.bf16.gmra.mxu0 %v291
  %v406 = vpop.f32.mrf.mxu0
  %v407 = vadd.f32 %v364, %v406
  %v408 = vpop.f32.mrf.mxu0
  %v409 = vadd.f32 %v366, %v408
  %410 = vmatmul.bf16.gmra.mxu0 %v294
  %v411 = vpop.f32.mrf.mxu0
  %v412 = vadd.f32 %v369, %v411
  %v413 = vpop.f32.mrf.mxu0
  %v414 = vadd.f32 %v371, %v413
  %415 = vmatmul.bf16.gmra.mxu0 %v297
  %v416 = vpop.f32.mrf.mxu0
  %v417 = vadd.f32 %v374, %v416
  %v418 = vpop.f32.mrf.mxu0
  %v419 = vadd.f32 %v376, %v418
  %420 = vmatmul.bf16.gmra.mxu0 %v300
  %v421 = vpop.f32.mrf.mxu0
  %v422 = vadd.f32 %v379, %v421
  %v423 = vpop.f32.mrf.mxu0
  %v424 = vadd.f32 %v381, %v423
  %425 = vmatmul.bf16.gmra.mxu0 %v303
  %v426 = vpop.f32.mrf.mxu0
  %v427 = vadd.f32 %v384, %v426
  %v428 = vpop.f32.mrf.mxu0
  %v429 = vadd.f32 %v386, %v428
  %430 = vmatmul.bf16.gmra.mxu0 %v306
  %v431 = vpop.f32.mrf.mxu0
  %v432 = vadd.f32 %v389, %v431
  %v433 = vpop.f32.mrf.mxu0
  %v434 = vadd.f32 %v391, %v433
  %435 = vmatmul.bf16.gmra.mxu0 %v309
  %v436 = vpop.f32.mrf.mxu0
  %v437 = vadd.f32 %v394, %v436
  %v438 = vpop.f32.mrf.mxu0
  %439 = vdwg.mxu0
  %v440 = vmax.f32 %v407, 0.0
  %v441 = vmax.f32 %v409, 0.0
  %v442 = vmax.f32 %v412, 0.0
  %v443 = vmax.f32 %v414, 0.0
  %v444 = vmax.f32 %v417, 0.0
  %v445 = vmax.f32 %v419, 0.0
  %v446 = vmax.f32 %v422, 0.0
  %v447 = vmax.f32 %v424, 0.0
  %v448 = vmax.f32 %v427, 0.0
  %v449 = vmax.f32 %v429, 0.0
  %v450 = vmax.f32 %v432, 0.0
  %v451 = vmax.f32 %v434, 0.0
  %v452 = vmax.f32 %v437, 0.0
  %v453 = vpack.c.bf16 %v440, %v440
  %v454 = vpack.c.bf16 %v441, %v441
  %v455 = vpack.c.bf16 %v442, %v442
  %v456 = vpack.c.bf16 %v443, %v443
  %v457 = vpack.c.bf16 %v444, %v444
  %v458 = vpack.c.bf16 %v445, %v445
  %v459 = vpack.c.bf16 %v446, %v446
  %v460 = vpack.c.bf16 %v447, %v447
  %v461 = vpack.c.bf16 %v448, %v448
  %v462 = vpack.c.bf16 %v449, %v449
  %v463 = vpack.c.bf16 %v450, %v450
  %v464 = vpack.c.bf16 %v451, %v451
  %v465 = vpack.c.bf16 %v452, %v452
  %vm466 = vcmask 257024
  %467 = vst.msk [vmem:[%s3] sm:$0xf] %vm466, %v453
  %468 = vst.msk [vmem:[%s3 + $0x4] sm:$0xf] %vm466, %v454
  %469 = vst.msk [vmem:[%s3 + $0x8] sm:$0xf] %vm466, %v455
  %470 = vst.msk [vmem:[%s3 + $0xc] sm:$0xf] %vm466, %v456
  %471 = vst.msk [vmem:[%s3 + $0x10] sm:$0xf] %vm466, %v457
  %472 = vst.msk [vmem:[%s3 + $0x14] sm:$0xf] %vm466, %v458
  %473 = vst.msk [vmem:[%s3 + $0x18] sm:$0xf] %vm466, %v459
  %474 = vst.msk [vmem:[%s3 + $0x1c] sm:$0xf] %vm466, %v460
  %475 = vst.msk [vmem:[%s3 + $0x20] sm:$0xf] %vm466, %v461
  %476 = vst.msk [vmem:[%s3 + $0x24] sm:$0xf] %vm466, %v462
  %477 = vst.msk [vmem:[%s3 + $0x28] sm:$0xf] %vm466, %v463
  %478 = vst.msk [vmem:[%s3 + $0x2c] sm:$0xf] %vm466, %v464
  %vm479 = vcmask 253952
  %480 = vst.msk [vmem:[%s3 + $0x30] sm:$0x1] %vm479, %v465
  // Predicated region
  $region14: #{dqn_forward.6} parent=0 // pred_check
    _
  $region15: #{dqn_forward.6} parent=0 // pred_check_branch
    %482 = sbr.rel (0) target = $region17
  $region16: #{dqn_forward.6} parent=0 // pred_region
    _
  $region17: #{dqn_forward.6} parent=0 // pred_fallthru
    _
  // Predicated region
  $region18: #{dqn_forward.6} parent=0 // pred_check
    _
  $region19: #{dqn_forward.6} parent=0 // pred_check_branch
    %484 = sbr.rel (0) target = $region21
  $region20: #{dqn_forward.6} parent=0 // pred_region
    _
  $region21: #{dqn_forward.6} parent=0 // pred_fallthru
    _

// kernel: dqn_forward.7
$region0: #{dqn_forward.7}
  #allocation0 [shape = 'u32[]', space=smem, size = 0x4, offset = 0x4, fixed_abs, tag = 'smem constant byte address 0x4 - core index']
  #allocation1 [shape = 'u32[72,128]{1,0:T(1,128)}', space=vmem, size = 0x9000, scoped, tag = 'internal scratch']
  %s0 = inlined_call_operand.vmem [shape: bf16[2,1568], index: 0, kind: input, shape index: {}]
  %s1 = inlined_call_operand.vmem [shape: bf16[1568,512], index: 1, kind: input, shape index: {}]
  %s2 = inlined_call_operand.vmem [shape: f32[1,512], index: 2, kind: input, shape index: {}]
  %s3 = inlined_call_operand.vmem [shape: bf16[512,128], index: 3, kind: input, shape index: {}]
  %s4 = inlined_call_operand.vmem [shape: f32[1,128], index: 4, kind: input, shape index: {}]
  %s5 = inlined_call_operand.hbm [shape: f32[2,128], index: 5, kind: output, shape index: {}]
  %s6 = sld [smem:[#allocation0]]
  $region98: #{dqn_forward.7} parent=0
    _
  %s8 = ssub.s32 1, %s6
  %s9 = scalar_select 0, %s8, %s6
  $region1: #{dqn_forward.7} parent=0
    #allocation2 [shape = 'u8[802816]{0}', space=vmem, size = 0xc4000, scoped, tag = 'input window, operand 1']
    #allocation3 [shape = 'u8[1024]{0}', space=vmem, size = 0x400, scoped, tag = 'output window, operand 0, single buffered']
    #allocation4 [shape = 's32[2]{0}', space=sflag, size = 0x8, scoped, tag = 'scoped memory for dqn_forward.7']
    %10 = vsyncpa [#allocation4], 0
    loop: start=0, step=1, limit=6
    $region2: #{dqn_forward.7} parent=1 // loop_pre_header
      _
    $region3: #{dqn_forward.7} parent=1 // loop_header
      %s12 = sphi 0, %s16
      %p13 = scmp.ge.s32.totalorder %s12, 6
      %s20 = sphi 0, %s20
      %s22 = sphi 0, %s20
      %s23 = sphi 0, %s22
      %s37 = sphi 0, %s23
      %s43 = sphi 0, %s45
      %s46 = sphi 0, %s43
      %s47 = sphi 0, %s46
      %s63 = sphi 0, %s47
      %s69 = sphi 0, %s71
      %s72 = sphi 0, %s69
      %s73 = sphi 0, %s72
      %s89 = sphi 0, %s73
      %s95 = sphi 0, %s97
      %s98 = sphi 0, %s95
      %s99 = sphi 0, %s98
      %s115 = sphi 0, %s99
      %s119 = sphi 0, %s119
      %s121 = sphi 0, %s119
      %s122 = sphi 0, %s121
      %s136 = sphi 0, %s122
      %s140 = sphi 0, %s140
      %s142 = sphi 0, %s140
      %s143 = sphi 0, %s142
      %s157 = sphi 0, %s143
    $region4: #{dqn_forward.7} parent=1 // loop_header_branch
      %15 = sbr.rel (%p13) target = $region8
    $region5: #{dqn_forward.7} parent=1 // loop_body
      %s17 = ssub.s32 %s12, 1
      %s18 = ssub.s32 %s12, 2
      %s19 = sadd.s32 %s12, 1
      %s21 = sadd.s32 %s20, 1
      %p24 = scmp.eq.s32.totalorder %s12, 3
      %p25 = scmp.ne.s32.totalorder %s20, %s22
      %p26 = scmp.eq.s32.totalorder %s12, 0
      %p27 = por %p25, %p26
      %p28 = scmp.ne.s32.totalorder %s20, %s22
      %p29 = scmp.eq.s32.totalorder %s17, 3
      %p30 = por %p28, %p29
      %p31 = scmp.ne.s32.totalorder %s22, %s23
      %p32 = scmp.eq.s32.totalorder %s17, 0
      %p33 = por %p31, %p32
      %p34 = scmp.ne.s32.totalorder %s22, %s23
      %p35 = scmp.eq.s32.totalorder %s18, 3
      %p36 = por %p34, %p35
      %p38 = scmp.ne.s32.totalorder %s23, %s37
      %p39 = scmp.eq.s32.totalorder %s18, 0
      %p40 = por %p38, %p39
      %s41 = ssub.s32 %s12, %s19
      %p42 = scmp.eq.s32.totalorder %s41, 0
      %s44 = sadd.s32 %s43, 1
      %s45 = scalar_select %p42, %s43, %s44
      %p48 = pneg %p42
      %p49 = scmp.eq.s32.totalorder %s12, 3
      %p50 = por %p48, %p49
      %p51 = scmp.ne.s32.totalorder %s43, %s46
      %p52 = scmp.eq.s32.totalorder %s12, 0
      %p53 = por %p51, %p52
      %p54 = scmp.ne.s32.totalorder %s43, %s46
      %p55 = scmp.eq.s32.totalorder %s17, 3
      %p56 = por %p54, %p55
      %p57 = scmp.ne.s32.totalorder %s46, %s47
      %p58 = scmp.eq.s32.totalorder %s17, 0
      %p59 = por %p57, %p58
      %p60 = scmp.ne.s32.totalorder %s46, %s47
      %p61 = scmp.eq.s32.totalorder %s18, 3
      %p62 = por %p60, %p61
      %p64 = scmp.ne.s32.totalorder %s47, %s63
      %p65 = scmp.eq.s32.totalorder %s18, 0
      %p66 = por %p64, %p65
      %s67 = ssub.s32 %s12, %s19
      %p68 = scmp.eq.s32.totalorder %s67, 0
      %s70 = sadd.s32 %s69, 1
      %s71 = scalar_select %p68, %s69, %s70
      %p74 = pneg %p68
      %p75 = scmp.eq.s32.totalorder %s12, 3
      %p76 = por %p74, %p75
      %p77 = scmp.ne.s32.totalorder %s69, %s72
      %p78 = scmp.eq.s32.totalorder %s12, 0
      %p79 = por %p77, %p78
      %p80 = scmp.ne.s32.totalorder %s69, %s72
      %p81 = scmp.eq.s32.totalorder %s17, 3
      %p82 = por %p80, %p81
      %p83 = scmp.ne.s32.totalorder %s72, %s73
      %p84 = scmp.eq.s32.totalorder %s17, 0
      %p85 = por %p83, %p84
      %p86 = scmp.ne.s32.totalorder %s72, %s73
      %p87 = scmp.eq.s32.totalorder %s18, 3
      %p88 = por %p86, %p87
      %p90 = scmp.ne.s32.totalorder %s73, %s89
      %p91 = scmp.eq.s32.totalorder %s18, 0
      %p92 = por %p90, %p91
      %s93 = ssub.s32 %s12, %s19
      %p94 = scmp.eq.s32.totalorder %s93, 0
      %s96 = sadd.s32 %s95, 1
      %s97 = scalar_select %p94, %s95, %s96
      %p100 = pneg %p94
      %p101 = scmp.eq.s32.totalorder %s12, 3
      %p102 = por %p100, %p101
      %p103 = scmp.ne.s32.totalorder %s95, %s98
      %p104 = scmp.eq.s32.totalorder %s12, 0
      %p105 = por %p103, %p104
      %p106 = scmp.ne.s32.totalorder %s95, %s98
      %p107 = scmp.eq.s32.totalorder %s17, 3
      %p108 = por %p106, %p107
      %p109 = scmp.ne.s32.totalorder %s98, %s99
      %p110 = scmp.eq.s32.totalorder %s17, 0
      %p111 = por %p109, %p110
      %p112 = scmp.ne.s32.totalorder %s98, %s99
      %p113 = scmp.eq.s32.totalorder %s18, 3
      %p114 = por %p112, %p113
      %p116 = scmp.ne.s32.totalorder %s99, %s115
      %p117 = scmp.eq.s32.totalorder %s18, 0
      %p118 = por %p116, %p117
      %s120 = sadd.s32 %s119, 1
      %p123 = scmp.eq.s32.totalorder %s12, 3
      %p124 = scmp.ne.s32.totalorder %s119, %s121
      %p125 = scmp.eq.s32.totalorder %s12, 0
      %p126 = por %p124, %p125
      %p127 = scmp.ne.s32.totalorder %s119, %s121
      %p128 = scmp.eq.s32.totalorder %s17, 3
      %p129 = por %p127, %p128
      %p130 = scmp.ne.s32.totalorder %s121, %s122
      %p131 = scmp.eq.s32.totalorder %s17, 0
      %p132 = por %p130, %p131
      %p133 = scmp.ne.s32.totalorder %s121, %s122
      %p134 = scmp.eq.s32.totalorder %s18, 3
      %p135 = por %p133, %p134
      %p137 = scmp.ne.s32.totalorder %s122, %s136
      %p138 = scmp.eq.s32.totalorder %s18, 0
      %p139 = por %p137, %p138
      %s141 = sadd.s32 %s140, 1
      %p144 = scmp.eq.s32.totalorder %s12, 3
      %p145 = scmp.ne.s32.totalorder %s140, %s142
      %p146 = scmp.eq.s32.totalorder %s12, 0
      %p147 = por %p145, %p146
      %p148 = scmp.ne.s32.totalorder %s140, %s142
      %p149 = scmp.eq.s32.totalorder %s17, 3
      %p150 = por %p148, %p149
      %p151 = scmp.ne.s32.totalorder %s142, %s143
      %p152 = scmp.eq.s32.totalorder %s17, 0
      %p153 = por %p151, %p152
      %p154 = scmp.ne.s32.totalorder %s142, %s143
      %p155 = scmp.eq.s32.totalorder %s18, 3
      %p156 = por %p154, %p155
      %p158 = scmp.ne.s32.totalorder %s143, %s157
      %p159 = scmp.eq.s32.totalorder %s18, 0
      %p160 = por %p158, %p159
      %p161 = scmp.le.s32.totalorder 1, %s12
      %p162 = scmp.lt.s32.totalorder %s12, 5
      %p163 = pnand %p161, %p162
      %p164 = pneg %p163
      // Predicated region
      $region9: #{dqn_forward.7} parent=5 // pred_check
        _
      $region10: #{dqn_forward.7} parent=5 // pred_check_branch
        %166 = sbr.rel (%p163) target = $region12
      $region11: #{dqn_forward.7} parent=5 // pred_region
        %s167 = ssub.s32 %s12, 1
        // Predicated region
        $region13: #{dqn_forward.7} parent=11 // pred_check
          %p168 = pneg %p33
        $region14: #{dqn_forward.7} parent=11 // pred_check_branch
          %170 = sbr.rel (%p168) target = $region16
        $region15: #{dqn_forward.7} parent=11 // pred_region
          _
        $region16: #{dqn_forward.7} parent=11 // pred_fallthru
          _
        // Predicated region
        $region17: #{dqn_forward.7} parent=11 // pred_check
          %p171 = pneg %p132
        $region18: #{dqn_forward.7} parent=11 // pred_check_branch
          %173 = sbr.rel (%p171) target = $region20
        $region19: #{dqn_forward.7} parent=11 // pred_region
          _
        $region20: #{dqn_forward.7} parent=11 // pred_fallthru
          _
      $region12: #{dqn_forward.7} parent=5 // pred_fallthru
        _
      %p174 = scmp.lt.s32.totalorder %s12, 4
      // Predicated region
      $region21: #{dqn_forward.7} parent=5 // pred_check
        %p175 = pneg %p174
      $region22: #{dqn_forward.7} parent=5 // pred_check_branch
        %177 = sbr.rel (%p175) target = $region24
      $region23: #{dqn_forward.7} parent=5 // pred_region
        // Predicated region
        $region25: #{dqn_forward.7} parent=23 // pred_check
          %p178 = pneg %p53
        $region26: #{dqn_forward.7} parent=23 // pred_check_branch
          %180 = sbr.rel (%p178) target = $region28
        $region27: #{dqn_forward.7} parent=23 // pred_region
          %s181 = sand.u32 %s43, 1
          %s182 = sand.u32 %s43, 1
          %s183 = smul.addr %s182, 784
          %s184 = scalar_lea.vmem [#allocation2], %s183
          %s185 = smul.addr %s12, 4
          %s186 = scalar_lea.vmem %s1, %s185
          // Predicated region
          $region29: #{dqn_forward.7} parent=27 // pred_check
            _
          $region30: #{dqn_forward.7} parent=27 // pred_check_branch
            %188 = sbr.rel (0) target = $region32
          $region31: #{dqn_forward.7} parent=27 // pred_region
            // Predicated region
            $region33: #{dqn_forward.7} parent=31 // pred_check
              _
            $region34: #{dqn_forward.7} parent=31 // pred_check_branch
              %190 = sbr.rel target = $region36
            $region35: #{dqn_forward.7} parent=31 // pred_region
              // Predicated region
              $region48: #{dqn_forward.7} parent=35 // pred_check
                _
              $region49: #{dqn_forward.7} parent=35 // pred_check_branch
                %596 = sbr.rel (0) target = $region51
              $region50: #{dqn_forward.7} parent=35 // pred_region
                loop: start=0, step=1, limit=1
                $region52: #{dqn_forward.7} parent=50 // loop_pre_header
                  _
                $region53: #{dqn_forward.7} parent=50 // loop_header
                  %s598 = sphi 0, %s602
                  %p599 = scmp.ge.s32.totalorder %s598, 1
                  %s603 = sphi %s186, %s186
                  %s604 = sphi %s184, %s184
                $region54: #{dqn_forward.7} parent=50 // loop_header_branch
                  %601 = sbr.rel (%p599) target = $region58
                $region55: #{dqn_forward.7} parent=50 // loop_body
                  _
                $region56: #{dqn_forward.7} parent=50 // loop_footer
                  %s602 = sadd.s32 1, %s598
                $region57: #{dqn_forward.7} parent=50 // loop_footer_branch
                  %597 = sbr.rel target = $region53
                $region58: #{dqn_forward.7} parent=50 // loop_exit
                  _
                %s606 = ssub.s32 16, 1
                loop: start=0, step=1, limit=1
                $region59: #{dqn_forward.7} parent=50 // loop_pre_header
                  _
                $region60: #{dqn_forward.7} parent=50 // loop_header
                  %s608 = sphi 0, %s612
                  %p609 = scmp.ge.s32.totalorder %s608, 1
                  %s613 = sphi %s186, %s186
                  %s614 = sphi %s184, %s184
                $region61: #{dqn_forward.7} parent=50 // loop_header_branch
                  %611 = sbr.rel (%p609) target = $region65
                $region62: #{dqn_forward.7} parent=50 // loop_body
                  %v615 = vld [vmem:[%s613] sm:%s606]
                  %616 = vst [vmem:[%s614] sm:%s606] %v615
                  %v617 = vld [vmem:[%s613 + $0x10] sm:%s606]
                  %618 = vst [vmem:[%s614 + $0x4] sm:%s606] %v617
                  %v619 = vld [vmem:[%s613 + $0x20] sm:%s606]
                  %620 = vst [vmem:[%s614 + $0x8] sm:%s606] %v619
                  %v621 = vld [vmem:[%s613 + $0x30] sm:%s606]
                  %622 = vst [vmem:[%s614 + $0xc] sm:%s606] %v621
                  %v623 = vld [vmem:[%s613 + $0x40] sm:%s606]
                  %624 = vst [vmem:[%s614 + $0x10] sm:%s606] %v623
                  %v625 = vld [vmem:[%s613 + $0x50] sm:%s606]
                  %626 = vst [vmem:[%s614 + $0x14] sm:%s606] %v625
                  %v627 = vld [vmem:[%s613 + $0x60] sm:%s606]
                  %628 = vst [vmem:[%s614 + $0x18] sm:%s606] %v627
                  %v629 = vld [vmem:[%s613 + $0x70] sm:%s606]
                  %630 = vst [vmem:[%s614 + $0x1c] sm:%s606] %v629
                  %v631 = vld [vmem:[%s613 + $0x80] sm:%s606]
                  %632 = vst [vmem:[%s614 + $0x20] sm:%s606] %v631
                  %v633 = vld [vmem:[%s613 + $0x90] sm:%s606]
                  %634 = vst [vmem:[%s614 + $0x24] sm:%s606] %v633
                  %v635 = vld [vmem:[%s613 + $0xa0] sm:%s606]
                  %636 = vst [vmem:[%s614 + $0x28] sm:%s606] %v635
                  %v637 = vld [vmem:[%s613 + $0xb0] sm:%s606]
                  %638 = vst [vmem:[%s614 + $0x2c] sm:%s606] %v637
                  %v639 = vld [vmem:[%s613 + $0xc0] sm:%s606]
                  %640 = vst [vmem:[%s614 + $0x30] sm:%s606] %v639
                  %v641 = vld [vmem:[%s613 + $0xd0] sm:%s606]
                  %642 = vst [vmem:[%s614 + $0x34] sm:%s606] %v641
                  %v643 = vld [vmem:[%s613 + $0xe0] sm:%s606]
                  %644 = vst [vmem:[%s614 + $0x38] sm:%s606] %v643
                  %v645 = vld [vmem:[%s613 + $0xf0] sm:%s606]
                  %646 = vst [vmem:[%s614 + $0x3c] sm:%s606] %v645
                  %v647 = vld [vmem:[%s613 + $0x100] sm:%s606]
                  %648 = vst [vmem:[%s614 + $0x40] sm:%s606] %v647
                  %v649 = vld [vmem:[%s613 + $0x110] sm:%s606]
                  %650 = vst [vmem:[%s614 + $0x44] sm:%s606] %v649
                  %v651 = vld [vmem:[%s613 + $0x120] sm:%s606]
                  %652 = vst [vmem:[%s614 + $0x48] sm:%s606] %v651
                  %v653 = vld [vmem:[%s613 + $0x130] sm:%s606]
                  %654 = vst [vmem:[%s614 + $0x4c] sm:%s606] %v653
                  %v655 = vld [vmem:[%s613 + $0x140] sm:%s606]
                  %656 = vst [vmem:[%s614 + $0x50] sm:%s606] %v655
                  %v657 = vld [vmem:[%s613 + $0x150] sm:%s606]
                  %658 = vst [vmem:[%s614 + $0x54] sm:%s606] %v657
                  %v659 = vld [vmem:[%s613 + $0x160] sm:%s606]
                  %660 = vst [vmem:[%s614 + $0x58] sm:%s606] %v659
                  %v661 = vld [vmem:[%s613 + $0x170] sm:%s606]
                  %662 = vst [vmem:[%s614 + $0x5c] sm:%s606] %v661
                  %v663 = vld [vmem:[%s613 + $0x180] sm:%s606]
                  %664 = vst [vmem:[%s614 + $0x60] sm:%s606] %v663
                  %v665 = vld [vmem:[%s613 + $0x190] sm:%s606]
                  %666 = vst [vmem:[%s614 + $0x64] sm:%s606] %v665
                  %v667 = vld [vmem:[%s613 + $0x1a0] sm:%s606]
                  %668 = vst [vmem:[%s614 + $0x68] sm:%s606] %v667
                  %v669 = vld [vmem:[%s613 + $0x1b0] sm:%s606]
                  %670 = vst [vmem:[%s614 + $0x6c] sm:%s606] %v669
                  %v671 = vld [vmem:[%s613 + $0x1c0] sm:%s606]
                  %672 = vst [vmem:[%s614 + $0x70] sm:%s606] %v671
                  %v673 = vld [vmem:[%s613 + $0x1d0] sm:%s606]
                  %674 = vst [vmem:[%s614 + $0x74] sm:%s606] %v673
                  %v675 = vld [vmem:[%s613 + $0x1e0] sm:%s606]
                  %676 = vst [vmem:[%s614 + $0x78] sm:%s606] %v675
                  %v677 = vld [vmem:[%s613 + $0x1f0] sm:%s606]
                  %678 = vst [vmem:[%s614 + $0x7c] sm:%s606] %v677
                  %v679 = vld [vmem:[%s613 + $0x200] sm:%s606]
                  %680 = vst [vmem:[%s614 + $0x80] sm:%s606] %v679
                  %v681 = vld [vmem:[%s613 + $0x210] sm:%s606]
                  %682 = vst [vmem:[%s614 + $0x84] sm:%s606] %v681
                  %v683 = vld [vmem:[%s613 + $0x220] sm:%s606]
                  %684 = vst [vmem:[%s614 + $0x88] sm:%s606] %v683
                  %v685 = vld [vmem:[%s613 + $0x230] sm:%s606]
                  %686 = vst [vmem:[%s614 + $0x8c] sm:%s606] %v685
                  %v687 = vld [vmem:[%s613 + $0x240] sm:%s606]
                  %688 = vst [vmem:[%s614 + $0x90] sm:%s606] %v687
                  %v689 = vld [vmem:[%s613 + $0x250] sm:%s606]
                  %690 = vst [vmem:[%s614 + $0x94] sm:%s606] %v689
                  %v691 = vld [vmem:[%s613 + $0x260] sm:%s606]
                  %692 = vst [vmem:[%s614 + $0x98] sm:%s606] %v691
                  %v693 = vld [vmem:[%s613 + $0x270] sm:%s606]
                  %694 = vst [vmem:[%s614 + $0x9c] sm:%s606] %v693
                  %v695 = vld [vmem:[%s613 + $0x280] sm:%s606]
                  %696 = vst [vmem:[%s614 + $0xa0] sm:%s606] %v695
                  %v697 = vld [vmem:[%s613 + $0x290] sm:%s606]
                  %698 = vst [vmem:[%s614 + $0xa4] sm:%s606] %v697
                  %v699 = vld [vmem:[%s613 + $0x2a0] sm:%s606]
                  %700 = vst [vmem:[%s614 + $0xa8] sm:%s606] %v699
                  %v701 = vld [vmem:[%s613 + $0x2b0] sm:%s606]
                  %702 = vst [vmem:[%s614 + $0xac] sm:%s606] %v701
                  %v703 = vld [vmem:[%s613 + $0x2c0] sm:%s606]
                  %704 = vst [vmem:[%s614 + $0xb0] sm:%s606] %v703
                  %v705 = vld [vmem:[%s613 + $0x2d0] sm:%s606]
                  %706 = vst [vmem:[%s614 + $0xb4] sm:%s606] %v705
                  %v707 = vld [vmem:[%s613 + $0x2e0] sm:%s606]
                  %708 = vst [vmem:[%s614 + $0xb8] sm:%s606] %v707
                  %v709 = vld [vmem:[%s613 + $0x2f0] sm:%s606]
                  %710 = vst [vmem:[%s614 + $0xbc] sm:%s606] %v709
                  %v711 = vld [vmem:[%s613 + $0x300] sm:%s606]
                  %712 = vst [vmem:[%s614 + $0xc0] sm:%s606] %v711
                  %v713 = vld [vmem:[%s613 + $0x310] sm:%s606]
                  %714 = vst [vmem:[%s614 + $0xc4] sm:%s606] %v713
                  %v715 = vld [vmem:[%s613 + $0x320] sm:%s606]
                  %716 = vst [vmem:[%s614 + $0xc8] sm:%s606] %v715
                  %v717 = vld [vmem:[%s613 + $0x330] sm:%s606]
                  %718 = vst [vmem:[%s614 + $0xcc] sm:%s606] %v717
                  %v719 = vld [vmem:[%s613 + $0x340] sm:%s606]
                  %720 = vst [vmem:[%s614 + $0xd0] sm:%s606] %v719
                  %v721 = vld [vmem:[%s613 + $0x350] sm:%s606]
                  %722 = vst [vmem:[%s614 + $0xd4] sm:%s606] %v721
                  %v723 = vld [vmem:[%s613 + $0x360] sm:%s606]
                  %724 = vst [vmem:[%s614 + $0xd8] sm:%s606] %v723
                  %v725 = vld [vmem:[%s613 + $0x370] sm:%s606]
                  %726 = vst [vmem:[%s614 + $0xdc] sm:%s606] %v725
                  %v727 = vld [vmem:[%s613 + $0x380] sm:%s606]
                  %728 = vst [vmem:[%s614 + $0xe0] sm:%s606] %v727
                  %v729 = vld [vmem:[%s613 + $0x390] sm:%s606]
                  %730 = vst [vmem:[%s614 + $0xe4] sm:%s606] %v729
                  %v731 = vld [vmem:[%s613 + $0x3a0] sm:%s606]
                  %732 = vst [vmem:[%s614 + $0xe8] sm:%s606] %v731
                  %v733 = vld [vmem:[%s613 + $0x3b0] sm:%s606]
                  %734 = vst [vmem:[%s614 + $0xec] sm:%s606] %v733
                  %v735 = vld [vmem:[%s613 + $0x3c0] sm:%s606]
                  %736 = vst [vmem:[%s614 + $0xf0] sm:%s606] %v735
                  %v737 = vld [vmem:[%s613 + $0x3d0] sm:%s606]
                  %738 = vst [vmem:[%s614 + $0xf4] sm:%s606] %v737
                  %v739 = vld [vmem:[%s613 + $0x3e0] sm:%s606]
                  %740 = vst [vmem:[%s614 + $0xf8] sm:%s606] %v739
                  %v741 = vld [vmem:[%s613 + $0x3f0] sm:%s606]
                  %742 = vst [vmem:[%s614 + $0xfc] sm:%s606] %v741
                  %v743 = vld [vmem:[%s613 + $0x400] sm:%s606]
                  %744 = vst [vmem:[%s614 + $0x100] sm:%s606] %v743
                  %v745 = vld [vmem:[%s613 + $0x410] sm:%s606]
                  %746 = vst [vmem:[%s614 + $0x104] sm:%s606] %v745
                  %v747 = vld [vmem:[%s613 + $0x420] sm:%s606]
                  %748 = vst [vmem:[%s614 + $0x108] sm:%s606] %v747
                  %v749 = vld [vmem:[%s613 + $0x430] sm:%s606]
                  %750 = vst [vmem:[%s614 + $0x10c] sm:%s606] %v749
                  %v751 = vld [vmem:[%s613 + $0x440] sm:%s606]
                  %752 = vst [vmem:[%s614 + $0x110] sm:%s606] %v751
                  %v753 = vld [vmem:[%s613 + $0x450] sm:%s606]
                  %754 = vst [vmem:[%s614 + $0x114] sm:%s606] %v753
                  %v755 = vld [vmem:[%s613 + $0x460] sm:%s606]
                  %756 = vst [vmem:[%s614 + $0x118] sm:%s606] %v755
                  %v757 = vld [vmem:[%s613 + $0x470] sm:%s606]
                  %758 = vst [vmem:[%s614 + $0x11c] sm:%s606] %v757
                  %v759 = vld [vmem:[%s613 + $0x480] sm:%s606]
                  %760 = vst [vmem:[%s614 + $0x120] sm:%s606] %v759
                  %v761 = vld [vmem:[%s613 + $0x490] sm:%s606]
                  %762 = vst [vmem:[%s614 + $0x124] sm:%s606] %v761
                  %v763 = vld [vmem:[%s613 + $0x4a0] sm:%s606]
                  %764 = vst [vmem:[%s614 + $0x128] sm:%s606] %v763
                  %v765 = vld [vmem:[%s613 + $0x4b0] sm:%s606]
                  %766 = vst [vmem:[%s614 + $0x12c] sm:%s606] %v765
                  %v767 = vld [vmem:[%s613 + $0x4c0] sm:%s606]
                  %768 = vst [vmem:[%s614 + $0x130] sm:%s606] %v767
                  %v769 = vld [vmem:[%s613 + $0x4d0] sm:%s606]
                  %770 = vst [vmem:[%s614 + $0x134] sm:%s606] %v769
                  %v771 = vld [vmem:[%s613 + $0x4e0] sm:%s606]
                  %772 = vst [vmem:[%s614 + $0x138] sm:%s606] %v771
                  %v773 = vld [vmem:[%s613 + $0x4f0] sm:%s606]
                  %774 = vst [vmem:[%s614 + $0x13c] sm:%s606] %v773
                  %v775 = vld [vmem:[%s613 + $0x500] sm:%s606]
                  %776 = vst [vmem:[%s614 + $0x140] sm:%s606] %v775
                  %v777 = vld [vmem:[%s613 + $0x510] sm:%s606]
                  %778 = vst [vmem:[%s614 + $0x144] sm:%s606] %v777
                  %v779 = vld [vmem:[%s613 + $0x520] sm:%s606]
                  %780 = vst [vmem:[%s614 + $0x148] sm:%s606] %v779
                  %v781 = vld [vmem:[%s613 + $0x530] sm:%s606]
                  %782 = vst [vmem:[%s614 + $0x14c] sm:%s606] %v781
                  %v783 = vld [vmem:[%s613 + $0x540] sm:%s606]
                  %784 = vst [vmem:[%s614 + $0x150] sm:%s606] %v783
                  %v785 = vld [vmem:[%s613 + $0x550] sm:%s606]
                  %786 = vst [vmem:[%s614 + $0x154] sm:%s606] %v785
                  %v787 = vld [vmem:[%s613 + $0x560] sm:%s606]
                  %788 = vst [vmem:[%s614 + $0x158] sm:%s606] %v787
                  %v789 = vld [vmem:[%s613 + $0x570] sm:%s606]
                  %790 = vst [vmem:[%s614 + $0x15c] sm:%s606] %v789
                  %v791 = vld [vmem:[%s613 + $0x580] sm:%s606]
                  %792 = vst [vmem:[%s614 + $0x160] sm:%s606] %v791
                  %v793 = vld [vmem:[%s613 + $0x590] sm:%s606]
                  %794 = vst [vmem:[%s614 + $0x164] sm:%s606] %v793
                  %v795 = vld [vmem:[%s613 + $0x5a0] sm:%s606]
                  %796 = vst [vmem:[%s614 + $0x168] sm:%s606] %v795
                  %v797 = vld [vmem:[%s613 + $0x5b0] sm:%s606]
                  %798 = vst [vmem:[%s614 + $0x16c] sm:%s606] %v797
                  %v799 = vld [vmem:[%s613 + $0x5c0] sm:%s606]
                  %800 = vst [vmem:[%s614 + $0x170] sm:%s606] %v799
                  %v801 = vld [vmem:[%s613 + $0x5d0] sm:%s606]
                  %802 = vst [vmem:[%s614 + $0x174] sm:%s606] %v801
                  %v803 = vld [vmem:[%s613 + $0x5e0] sm:%s606]
                  %804 = vst [vmem:[%s614 + $0x178] sm:%s606] %v803
                  %v805 = vld [vmem:[%s613 + $0x5f0] sm:%s606]
                  %806 = vst [vmem:[%s614 + $0x17c] sm:%s606] %v805
                  %v807 = vld [vmem:[%s613 + $0x600] sm:%s606]
                  %808 = vst [vmem:[%s614 + $0x180] sm:%s606] %v807
                  %v809 = vld [vmem:[%s613 + $0x610] sm:%s606]
                  %810 = vst [vmem:[%s614 + $0x184] sm:%s606] %v809
                  %v811 = vld [vmem:[%s613 + $0x620] sm:%s606]
                  %812 = vst [vmem:[%s614 + $0x188] sm:%s606] %v811
                  %v813 = vld [vmem:[%s613 + $0x630] sm:%s606]
                  %814 = vst [vmem:[%s614 + $0x18c] sm:%s606] %v813
                  %v815 = vld [vmem:[%s613 + $0x640] sm:%s606]
                  %816 = vst [vmem:[%s614 + $0x190] sm:%s606] %v815
                  %v817 = vld [vmem:[%s613 + $0x650] sm:%s606]
                  %818 = vst [vmem:[%s614 + $0x194] sm:%s606] %v817
                  %v819 = vld [vmem:[%s613 + $0x660] sm:%s606]
                  %820 = vst [vmem:[%s614 + $0x198] sm:%s606] %v819
                  %v821 = vld [vmem:[%s613 + $0x670] sm:%s606]
                  %822 = vst [vmem:[%s614 + $0x19c] sm:%s606] %v821
                  %v823 = vld [vmem:[%s613 + $0x680] sm:%s606]
                  %824 = vst [vmem:[%s614 + $0x1a0] sm:%s606] %v823
                  %v825 = vld [vmem:[%s613 + $0x690] sm:%s606]
                  %826 = vst [vmem:[%s614 + $0x1a4] sm:%s606] %v825
                  %v827 = vld [vmem:[%s613 + $0x6a0] sm:%s606]
                  %828 = vst [vmem:[%s614 + $0x1a8] sm:%s606] %v827
                  %v829 = vld [vmem:[%s613 + $0x6b0] sm:%s606]
                  %830 = vst [vmem:[%s614 + $0x1ac] sm:%s606] %v829
                  %v831 = vld [vmem:[%s613 + $0x6c0] sm:%s606]
                  %832 = vst [vmem:[%s614 + $0x1b0] sm:%s606] %v831
                  %v833 = vld [vmem:[%s613 + $0x6d0] sm:%s606]
                  %834 = vst [vmem:[%s614 + $0x1b4] sm:%s606] %v833
                  %v835 = vld [vmem:[%s613 + $0x6e0] sm:%s606]
                  %836 = vst [vmem:[%s614 + $0x1b8] sm:%s606] %v835
                  %v837 = vld [vmem:[%s613 + $0x6f0] sm:%s606]
                  %838 = vst [vmem:[%s614 + $0x1bc] sm:%s606] %v837
                  %v839 = vld [vmem:[%s613 + $0x700] sm:%s606]
                  %840 = vst [vmem:[%s614 + $0x1c0] sm:%s606] %v839
                  %v841 = vld [vmem:[%s613 + $0x710] sm:%s606]
                  %842 = vst [vmem:[%s614 + $0x1c4] sm:%s606] %v841
                  %v843 = vld [vmem:[%s613 + $0x720] sm:%s606]
                  %844 = vst [vmem:[%s614 + $0x1c8] sm:%s606] %v843
                  %v845 = vld [vmem:[%s613 + $0x730] sm:%s606]
                  %846 = vst [vmem:[%s614 + $0x1cc] sm:%s606] %v845
                  %v847 = vld [vmem:[%s613 + $0x740] sm:%s606]
                  %848 = vst [vmem:[%s614 + $0x1d0] sm:%s606] %v847
                  %v849 = vld [vmem:[%s613 + $0x750] sm:%s606]
                  %850 = vst [vmem:[%s614 + $0x1d4] sm:%s606] %v849
                  %v851 = vld [vmem:[%s613 + $0x760] sm:%s606]
                  %852 = vst [vmem:[%s614 + $0x1d8] sm:%s606] %v851
                  %v853 = vld [vmem:[%s613 + $0x770] sm:%s606]
                  %854 = vst [vmem:[%s614 + $0x1dc] sm:%s606] %v853
                  %v855 = vld [vmem:[%s613 + $0x780] sm:%s606]
                  %856 = vst [vmem:[%s614 + $0x1e0] sm:%s606] %v855
                  %v857 = vld [vmem:[%s613 + $0x790] sm:%s606]
                  %858 = vst [vmem:[%s614 + $0x1e4] sm:%s606] %v857
                  %v859 = vld [vmem:[%s613 + $0x7a0] sm:%s606]
                  %860 = vst [vmem:[%s614 + $0x1e8] sm:%s606] %v859
                  %v861 = vld [vmem:[%s613 + $0x7b0] sm:%s606]
                  %862 = vst [vmem:[%s614 + $0x1ec] sm:%s606] %v861
                  %v863 = vld [vmem:[%s613 + $0x7c0] sm:%s606]
                  %864 = vst [vmem:[%s614 + $0x1f0] sm:%s606] %v863
                  %v865 = vld [vmem:[%s613 + $0x7d0] sm:%s606]
                  %866 = vst [vmem:[%s614 + $0x1f4] sm:%s606] %v865
                  %v867 = vld [vmem:[%s613 + $0x7e0] sm:%s606]
                  %868 = vst [vmem:[%s614 + $0x1f8] sm:%s606] %v867
                  %v869 = vld [vmem:[%s613 + $0x7f0] sm:%s606]
                  %870 = vst [vmem:[%s614 + $0x1fc] sm:%s606] %v869
                  %v871 = vld [vmem:[%s613 + $0x800] sm:%s606]
                  %872 = vst [vmem:[%s614 + $0x200] sm:%s606] %v871
                  %v873 = vld [vmem:[%s613 + $0x810] sm:%s606]
                  %874 = vst [vmem:[%s614 + $0x204] sm:%s606] %v873
                  %v875 = vld [vmem:[%s613 + $0x820] sm:%s606]
                  %876 = vst [vmem:[%s614 + $0x208] sm:%s606] %v875
                  %v877 = vld [vmem:[%s613 + $0x830] sm:%s606]
                  %878 = vst [vmem:[%s614 + $0x20c] sm:%s606] %v877
                  %v879 = vld [vmem:[%s613 + $0x840] sm:%s606]
                  %880 = vst [vmem:[%s614 + $0x210] sm:%s606] %v879
                  %v881 = vld [vmem:[%s613 + $0x850] sm:%s606]
                  %882 = vst [vmem:[%s614 + $0x214] sm:%s606] %v881
                  %v883 = vld [vmem:[%s613 + $0x860] sm:%s606]
                  %884 = vst [vmem:[%s614 + $0x218] sm:%s606] %v883
                  %v885 = vld [vmem:[%s613 + $0x870] sm:%s606]
                  %886 = vst [vmem:[%s614 + $0x21c] sm:%s606] %v885
                  %v887 = vld [vmem:[%s613 + $0x880] sm:%s606]
                  %888 = vst [vmem:[%s614 + $0x220] sm:%s606] %v887
                  %v889 = vld [vmem:[%s613 + $0x890] sm:%s606]
                  %890 = vst [vmem:[%s614 + $0x224] sm:%s606] %v889
                  %v891 = vld [vmem:[%s613 + $0x8a0] sm:%s606]
                  %892 = vst [vmem:[%s614 + $0x228] sm:%s606] %v891
                  %v893 = vld [vmem:[%s613 + $0x8b0] sm:%s606]
                  %894 = vst [vmem:[%s614 + $0x22c] sm:%s606] %v893
                  %v895 = vld [vmem:[%s613 + $0x8c0] sm:%s606]
                  %896 = vst [vmem:[%s614 + $0x230] sm:%s606] %v895
                  %v897 = vld [vmem:[%s613 + $0x8d0] sm:%s606]
                  %898 = vst [vmem:[%s614 + $0x234] sm:%s606] %v897
                  %v899 = vld [vmem:[%s613 + $0x8e0] sm:%s606]
                  %900 = vst [vmem:[%s614 + $0x238] sm:%s606] %v899
                  %v901 = vld [vmem:[%s613 + $0x8f0] sm:%s606]
                  %902 = vst [vmem:[%s614 + $0x23c] sm:%s606] %v901
                  %v903 = vld [vmem:[%s613 + $0x900] sm:%s606]
                  %904 = vst [vmem:[%s614 + $0x240] sm:%s606] %v903
                  %v905 = vld [vmem:[%s613 + $0x910] sm:%s606]
                  %906 = vst [vmem:[%s614 + $0x244] sm:%s606] %v905
                  %v907 = vld [vmem:[%s613 + $0x920] sm:%s606]
                  %908 = vst [vmem:[%s614 + $0x248] sm:%s606] %v907
                  %v909 = vld [vmem:[%s613 + $0x930] sm:%s606]
                  %910 = vst [vmem:[%s614 + $0x24c] sm:%s606] %v909
                  %v911 = vld [vmem:[%s613 + $0x940] sm:%s606]
                  %912 = vst [vmem:[%s614 + $0x250] sm:%s606] %v911
                  %v913 = vld [vmem:[%s613 + $0x950] sm:%s606]
                  %914 = vst [vmem:[%s614 + $0x254] sm:%s606] %v913
                  %v915 = vld [vmem:[%s613 + $0x960] sm:%s606]
                  %916 = vst [vmem:[%s614 + $0x258] sm:%s606] %v915
                  %v917 = vld [vmem:[%s613 + $0x970] sm:%s606]
                  %918 = vst [vmem:[%s614 + $0x25c] sm:%s606] %v917
                  %v919 = vld [vmem:[%s613 + $0x980] sm:%s606]
                  %920 = vst [vmem:[%s614 + $0x260] sm:%s606] %v919
                  %v921 = vld [vmem:[%s613 + $0x990] sm:%s606]
                  %922 = vst [vmem:[%s614 + $0x264] sm:%s606] %v921
                  %v923 = vld [vmem:[%s613 + $0x9a0] sm:%s606]
                  %924 = vst [vmem:[%s614 + $0x268] sm:%s606] %v923
                  %v925 = vld [vmem:[%s613 + $0x9b0] sm:%s606]
                  %926 = vst [vmem:[%s614 + $0x26c] sm:%s606] %v925
                  %v927 = vld [vmem:[%s613 + $0x9c0] sm:%s606]
                  %928 = vst [vmem:[%s614 + $0x270] sm:%s606] %v927
                  %v929 = vld [vmem:[%s613 + $0x9d0] sm:%s606]
                  %930 = vst [vmem:[%s614 + $0x274] sm:%s606] %v929
                  %v931 = vld [vmem:[%s613 + $0x9e0] sm:%s606]
                  %932 = vst [vmem:[%s614 + $0x278] sm:%s606] %v931
                  %v933 = vld [vmem:[%s613 + $0x9f0] sm:%s606]
                  %934 = vst [vmem:[%s614 + $0x27c] sm:%s606] %v933
                  %v935 = vld [vmem:[%s613 + $0xa00] sm:%s606]
                  %936 = vst [vmem:[%s614 + $0x280] sm:%s606] %v935
                  %v937 = vld [vmem:[%s613 + $0xa10] sm:%s606]
                  %938 = vst [vmem:[%s614 + $0x284] sm:%s606] %v937
                  %v939 = vld [vmem:[%s613 + $0xa20] sm:%s606]
                  %940 = vst [vmem:[%s614 + $0x288] sm:%s606] %v939
                  %v941 = vld [vmem:[%s613 + $0xa30] sm:%s606]
                  %942 = vst [vmem:[%s614 + $0x28c] sm:%s606] %v941
                  %v943 = vld [vmem:[%s613 + $0xa40] sm:%s606]
                  %944 = vst [vmem:[%s614 + $0x290] sm:%s606] %v943
                  %v945 = vld [vmem:[%s613 + $0xa50] sm:%s606]
                  %946 = vst [vmem:[%s614 + $0x294] sm:%s606] %v945
                  %v947 = vld [vmem:[%s613 + $0xa60] sm:%s606]
                  %948 = vst [vmem:[%s614 + $0x298] sm:%s606] %v947
                  %v949 = vld [vmem:[%s613 + $0xa70] sm:%s606]
                  %950 = vst [vmem:[%s614 + $0x29c] sm:%s606] %v949
                  %v951 = vld [vmem:[%s613 + $0xa80] sm:%s606]
                  %952 = vst [vmem:[%s614 + $0x2a0] sm:%s606] %v951
                  %v953 = vld [vmem:[%s613 + $0xa90] sm:%s606]
                  %954 = vst [vmem:[%s614 + $0x2a4] sm:%s606] %v953
                  %v955 = vld [vmem:[%s613 + $0xaa0] sm:%s606]
                  %956 = vst [vmem:[%s614 + $0x2a8] sm:%s606] %v955
                  %v957 = vld [vmem:[%s613 + $0xab0] sm:%s606]
                  %958 = vst [vmem:[%s614 + $0x2ac] sm:%s606] %v957
                  %v959 = vld [vmem:[%s613 + $0xac0] sm:%s606]
                  %960 = vst [vmem:[%s614 + $0x2b0] sm:%s606] %v959
                  %v961 = vld [vmem:[%s613 + $0xad0] sm:%s606]
                  %962 = vst [vmem:[%s614 + $0x2b4] sm:%s606] %v961
                  %v963 = vld [vmem:[%s613 + $0xae0] sm:%s606]
                  %964 = vst [vmem:[%s614 + $0x2b8] sm:%s606] %v963
                  %v965 = vld [vmem:[%s613 + $0xaf0] sm:%s606]
                  %966 = vst [vmem:[%s614 + $0x2bc] sm:%s606] %v965
                  %v967 = vld [vmem:[%s613 + $0xb00] sm:%s606]
                  %968 = vst [vmem:[%s614 + $0x2c0] sm:%s606] %v967
                  %v969 = vld [vmem:[%s613 + $0xb10] sm:%s606]
                  %970 = vst [vmem:[%s614 + $0x2c4] sm:%s606] %v969
                  %v971 = vld [vmem:[%s613 + $0xb20] sm:%s606]
                  %972 = vst [vmem:[%s614 + $0x2c8] sm:%s606] %v971
                  %v973 = vld [vmem:[%s613 + $0xb30] sm:%s606]
                  %974 = vst [vmem:[%s614 + $0x2cc] sm:%s606] %v973
                  %v975 = vld [vmem:[%s613 + $0xb40] sm:%s606]
                  %976 = vst [vmem:[%s614 + $0x2d0] sm:%s606] %v975
                  %v977 = vld [vmem:[%s613 + $0xb50] sm:%s606]
                  %978 = vst [vmem:[%s614 + $0x2d4] sm:%s606] %v977
                  %v979 = vld [vmem:[%s613 + $0xb60] sm:%s606]
                  %980 = vst [vmem:[%s614 + $0x2d8] sm:%s606] %v979
                  %v981 = vld [vmem:[%s613 + $0xb70] sm:%s606]
                  %982 = vst [vmem:[%s614 + $0x2dc] sm:%s606] %v981
                  %v983 = vld [vmem:[%s613 + $0xb80] sm:%s606]
                  %984 = vst [vmem:[%s614 + $0x2e0] sm:%s606] %v983
                  %v985 = vld [vmem:[%s613 + $0xb90] sm:%s606]
                  %986 = vst [vmem:[%s614 + $0x2e4] sm:%s606] %v985
                  %v987 = vld [vmem:[%s613 + $0xba0] sm:%s606]
                  %988 = vst [vmem:[%s614 + $0x2e8] sm:%s606] %v987
                  %v989 = vld [vmem:[%s613 + $0xbb0] sm:%s606]
                  %990 = vst [vmem:[%s614 + $0x2ec] sm:%s606] %v989
                  %v991 = vld [vmem:[%s613 + $0xbc0] sm:%s606]
                  %992 = vst [vmem:[%s614 + $0x2f0] sm:%s606] %v991
                  %v993 = vld [vmem:[%s613 + $0xbd0] sm:%s606]
                  %994 = vst [vmem:[%s614 + $0x2f4] sm:%s606] %v993
                  %v995 = vld [vmem:[%s613 + $0xbe0] sm:%s606]
                  %996 = vst [vmem:[%s614 + $0x2f8] sm:%s606] %v995
                  %v997 = vld [vmem:[%s613 + $0xbf0] sm:%s606]
                  %998 = vst [vmem:[%s614 + $0x2fc] sm:%s606] %v997
                  %v999 = vld [vmem:[%s613 + $0xc00] sm:%s606]
                  %1000 = vst [vmem:[%s614 + $0x300] sm:%s606] %v999
                  %v1001 = vld [vmem:[%s613 + $0xc10] sm:%s606]
                  %1002 = vst [vmem:[%s614 + $0x304] sm:%s606] %v1001
                  %v1003 = vld [vmem:[%s613 + $0xc20] sm:%s606]
                  %1004 = vst [vmem:[%s614 + $0x308] sm:%s606] %v1003
                  %v1005 = vld [vmem:[%s613 + $0xc30] sm:%s606]
                  %1006 = vst [vmem:[%s614 + $0x30c] sm:%s606] %v1005
                $region63: #{dqn_forward.7} parent=50 // loop_footer
                  %s612 = sadd.s32 1, %s608
                $region64: #{dqn_forward.7} parent=50 // loop_footer_branch
                  %607 = sbr.rel target = $region60
                $region65: #{dqn_forward.7} parent=50 // loop_exit
                  _
              $region51: #{dqn_forward.7} parent=35 // pred_fallthru
                _
            $region36: #{dqn_forward.7} parent=31 // pred_fallthru
              _
            // Predicated region
            $region37: #{dqn_forward.7} parent=31 // pred_check
              _
            $region38: #{dqn_forward.7} parent=31 // pred_check_branch
              %192 = sbr.rel (0) target = $region40
            $region39: #{dqn_forward.7} parent=31 // pred_region
              %s194 = ssub.s32 16, 1
              loop: start=0, step=1, limit=1
              $region41: #{dqn_forward.7} parent=39 // loop_pre_header
                _
              $region42: #{dqn_forward.7} parent=39 // loop_header
                %s196 = sphi 0, %s200
                %p197 = scmp.ge.s32.totalorder %s196, 1
                %s201 = sphi %s186, %s186
                %s202 = sphi %s184, %s184
              $region43: #{dqn_forward.7} parent=39 // loop_header_branch
                %199 = sbr.rel (%p197) target = $region47
              $region44: #{dqn_forward.7} parent=39 // loop_body
                %v203 = vld [vmem:[%s201] sm:%s194]
                %204 = vst [vmem:[%s202] sm:%s194] %v203
                %v205 = vld [vmem:[%s201 + $0x10] sm:%s194]
                %206 = vst [vmem:[%s202 + $0x4] sm:%s194] %v205
                %v207 = vld [vmem:[%s201 + $0x20] sm:%s194]
                %208 = vst [vmem:[%s202 + $0x8] sm:%s194] %v207
                %v209 = vld [vmem:[%s201 + $0x30] sm:%s194]
                %210 = vst [vmem:[%s202 + $0xc] sm:%s194] %v209
                %v211 = vld [vmem:[%s201 + $0x40] sm:%s194]
                %212 = vst [vmem:[%s202 + $0x10] sm:%s194] %v211
                %v213 = vld [vmem:[%s201 + $0x50] sm:%s194]
                %214 = vst [vmem:[%s202 + $0x14] sm:%s194] %v213
                %v215 = vld [vmem:[%s201 + $0x60] sm:%s194]
                %216 = vst [vmem:[%s202 + $0x18] sm:%s194] %v215
                %v217 = vld [vmem:[%s201 + $0x70] sm:%s194]
                %218 = vst [vmem:[%s202 + $0x1c] sm:%s194] %v217
                %v219 = vld [vmem:[%s201 + $0x80] sm:%s194]
                %220 = vst [vmem:[%s202 + $0x20] sm:%s194] %v219
                %v221 = vld [vmem:[%s201 + $0x90] sm:%s194]
                %222 = vst [vmem:[%s202 + $0x24] sm:%s194] %v221
                %v223 = vld [vmem:[%s201 + $0xa0] sm:%s194]
                %224 = vst [vmem:[%s202 + $0x28] sm:%s194] %v223
                %v225 = vld [vmem:[%s201 + $0xb0] sm:%s194]
                %226 = vst [vmem:[%s202 + $0x2c] sm:%s194] %v225
                %v227 = vld [vmem:[%s201 + $0xc0] sm:%s194]
                %228 = vst [vmem:[%s202 + $0x30] sm:%s194] %v227
                %v229 = vld [vmem:[%s201 + $0xd0] sm:%s194]
                %230 = vst [vmem:[%s202 + $0x34] sm:%s194] %v229
                %v231 = vld [vmem:[%s201 + $0xe0] sm:%s194]
                %232 = vst [vmem:[%s202 + $0x38] sm:%s194] %v231
                %v233 = vld [vmem:[%s201 + $0xf0] sm:%s194]
                %234 = vst [vmem:[%s202 + $0x3c] sm:%s194] %v233
                %v235 = vld [vmem:[%s201 + $0x100] sm:%s194]
                %236 = vst [vmem:[%s202 + $0x40] sm:%s194] %v235
                %v237 = vld [vmem:[%s201 + $0x110] sm:%s194]
                %238 = vst [vmem:[%s202 + $0x44] sm:%s194] %v237
                %v239 = vld [vmem:[%s201 + $0x120] sm:%s194]
                %240 = vst [vmem:[%s202 + $0x48] sm:%s194] %v239
                %v241 = vld [vmem:[%s201 + $0x130] sm:%s194]
                %242 = vst [vmem:[%s202 + $0x4c] sm:%s194] %v241
                %v243 = vld [vmem:[%s201 + $0x140] sm:%s194]
                %244 = vst [vmem:[%s202 + $0x50] sm:%s194] %v243
                %v245 = vld [vmem:[%s201 + $0x150] sm:%s194]
                %246 = vst [vmem:[%s202 + $0x54] sm:%s194] %v245
                %v247 = vld [vmem:[%s201 + $0x160] sm:%s194]
                %248 = vst [vmem:[%s202 + $0x58] sm:%s194] %v247
                %v249 = vld [vmem:[%s201 + $0x170] sm:%s194]
                %250 = vst [vmem:[%s202 + $0x5c] sm:%s194] %v249
                %v251 = vld [vmem:[%s201 + $0x180] sm:%s194]
                %252 = vst [vmem:[%s202 + $0x60] sm:%s194] %v251
                %v253 = vld [vmem:[%s201 + $0x190] sm:%s194]
                %254 = vst [vmem:[%s202 + $0x64] sm:%s194] %v253
                %v255 = vld [vmem:[%s201 + $0x1a0] sm:%s194]
                %256 = vst [vmem:[%s202 + $0x68] sm:%s194] %v255
                %v257 = vld [vmem:[%s201 + $0x1b0] sm:%s194]
                %258 = vst [vmem:[%s202 + $0x6c] sm:%s194] %v257
                %v259 = vld [vmem:[%s201 + $0x1c0] sm:%s194]
                %260 = vst [vmem:[%s202 + $0x70] sm:%s194] %v259
                %v261 = vld [vmem:[%s201 + $0x1d0] sm:%s194]
                %262 = vst [vmem:[%s202 + $0x74] sm:%s194] %v261
                %v263 = vld [vmem:[%s201 + $0x1e0] sm:%s194]
                %264 = vst [vmem:[%s202 + $0x78] sm:%s194] %v263
                %v265 = vld [vmem:[%s201 + $0x1f0] sm:%s194]
                %266 = vst [vmem:[%s202 + $0x7c] sm:%s194] %v265
                %v267 = vld [vmem:[%s201 + $0x200] sm:%s194]
                %268 = vst [vmem:[%s202 + $0x80] sm:%s194] %v267
                %v269 = vld [vmem:[%s201 + $0x210] sm:%s194]
                %270 = vst [vmem:[%s202 + $0x84] sm:%s194] %v269
                %v271 = vld [vmem:[%s201 + $0x220] sm:%s194]
                %272 = vst [vmem:[%s202 + $0x88] sm:%s194] %v271
                %v273 = vld [vmem:[%s201 + $0x230] sm:%s194]
                %274 = vst [vmem:[%s202 + $0x8c] sm:%s194] %v273
                %v275 = vld [vmem:[%s201 + $0x240] sm:%s194]
                %276 = vst [vmem:[%s202 + $0x90] sm:%s194] %v275
                %v277 = vld [vmem:[%s201 + $0x250] sm:%s194]
                %278 = vst [vmem:[%s202 + $0x94] sm:%s194] %v277
                %v279 = vld [vmem:[%s201 + $0x260] sm:%s194]
                %280 = vst [vmem:[%s202 + $0x98] sm:%s194] %v279
                %v281 = vld [vmem:[%s201 + $0x270] sm:%s194]
                %282 = vst [vmem:[%s202 + $0x9c] sm:%s194] %v281
                %v283 = vld [vmem:[%s201 + $0x280] sm:%s194]
                %284 = vst [vmem:[%s202 + $0xa0] sm:%s194] %v283
                %v285 = vld [vmem:[%s201 + $0x290] sm:%s194]
                %286 = vst [vmem:[%s202 + $0xa4] sm:%s194] %v285
                %v287 = vld [vmem:[%s201 + $0x2a0] sm:%s194]
                %288 = vst [vmem:[%s202 + $0xa8] sm:%s194] %v287
                %v289 = vld [vmem:[%s201 + $0x2b0] sm:%s194]
                %290 = vst [vmem:[%s202 + $0xac] sm:%s194] %v289
                %v291 = vld [vmem:[%s201 + $0x2c0] sm:%s194]
                %292 = vst [vmem:[%s202 + $0xb0] sm:%s194] %v291
                %v293 = vld [vmem:[%s201 + $0x2d0] sm:%s194]
                %294 = vst [vmem:[%s202 + $0xb4] sm:%s194] %v293
                %v295 = vld [vmem:[%s201 + $0x2e0] sm:%s194]
                %296 = vst [vmem:[%s202 + $0xb8] sm:%s194] %v295
                %v297 = vld [vmem:[%s201 + $0x2f0] sm:%s194]
                %298 = vst [vmem:[%s202 + $0xbc] sm:%s194] %v297
                %v299 = vld [vmem:[%s201 + $0x300] sm:%s194]
                %300 = vst [vmem:[%s202 + $0xc0] sm:%s194] %v299
                %v301 = vld [vmem:[%s201 + $0x310] sm:%s194]
                %302 = vst [vmem:[%s202 + $0xc4] sm:%s194] %v301
                %v303 = vld [vmem:[%s201 + $0x320] sm:%s194]
                %304 = vst [vmem:[%s202 + $0xc8] sm:%s194] %v303
                %v305 = vld [vmem:[%s201 + $0x330] sm:%s194]
                %306 = vst [vmem:[%s202 + $0xcc] sm:%s194] %v305
                %v307 = vld [vmem:[%s201 + $0x340] sm:%s194]
                %308 = vst [vmem:[%s202 + $0xd0] sm:%s194] %v307
                %v309 = vld [vmem:[%s201 + $0x350] sm:%s194]
                %310 = vst [vmem:[%s202 + $0xd4] sm:%s194] %v309
                %v311 = vld [vmem:[%s201 + $0x360] sm:%s194]
                %312 = vst [vmem:[%s202 + $0xd8] sm:%s194] %v311
                %v313 = vld [vmem:[%s201 + $0x370] sm:%s194]
                %314 = vst [vmem:[%s202 + $0xdc] sm:%s194] %v313
                %v315 = vld [vmem:[%s201 + $0x380] sm:%s194]
                %316 = vst [vmem:[%s202 + $0xe0] sm:%s194] %v315
                %v317 = vld [vmem:[%s201 + $0x390] sm:%s194]
                %318 = vst [vmem:[%s202 + $0xe4] sm:%s194] %v317
                %v319 = vld [vmem:[%s201 + $0x3a0] sm:%s194]
                %320 = vst [vmem:[%s202 + $0xe8] sm:%s194] %v319
                %v321 = vld [vmem:[%s201 + $0x3b0] sm:%s194]
                %322 = vst [vmem:[%s202 + $0xec] sm:%s194] %v321
                %v323 = vld [vmem:[%s201 + $0x3c0] sm:%s194]
                %324 = vst [vmem:[%s202 + $0xf0] sm:%s194] %v323
                %v325 = vld [vmem:[%s201 + $0x3d0] sm:%s194]
                %326 = vst [vmem:[%s202 + $0xf4] sm:%s194] %v325
                %v327 = vld [vmem:[%s201 + $0x3e0] sm:%s194]
                %328 = vst [vmem:[%s202 + $0xf8] sm:%s194] %v327
                %v329 = vld [vmem:[%s201 + $0x3f0] sm:%s194]
                %330 = vst [vmem:[%s202 + $0xfc] sm:%s194] %v329
                %v331 = vld [vmem:[%s201 + $0x400] sm:%s194]
                %332 = vst [vmem:[%s202 + $0x100] sm:%s194] %v331
                %v333 = vld [vmem:[%s201 + $0x410] sm:%s194]
                %334 = vst [vmem:[%s202 + $0x104] sm:%s194] %v333
                %v335 = vld [vmem:[%s201 + $0x420] sm:%s194]
                %336 = vst [vmem:[%s202 + $0x108] sm:%s194] %v335
                %v337 = vld [vmem:[%s201 + $0x430] sm:%s194]
                %338 = vst [vmem:[%s202 + $0x10c] sm:%s194] %v337
                %v339 = vld [vmem:[%s201 + $0x440] sm:%s194]
                %340 = vst [vmem:[%s202 + $0x110] sm:%s194] %v339
                %v341 = vld [vmem:[%s201 + $0x450] sm:%s194]
                %342 = vst [vmem:[%s202 + $0x114] sm:%s194] %v341
                %v343 = vld [vmem:[%s201 + $0x460] sm:%s194]
                %344 = vst [vmem:[%s202 + $0x118] sm:%s194] %v343
                %v345 = vld [vmem:[%s201 + $0x470] sm:%s194]
                %346 = vst [vmem:[%s202 + $0x11c] sm:%s194] %v345
                %v347 = vld [vmem:[%s201 + $0x480] sm:%s194]
                %348 = vst [vmem:[%s202 + $0x120] sm:%s194] %v347
                %v349 = vld [vmem:[%s201 + $0x490] sm:%s194]
                %350 = vst [vmem:[%s202 + $0x124] sm:%s194] %v349
                %v351 = vld [vmem:[%s201 + $0x4a0] sm:%s194]
                %352 = vst [vmem:[%s202 + $0x128] sm:%s194] %v351
                %v353 = vld [vmem:[%s201 + $0x4b0] sm:%s194]
                %354 = vst [vmem:[%s202 + $0x12c] sm:%s194] %v353
                %v355 = vld [vmem:[%s201 + $0x4c0] sm:%s194]
                %356 = vst [vmem:[%s202 + $0x130] sm:%s194] %v355
                %v357 = vld [vmem:[%s201 + $0x4d0] sm:%s194]
                %358 = vst [vmem:[%s202 + $0x134] sm:%s194] %v357
                %v359 = vld [vmem:[%s201 + $0x4e0] sm:%s194]
                %360 = vst [vmem:[%s202 + $0x138] sm:%s194] %v359
                %v361 = vld [vmem:[%s201 + $0x4f0] sm:%s194]
                %362 = vst [vmem:[%s202 + $0x13c] sm:%s194] %v361
                %v363 = vld [vmem:[%s201 + $0x500] sm:%s194]
                %364 = vst [vmem:[%s202 + $0x140] sm:%s194] %v363
                %v365 = vld [vmem:[%s201 + $0x510] sm:%s194]
                %366 = vst [vmem:[%s202 + $0x144] sm:%s194] %v365
                %v367 = vld [vmem:[%s201 + $0x520] sm:%s194]
                %368 = vst [vmem:[%s202 + $0x148] sm:%s194] %v367
                %v369 = vld [vmem:[%s201 + $0x530] sm:%s194]
                %370 = vst [vmem:[%s202 + $0x14c] sm:%s194] %v369
                %v371 = vld [vmem:[%s201 + $0x540] sm:%s194]
                %372 = vst [vmem:[%s202 + $0x150] sm:%s194] %v371
                %v373 = vld [vmem:[%s201 + $0x550] sm:%s194]
                %374 = vst [vmem:[%s202 + $0x154] sm:%s194] %v373
                %v375 = vld [vmem:[%s201 + $0x560] sm:%s194]
                %376 = vst [vmem:[%s202 + $0x158] sm:%s194] %v375
                %v377 = vld [vmem:[%s201 + $0x570] sm:%s194]
                %378 = vst [vmem:[%s202 + $0x15c] sm:%s194] %v377
                %v379 = vld [vmem:[%s201 + $0x580] sm:%s194]
                %380 = vst [vmem:[%s202 + $0x160] sm:%s194] %v379
                %v381 = vld [vmem:[%s201 + $0x590] sm:%s194]
                %382 = vst [vmem:[%s202 + $0x164] sm:%s194] %v381
                %v383 = vld [vmem:[%s201 + $0x5a0] sm:%s194]
                %384 = vst [vmem:[%s202 + $0x168] sm:%s194] %v383
                %v385 = vld [vmem:[%s201 + $0x5b0] sm:%s194]
                %386 = vst [vmem:[%s202 + $0x16c] sm:%s194] %v385
                %v387 = vld [vmem:[%s201 + $0x5c0] sm:%s194]
                %388 = vst [vmem:[%s202 + $0x170] sm:%s194] %v387
                %v389 = vld [vmem:[%s201 + $0x5d0] sm:%s194]
                %390 = vst [vmem:[%s202 + $0x174] sm:%s194] %v389
                %v391 = vld [vmem:[%s201 + $0x5e0] sm:%s194]
                %392 = vst [vmem:[%s202 + $0x178] sm:%s194] %v391
                %v393 = vld [vmem:[%s201 + $0x5f0] sm:%s194]
                %394 = vst [vmem:[%s202 + $0x17c] sm:%s194] %v393
                %v395 = vld [vmem:[%s201 + $0x600] sm:%s194]
                %396 = vst [vmem:[%s202 + $0x180] sm:%s194] %v395
                %v397 = vld [vmem:[%s201 + $0x610] sm:%s194]
                %398 = vst [vmem:[%s202 + $0x184] sm:%s194] %v397
                %v399 = vld [vmem:[%s201 + $0x620] sm:%s194]
                %400 = vst [vmem:[%s202 + $0x188] sm:%s194] %v399
                %v401 = vld [vmem:[%s201 + $0x630] sm:%s194]
                %402 = vst [vmem:[%s202 + $0x18c] sm:%s194] %v401
                %v403 = vld [vmem:[%s201 + $0x640] sm:%s194]
                %404 = vst [vmem:[%s202 + $0x190] sm:%s194] %v403
                %v405 = vld [vmem:[%s201 + $0x650] sm:%s194]
                %406 = vst [vmem:[%s202 + $0x194] sm:%s194] %v405
                %v407 = vld [vmem:[%s201 + $0x660] sm:%s194]
                %408 = vst [vmem:[%s202 + $0x198] sm:%s194] %v407
                %v409 = vld [vmem:[%s201 + $0x670] sm:%s194]
                %410 = vst [vmem:[%s202 + $0x19c] sm:%s194] %v409
                %v411 = vld [vmem:[%s201 + $0x680] sm:%s194]
                %412 = vst [vmem:[%s202 + $0x1a0] sm:%s194] %v411
                %v413 = vld [vmem:[%s201 + $0x690] sm:%s194]
                %414 = vst [vmem:[%s202 + $0x1a4] sm:%s194] %v413
                %v415 = vld [vmem:[%s201 + $0x6a0] sm:%s194]
                %416 = vst [vmem:[%s202 + $0x1a8] sm:%s194] %v415
                %v417 = vld [vmem:[%s201 + $0x6b0] sm:%s194]
                %418 = vst [vmem:[%s202 + $0x1ac] sm:%s194] %v417
                %v419 = vld [vmem:[%s201 + $0x6c0] sm:%s194]
                %420 = vst [vmem:[%s202 + $0x1b0] sm:%s194] %v419
                %v421 = vld [vmem:[%s201 + $0x6d0] sm:%s194]
                %422 = vst [vmem:[%s202 + $0x1b4] sm:%s194] %v421
                %v423 = vld [vmem:[%s201 + $0x6e0] sm:%s194]
                %424 = vst [vmem:[%s202 + $0x1b8] sm:%s194] %v423
                %v425 = vld [vmem:[%s201 + $0x6f0] sm:%s194]
                %426 = vst [vmem:[%s202 + $0x1bc] sm:%s194] %v425
                %v427 = vld [vmem:[%s201 + $0x700] sm:%s194]
                %428 = vst [vmem:[%s202 + $0x1c0] sm:%s194] %v427
                %v429 = vld [vmem:[%s201 + $0x710] sm:%s194]
                %430 = vst [vmem:[%s202 + $0x1c4] sm:%s194] %v429
                %v431 = vld [vmem:[%s201 + $0x720] sm:%s194]
                %432 = vst [vmem:[%s202 + $0x1c8] sm:%s194] %v431
                %v433 = vld [vmem:[%s201 + $0x730] sm:%s194]
                %434 = vst [vmem:[%s202 + $0x1cc] sm:%s194] %v433
                %v435 = vld [vmem:[%s201 + $0x740] sm:%s194]
                %436 = vst [vmem:[%s202 + $0x1d0] sm:%s194] %v435
                %v437 = vld [vmem:[%s201 + $0x750] sm:%s194]
                %438 = vst [vmem:[%s202 + $0x1d4] sm:%s194] %v437
                %v439 = vld [vmem:[%s201 + $0x760] sm:%s194]
                %440 = vst [vmem:[%s202 + $0x1d8] sm:%s194] %v439
                %v441 = vld [vmem:[%s201 + $0x770] sm:%s194]
                %442 = vst [vmem:[%s202 + $0x1dc] sm:%s194] %v441
                %v443 = vld [vmem:[%s201 + $0x780] sm:%s194]
                %444 = vst [vmem:[%s202 + $0x1e0] sm:%s194] %v443
                %v445 = vld [vmem:[%s201 + $0x790] sm:%s194]
                %446 = vst [vmem:[%s202 + $0x1e4] sm:%s194] %v445
                %v447 = vld [vmem:[%s201 + $0x7a0] sm:%s194]
                %448 = vst [vmem:[%s202 + $0x1e8] sm:%s194] %v447
                %v449 = vld [vmem:[%s201 + $0x7b0] sm:%s194]
                %450 = vst [vmem:[%s202 + $0x1ec] sm:%s194] %v449
                %v451 = vld [vmem:[%s201 + $0x7c0] sm:%s194]
                %452 = vst [vmem:[%s202 + $0x1f0] sm:%s194] %v451
                %v453 = vld [vmem:[%s201 + $0x7d0] sm:%s194]
                %454 = vst [vmem:[%s202 + $0x1f4] sm:%s194] %v453
                %v455 = vld [vmem:[%s201 + $0x7e0] sm:%s194]
                %456 = vst [vmem:[%s202 + $0x1f8] sm:%s194] %v455
                %v457 = vld [vmem:[%s201 + $0x7f0] sm:%s194]
                %458 = vst [vmem:[%s202 + $0x1fc] sm:%s194] %v457
                %v459 = vld [vmem:[%s201 + $0x800] sm:%s194]
                %460 = vst [vmem:[%s202 + $0x200] sm:%s194] %v459
                %v461 = vld [vmem:[%s201 + $0x810] sm:%s194]
                %462 = vst [vmem:[%s202 + $0x204] sm:%s194] %v461
                %v463 = vld [vmem:[%s201 + $0x820] sm:%s194]
                %464 = vst [vmem:[%s202 + $0x208] sm:%s194] %v463
                %v465 = vld [vmem:[%s201 + $0x830] sm:%s194]
                %466 = vst [vmem:[%s202 + $0x20c] sm:%s194] %v465
                %v467 = vld [vmem:[%s201 + $0x840] sm:%s194]
                %468 = vst [vmem:[%s202 + $0x210] sm:%s194] %v467
                %v469 = vld [vmem:[%s201 + $0x850] sm:%s194]
                %470 = vst [vmem:[%s202 + $0x214] sm:%s194] %v469
                %v471 = vld [vmem:[%s201 + $0x860] sm:%s194]
                %472 = vst [vmem:[%s202 + $0x218] sm:%s194] %v471
                %v473 = vld [vmem:[%s201 + $0x870] sm:%s194]
                %474 = vst [vmem:[%s202 + $0x21c] sm:%s194] %v473
                %v475 = vld [vmem:[%s201 + $0x880] sm:%s194]
                %476 = vst [vmem:[%s202 + $0x220] sm:%s194] %v475
                %v477 = vld [vmem:[%s201 + $0x890] sm:%s194]
                %478 = vst [vmem:[%s202 + $0x224] sm:%s194] %v477
                %v479 = vld [vmem:[%s201 + $0x8a0] sm:%s194]
                %480 = vst [vmem:[%s202 + $0x228] sm:%s194] %v479
                %v481 = vld [vmem:[%s201 + $0x8b0] sm:%s194]
                %482 = vst [vmem:[%s202 + $0x22c] sm:%s194] %v481
                %v483 = vld [vmem:[%s201 + $0x8c0] sm:%s194]
                %484 = vst [vmem:[%s202 + $0x230] sm:%s194] %v483
                %v485 = vld [vmem:[%s201 + $0x8d0] sm:%s194]
                %486 = vst [vmem:[%s202 + $0x234] sm:%s194] %v485
                %v487 = vld [vmem:[%s201 + $0x8e0] sm:%s194]
                %488 = vst [vmem:[%s202 + $0x238] sm:%s194] %v487
                %v489 = vld [vmem:[%s201 + $0x8f0] sm:%s194]
                %490 = vst [vmem:[%s202 + $0x23c] sm:%s194] %v489
                %v491 = vld [vmem:[%s201 + $0x900] sm:%s194]
                %492 = vst [vmem:[%s202 + $0x240] sm:%s194] %v491
                %v493 = vld [vmem:[%s201 + $0x910] sm:%s194]
                %494 = vst [vmem:[%s202 + $0x244] sm:%s194] %v493
                %v495 = vld [vmem:[%s201 + $0x920] sm:%s194]
                %496 = vst [vmem:[%s202 + $0x248] sm:%s194] %v495
                %v497 = vld [vmem:[%s201 + $0x930] sm:%s194]
                %498 = vst [vmem:[%s202 + $0x24c] sm:%s194] %v497
                %v499 = vld [vmem:[%s201 + $0x940] sm:%s194]
                %500 = vst [vmem:[%s202 + $0x250] sm:%s194] %v499
                %v501 = vld [vmem:[%s201 + $0x950] sm:%s194]
                %502 = vst [vmem:[%s202 + $0x254] sm:%s194] %v501
                %v503 = vld [vmem:[%s201 + $0x960] sm:%s194]
                %504 = vst [vmem:[%s202 + $0x258] sm:%s194] %v503
                %v505 = vld [vmem:[%s201 + $0x970] sm:%s194]
                %506 = vst [vmem:[%s202 + $0x25c] sm:%s194] %v505
                %v507 = vld [vmem:[%s201 + $0x980] sm:%s194]
                %508 = vst [vmem:[%s202 + $0x260] sm:%s194] %v507
                %v509 = vld [vmem:[%s201 + $0x990] sm:%s194]
                %510 = vst [vmem:[%s202 + $0x264] sm:%s194] %v509
                %v511 = vld [vmem:[%s201 + $0x9a0] sm:%s194]
                %512 = vst [vmem:[%s202 + $0x268] sm:%s194] %v511
                %v513 = vld [vmem:[%s201 + $0x9b0] sm:%s194]
                %514 = vst [vmem:[%s202 + $0x26c] sm:%s194] %v513
                %v515 = vld [vmem:[%s201 + $0x9c0] sm:%s194]
                %516 = vst [vmem:[%s202 + $0x270] sm:%s194] %v515
                %v517 = vld [vmem:[%s201 + $0x9d0] sm:%s194]
                %518 = vst [vmem:[%s202 + $0x274] sm:%s194] %v517
                %v519 = vld [vmem:[%s201 + $0x9e0] sm:%s194]
                %520 = vst [vmem:[%s202 + $0x278] sm:%s194] %v519
                %v521 = vld [vmem:[%s201 + $0x9f0] sm:%s194]
                %522 = vst [vmem:[%s202 + $0x27c] sm:%s194] %v521
                %v523 = vld [vmem:[%s201 + $0xa00] sm:%s194]
                %524 = vst [vmem:[%s202 + $0x280] sm:%s194] %v523
                %v525 = vld [vmem:[%s201 + $0xa10] sm:%s194]
                %526 = vst [vmem:[%s202 + $0x284] sm:%s194] %v525
                %v527 = vld [vmem:[%s201 + $0xa20] sm:%s194]
                %528 = vst [vmem:[%s202 + $0x288] sm:%s194] %v527
                %v529 = vld [vmem:[%s201 + $0xa30] sm:%s194]
                %530 = vst [vmem:[%s202 + $0x28c] sm:%s194] %v529
                %v531 = vld [vmem:[%s201 + $0xa40] sm:%s194]
                %532 = vst [vmem:[%s202 + $0x290] sm:%s194] %v531
                %v533 = vld [vmem:[%s201 + $0xa50] sm:%s194]
                %534 = vst [vmem:[%s202 + $0x294] sm:%s194] %v533
                %v535 = vld [vmem:[%s201 + $0xa60] sm:%s194]
                %536 = vst [vmem:[%s202 + $0x298] sm:%s194] %v535
                %v537 = vld [vmem:[%s201 + $0xa70] sm:%s194]
                %538 = vst [vmem:[%s202 + $0x29c] sm:%s194] %v537
                %v539 = vld [vmem:[%s201 + $0xa80] sm:%s194]
                %540 = vst [vmem:[%s202 + $0x2a0] sm:%s194] %v539
                %v541 = vld [vmem:[%s201 + $0xa90] sm:%s194]
                %542 = vst [vmem:[%s202 + $0x2a4] sm:%s194] %v541
                %v543 = vld [vmem:[%s201 + $0xaa0] sm:%s194]
                %544 = vst [vmem:[%s202 + $0x2a8] sm:%s194] %v543
                %v545 = vld [vmem:[%s201 + $0xab0] sm:%s194]
                %546 = vst [vmem:[%s202 + $0x2ac] sm:%s194] %v545
                %v547 = vld [vmem:[%s201 + $0xac0] sm:%s194]
                %548 = vst [vmem:[%s202 + $0x2b0] sm:%s194] %v547
                %v549 = vld [vmem:[%s201 + $0xad0] sm:%s194]
                %550 = vst [vmem:[%s202 + $0x2b4] sm:%s194] %v549
                %v551 = vld [vmem:[%s201 + $0xae0] sm:%s194]
                %552 = vst [vmem:[%s202 + $0x2b8] sm:%s194] %v551
                %v553 = vld [vmem:[%s201 + $0xaf0] sm:%s194]
                %554 = vst [vmem:[%s202 + $0x2bc] sm:%s194] %v553
                %v555 = vld [vmem:[%s201 + $0xb00] sm:%s194]
                %556 = vst [vmem:[%s202 + $0x2c0] sm:%s194] %v555
                %v557 = vld [vmem:[%s201 + $0xb10] sm:%s194]
                %558 = vst [vmem:[%s202 + $0x2c4] sm:%s194] %v557
                %v559 = vld [vmem:[%s201 + $0xb20] sm:%s194]
                %560 = vst [vmem:[%s202 + $0x2c8] sm:%s194] %v559
                %v561 = vld [vmem:[%s201 + $0xb30] sm:%s194]
                %562 = vst [vmem:[%s202 + $0x2cc] sm:%s194] %v561
                %v563 = vld [vmem:[%s201 + $0xb40] sm:%s194]
                %564 = vst [vmem:[%s202 + $0x2d0] sm:%s194] %v563
                %v565 = vld [vmem:[%s201 + $0xb50] sm:%s194]
                %566 = vst [vmem:[%s202 + $0x2d4] sm:%s194] %v565
                %v567 = vld [vmem:[%s201 + $0xb60] sm:%s194]
                %568 = vst [vmem:[%s202 + $0x2d8] sm:%s194] %v567
                %v569 = vld [vmem:[%s201 + $0xb70] sm:%s194]
                %570 = vst [vmem:[%s202 + $0x2dc] sm:%s194] %v569
                %v571 = vld [vmem:[%s201 + $0xb80] sm:%s194]
                %572 = vst [vmem:[%s202 + $0x2e0] sm:%s194] %v571
                %v573 = vld [vmem:[%s201 + $0xb90] sm:%s194]
                %574 = vst [vmem:[%s202 + $0x2e4] sm:%s194] %v573
                %v575 = vld [vmem:[%s201 + $0xba0] sm:%s194]
                %576 = vst [vmem:[%s202 + $0x2e8] sm:%s194] %v575
                %v577 = vld [vmem:[%s201 + $0xbb0] sm:%s194]
                %578 = vst [vmem:[%s202 + $0x2ec] sm:%s194] %v577
                %v579 = vld [vmem:[%s201 + $0xbc0] sm:%s194]
                %580 = vst [vmem:[%s202 + $0x2f0] sm:%s194] %v579
                %v581 = vld [vmem:[%s201 + $0xbd0] sm:%s194]
                %582 = vst [vmem:[%s202 + $0x2f4] sm:%s194] %v581
                %v583 = vld [vmem:[%s201 + $0xbe0] sm:%s194]
                %584 = vst [vmem:[%s202 + $0x2f8] sm:%s194] %v583
                %v585 = vld [vmem:[%s201 + $0xbf0] sm:%s194]
                %586 = vst [vmem:[%s202 + $0x2fc] sm:%s194] %v585
                %v587 = vld [vmem:[%s201 + $0xc00] sm:%s194]
                %588 = vst [vmem:[%s202 + $0x300] sm:%s194] %v587
                %v589 = vld [vmem:[%s201 + $0xc10] sm:%s194]
                %590 = vst [vmem:[%s202 + $0x304] sm:%s194] %v589
                %v591 = vld [vmem:[%s201 + $0xc20] sm:%s194]
                %592 = vst [vmem:[%s202 + $0x308] sm:%s194] %v591
                %v593 = vld [vmem:[%s201 + $0xc30] sm:%s194]
                %594 = vst [vmem:[%s202 + $0x30c] sm:%s194] %v593
              $region45: #{dqn_forward.7} parent=39 // loop_footer
                %s200 = sadd.s32 1, %s196
              $region46: #{dqn_forward.7} parent=39 // loop_footer_branch
                %195 = sbr.rel target = $region42
              $region47: #{dqn_forward.7} parent=39 // loop_exit
                _
            $region40: #{dqn_forward.7} parent=31 // pred_fallthru
              _
          $region32: #{dqn_forward.7} parent=27 // pred_fallthru
            _
          %1007 = vnop
        $region28: #{dqn_forward.7} parent=23 // pred_fallthru
          _
        // Predicated region
        $region66: #{dqn_forward.7} parent=23 // pred_check
          %p1008 = pneg %p79
        $region67: #{dqn_forward.7} parent=23 // pred_check_branch
          %1010 = sbr.rel (%p1008) target = $region69
        $region68: #{dqn_forward.7} parent=23 // pred_region
          %p1011 = scmp.lt.s32.totalorder %s12, 3
          %s1012 = scalar_select %p1011, %s12, 3
          %s1013 = scalar_lea.vmem %s2, %s1012
        $region69: #{dqn_forward.7} parent=23 // pred_fallthru
          _
        // Predicated region
        $region70: #{dqn_forward.7} parent=23 // pred_check
          %p1014 = pneg %p105
        $region71: #{dqn_forward.7} parent=23 // pred_check_branch
          %1016 = sbr.rel (%p1014) target = $region73
        $region72: #{dqn_forward.7} parent=23 // pred_region
          %s1017 = smul.u32 16, %s12
          %p1018 = scmp.lt.s32.totalorder %s1017, 63
          %s1019 = scalar_select %p1018, %s1017, 63
          %s1020 = smul.addr %s1019, 4
          %s1021 = scalar_lea.vmem %s3, %s1020
          %s1022 = smul.u32 16, %s12
        $region73: #{dqn_forward.7} parent=23 // pred_fallthru
          _
      $region24: #{dqn_forward.7} parent=5 // pred_fallthru
        _
      %p1023 = scmp.le.s32.totalorder 1, %s12
      %p1024 = scmp.lt.s32.totalorder %s12, 5
      %p1025 = pnand %p1023, %p1024
      %p1026 = pneg %p1025
      // Predicated region
      $region74: #{dqn_forward.7} parent=5 // pred_check
        _
      $region75: #{dqn_forward.7} parent=5 // pred_check_branch
        %1028 = sbr.rel (%p1025) target = $region77
      $region76: #{dqn_forward.7} parent=5 // pred_region
        %s1029 = ssub.s32 %s12, 1
        %s1030 = sand.u32 %s46, 1
        %s1031 = sand.u32 %s46, 1
        %s1032 = smul.addr %s1031, 784
        %s1033 = scalar_lea.vmem [#allocation2], %s1032
        // Predicated region
        $region78: #{dqn_forward.7} parent=76 // pred_check
          %p1034 = pneg %p59
        $region79: #{dqn_forward.7} parent=76 // pred_check_branch
          %1036 = sbr.rel (%p1034) target = $region81
        $region80: #{dqn_forward.7} parent=76 // pred_region
          _
        $region81: #{dqn_forward.7} parent=76 // pred_fallthru
          _
        %p1037 = pneg %p33
        %p1038 = pneg %p30
        %s1039 = sand.u32 %s46, 1
        %s1040 = sand.u32 %s46, 1
        %s1041 = smul.addr %s1040, 784
        %s1042 = scalar_lea.vmem [#allocation2], %s1041
        %p1043 = pneg %p59
        %p1044 = pneg %p56
        %p1045 = scmp.lt.s32.totalorder %s17, 3
        %s1046 = scalar_select %p1045, %s17, 3
        %s1047 = scalar_lea.vmem %s2, %s1046
        %p1048 = pneg %p85
        %p1049 = pneg %p82
        %s1050 = smul.u32 16, %s17
        %p1051 = scmp.lt.s32.totalorder %s1050, 63
        %s1052 = scalar_select %p1051, %s1050, 63
        %s1053 = smul.addr %s1052, 4
        %s1054 = scalar_lea.vmem %s3, %s1053
        %p1055 = pneg %p111
        %p1056 = pneg %p108
        %p1057 = pneg %p132
        %p1058 = pneg %p129
        %p1059 = pneg %p153
        %p1060 = pneg %p150
        %p1061 = scmp.lt.s32.totalorder %s17, 3
        %s1062 = scalar_select %p1061, %s17, 3
        %s1063 = scalar_lea.vmem %s2, %s1062
        %s1064 = smul.u32 16, %s17
        %p1065 = scmp.lt.s32.totalorder %s1064, 63
        %s1066 = scalar_select %p1065, %s1064, 63
        %s1067 = smul.addr %s1066, 4
        %s1068 = scalar_lea.vmem %s3, %s1067
        %s1069 = smul.u32 16, %s17
        %p1071 = scmp.eq.s32.totalorder %s17, 0
        // Predicated region
        $region82: #{dqn_forward.7} parent=76 // pred_check
          %p1072 = pneg %p1071
        $region83: #{dqn_forward.7} parent=76 // pred_check_branch
          %1074 = sbr.rel (%p1072) target = $region85
        $region84: #{dqn_forward.7} parent=76 // pred_region
          %v1075 = vld [vmem:[%s4] sm:$0x1]
          %v1077 = vperm.slane %v1075, 0
          %1079 = vst [vmem:[#allocation3] sm:$0x3] %v1077
        $region85: #{dqn_forward.7} parent=76 // pred_fallthru
          _
        %v1080 = vld [vmem:[%s0] sm:$0xff]
        %v1081 = vld [vmem:[%s0 + $0x8] sm:$0x1f]
        %v1082 = vld [vmem:[%s1033] sm:$0xf]
        %v1083 = vld [vmem:[%s1033 + $0x4] sm:$0xf]
        %v1084 = vld [vmem:[%s1033 + $0x8] sm:$0xf]
        %v1085 = vld [vmem:[%s1033 + $0xc] sm:$0xf]
        %v1086 = vld [vmem:[%s1033 + $0x10] sm:$0xf]
        %v1087 = vld [vmem:[%s1033 + $0x14] sm:$0xf]
        %v1088 = vld [vmem:[%s1033 + $0x18] sm:$0xf]
        %v1089 = vld [vmem:[%s1033 + $0x1c] sm:$0xf]
        %v1090 = vld [vmem:[%s1033 + $0x20] sm:$0xf]
        %v1091 = vld [vmem:[%s1033 + $0x24] sm:$0xf]
        %v1092 = vld [vmem:[%s1033 + $0x28] sm:$0xf]
        %v1093 = vld [vmem:[%s1033 + $0x2c] sm:$0xf]
        %v1094 = vld [vmem:[%s1033 + $0x30] sm:$0xf]
        %v1095 = vld [vmem:[%s1033 + $0x34] sm:$0xf]
        %v1096 = vld [vmem:[%s1033 + $0x38] sm:$0xf]
        %v1097 = vld [vmem:[%s1033 + $0x3c] sm:$0xf]
        %v1098 = vld [vmem:[%s1033 + $0x40] sm:$0xf]
        %v1099 = vld [vmem:[%s1033 + $0x44] sm:$0xf]
        %v1100 = vld [vmem:[%s1033 + $0x48] sm:$0xf]
        %v1101 = vld [vmem:[%s1033 + $0x4c] sm:$0xf]
        %v1102 = vld [vmem:[%s1033 + $0x50] sm:$0xf]
        %v1103 = vld [vmem:[%s1033 + $0x54] sm:$0xf]
        %v1104 = vld [vmem:[%s1033 + $0x58] sm:$0xf]
        %v1105 = vld [vmem:[%s1033 + $0x5c] sm:$0xf]
        %v1106 = vld [vmem:[%s1033 + $0x60] sm:$0xf]
        %v1107 = vld [vmem:[%s1033 + $0x64] sm:$0xf]
        %v1108 = vld [vmem:[%s1033 + $0x68] sm:$0xf]
        %v1109 = vld [vmem:[%s1033 + $0x6c] sm:$0xf]
        %v1110 = vld [vmem:[%s1033 + $0x70] sm:$0xf]
        %v1111 = vld [vmem:[%s1033 + $0x74] sm:$0xf]
        %v1112 = vld [vmem:[%s1033 + $0x78] sm:$0xf]
        %v1113 = vld [vmem:[%s1033 + $0x7c] sm:$0xf]
        %v1114 = vld [vmem:[%s1033 + $0x80] sm:$0xf]
        %v1115 = vld [vmem:[%s1033 + $0x84] sm:$0xf]
        %v1116 = vld [vmem:[%s1033 + $0x88] sm:$0xf]
        %v1117 = vld [vmem:[%s1033 + $0x8c] sm:$0xf]
        %v1118 = vld [vmem:[%s1033 + $0x90] sm:$0xf]
        %v1119 = vld [vmem:[%s1033 + $0x94] sm:$0xf]
        %v1120 = vld [vmem:[%s1033 + $0x98] sm:$0xf]
        %v1121 = vld [vmem:[%s1033 + $0x9c] sm:$0xf]
        %v1122 = vld [vmem:[%s1033 + $0xa0] sm:$0xf]
        %v1123 = vld [vmem:[%s1033 + $0xa4] sm:$0xf]
        %v1124 = vld [vmem:[%s1033 + $0xa8] sm:$0xf]
        %v1125 = vld [vmem:[%s1033 + $0xac] sm:$0xf]
        %v1126 = vld [vmem:[%s1033 + $0xb0] sm:$0xf]
        %v1127 = vld [vmem:[%s1033 + $0xb4] sm:$0xf]
        %v1128 = vld [vmem:[%s1033 + $0xb8] sm:$0xf]
        %v1129 = vld [vmem:[%s1033 + $0xbc] sm:$0xf]
        %v1130 = vld [vmem:[%s1033 + $0xc0] sm:$0xf]
        %v1131 = vld [vmem:[%s1033 + $0xc4] sm:$0xf]
        %v1132 = vld [vmem:[%s1033 + $0xc8] sm:$0xf]
        %v1133 = vld [vmem:[%s1033 + $0xcc] sm:$0xf]
        %v1134 = vld [vmem:[%s1033 + $0xd0] sm:$0xf]
        %v1135 = vld [vmem:[%s1033 + $0xd4] sm:$0xf]
        %v1136 = vld [vmem:[%s1033 + $0xd8] sm:$0xf]
        %v1137 = vld [vmem:[%s1033 + $0xdc] sm:$0xf]
        %v1138 = vld [vmem:[%s1033 + $0xe0] sm:$0xf]
        %v1139 = vld [vmem:[%s1033 + $0xe4] sm:$0xf]
        %v1140 = vld [vmem:[%s1033 + $0xe8] sm:$0xf]
        %v1141 = vld [vmem:[%s1033 + $0xec] sm:$0xf]
        %v1142 = vld [vmem:[%s1033 + $0xf0] sm:$0xf]
        %v1143 = vld [vmem:[%s1033 + $0xf4] sm:$0xf]
        %v1144 = vld [vmem:[%s1033 + $0xf8] sm:$0xf]
        %v1145 = vld [vmem:[%s1033 + $0xfc] sm:$0xf]
        %v1146 = vld [vmem:[%s1033 + $0x100] sm:$0xf]
        %v1147 = vld [vmem:[%s1033 + $0x104] sm:$0xf]
        %v1148 = vld [vmem:[%s1033 + $0x108] sm:$0xf]
        %v1149 = vld [vmem:[%s1033 + $0x10c] sm:$0xf]
        %v1150 = vld [vmem:[%s1033 + $0x110] sm:$0xf]
        %v1151 = vld [vmem:[%s1033 + $0x114] sm:$0xf]
        %v1152 = vld [vmem:[%s1033 + $0x118] sm:$0xf]
        %v1153 = vld [vmem:[%s1033 + $0x11c] sm:$0xf]
        %v1154 = vld [vmem:[%s1033 + $0x120] sm:$0xf]
        %v1155 = vld [vmem:[%s1033 + $0x124] sm:$0xf]
        %v1156 = vld [vmem:[%s1033 + $0x128] sm:$0xf]
        %v1157 = vld [vmem:[%s1033 + $0x12c] sm:$0xf]
        %v1158 = vld [vmem:[%s1033 + $0x130] sm:$0xf]
        %v1159 = vld [vmem:[%s1033 + $0x134] sm:$0xf]
        %v1160 = vld [vmem:[%s1033 + $0x138] sm:$0xf]
        %v1161 = vld [vmem:[%s1033 + $0x13c] sm:$0xf]
        %v1162 = vld [vmem:[%s1033 + $0x140] sm:$0xf]
        %v1163 = vld [vmem:[%s1033 + $0x144] sm:$0xf]
        %v1164 = vld [vmem:[%s1033 + $0x148] sm:$0xf]
        %v1165 = vld [vmem:[%s1033 + $0x14c] sm:$0xf]
        %v1166 = vld [vmem:[%s1033 + $0x150] sm:$0xf]
        %v1167 = vld [vmem:[%s1033 + $0x154] sm:$0xf]
        %v1168 = vld [vmem:[%s1033 + $0x158] sm:$0xf]
        %v1169 = vld [vmem:[%s1033 + $0x15c] sm:$0xf]
        %v1170 = vld [vmem:[%s1033 + $0x160] sm:$0xf]
        %v1171 = vld [vmem:[%s1033 + $0x164] sm:$0xf]
        %v1172 = vld [vmem:[%s1033 + $0x168] sm:$0xf]
        %v1173 = vld [vmem:[%s1033 + $0x16c] sm:$0xf]
        %v1174 = vld [vmem:[%s1033 + $0x170] sm:$0xf]
        %v1175 = vld [vmem:[%s1033 + $0x174] sm:$0xf]
        %v1176 = vld [vmem:[%s1033 + $0x178] sm:$0xf]
        %v1177 = vld [vmem:[%s1033 + $0x17c] sm:$0xf]
        %v1178 = vld [vmem:[%s1033 + $0x180] sm:$0xf]
        %v1179 = vld [vmem:[%s1033 + $0x184] sm:$0xf]
        %v1180 = vld [vmem:[%s1033 + $0x188] sm:$0xf]
        %v1181 = vld [vmem:[%s1033 + $0x18c] sm:$0xf]
        %v1182 = vld [vmem:[%s1033 + $0x190] sm:$0xf]
        %v1183 = vld [vmem:[%s1033 + $0x194] sm:$0xf]
        %v1184 = vld [vmem:[%s1033 + $0x198] sm:$0xf]
        %v1185 = vld [vmem:[%s1033 + $0x19c] sm:$0xf]
        %v1186 = vld [vmem:[%s1033 + $0x1a0] sm:$0xf]
        %v1187 = vld [vmem:[%s1033 + $0x1a4] sm:$0xf]
        %v1188 = vld [vmem:[%s1033 + $0x1a8] sm:$0xf]
        %v1189 = vld [vmem:[%s1033 + $0x1ac] sm:$0xf]
        %v1190 = vld [vmem:[%s1033 + $0x1b0] sm:$0xf]
        %v1191 = vld [vmem:[%s1033 + $0x1b4] sm:$0xf]
        %v1192 = vld [vmem:[%s1033 + $0x1b8] sm:$0xf]
        %v1193 = vld [vmem:[%s1033 + $0x1bc] sm:$0xf]
        %v1194 = vld [vmem:[%s1033 + $0x1c0] sm:$0xf]
        %v1195 = vld [vmem:[%s1033 + $0x1c4] sm:$0xf]
        %v1196 = vld [vmem:[%s1033 + $0x1c8] sm:$0xf]
        %v1197 = vld [vmem:[%s1033 + $0x1cc] sm:$0xf]
        %v1198 = vld [vmem:[%s1033 + $0x1d0] sm:$0xf]
        %v1199 = vld [vmem:[%s1033 + $0x1d4] sm:$0xf]
        %v1200 = vld [vmem:[%s1033 + $0x1d8] sm:$0xf]
        %v1201 = vld [vmem:[%s1033 + $0x1dc] sm:$0xf]
        %v1202 = vld [vmem:[%s1033 + $0x1e0] sm:$0xf]
        %v1203 = vld [vmem:[%s1033 + $0x1e4] sm:$0xf]
        %v1204 = vld [vmem:[%s1033 + $0x1e8] sm:$0xf]
        %v1205 = vld [vmem:[%s1033 + $0x1ec] sm:$0xf]
        %v1206 = vld [vmem:[%s1033 + $0x1f0] sm:$0xf]
        %v1207 = vld [vmem:[%s1033 + $0x1f4] sm:$0xf]
        %v1208 = vld [vmem:[%s1033 + $0x1f8] sm:$0xf]
        %v1209 = vld [vmem:[%s1033 + $0x1fc] sm:$0xf]
        %v1210 = vld [vmem:[%s1033 + $0x200] sm:$0xf]
        %v1211 = vld [vmem:[%s1033 + $0x204] sm:$0xf]
        %v1212 = vld [vmem:[%s1033 + $0x208] sm:$0xf]
        %v1213 = vld [vmem:[%s1033 + $0x20c] sm:$0xf]
        %v1214 = vld [vmem:[%s1033 + $0x210] sm:$0xf]
        %v1215 = vld [vmem:[%s1033 + $0x214] sm:$0xf]
        %v1216 = vld [vmem:[%s1033 + $0x218] sm:$0xf]
        %v1217 = vld [vmem:[%s1033 + $0x21c] sm:$0xf]
        %v1218 = vld [vmem:[%s1033 + $0x220] sm:$0xf]
        %v1219 = vld [vmem:[%s1033 + $0x224] sm:$0xf]
        %v1220 = vld [vmem:[%s1033 + $0x228] sm:$0xf]
        %v1221 = vld [vmem:[%s1033 + $0x22c] sm:$0xf]
        %v1222 = vld [vmem:[%s1033 + $0x230] sm:$0xf]
        %v1223 = vld [vmem:[%s1033 + $0x234] sm:$0xf]
        %v1224 = vld [vmem:[%s1033 + $0x238] sm:$0xf]
        %v1225 = vld [vmem:[%s1033 + $0x23c] sm:$0xf]
        %v1226 = vld [vmem:[%s1033 + $0x240] sm:$0xf]
        %v1227 = vld [vmem:[%s1033 + $0x244] sm:$0xf]
        %v1228 = vld [vmem:[%s1033 + $0x248] sm:$0xf]
        %v1229 = vld [vmem:[%s1033 + $0x24c] sm:$0xf]
        %v1230 = vld [vmem:[%s1033 + $0x250] sm:$0xf]
        %v1231 = vld [vmem:[%s1033 + $0x254] sm:$0xf]
        %v1232 = vld [vmem:[%s1033 + $0x258] sm:$0xf]
        %v1233 = vld [vmem:[%s1033 + $0x25c] sm:$0xf]
        %v1234 = vld [vmem:[%s1033 + $0x260] sm:$0xf]
        %v1235 = vld [vmem:[%s1033 + $0x264] sm:$0xf]
        %v1236 = vld [vmem:[%s1033 + $0x268] sm:$0xf]
        %v1237 = vld [vmem:[%s1033 + $0x26c] sm:$0xf]
        %v1238 = vld [vmem:[%s1033 + $0x270] sm:$0xf]
        %v1239 = vld [vmem:[%s1033 + $0x274] sm:$0xf]
        %v1240 = vld [vmem:[%s1033 + $0x278] sm:$0xf]
        %v1241 = vld [vmem:[%s1033 + $0x27c] sm:$0xf]
        %v1242 = vld [vmem:[%s1033 + $0x280] sm:$0xf]
        %v1243 = vld [vmem:[%s1033 + $0x284] sm:$0xf]
        %v1244 = vld [vmem:[%s1033 + $0x288] sm:$0xf]
        %v1245 = vld [vmem:[%s1033 + $0x28c] sm:$0xf]
        %v1246 = vld [vmem:[%s1033 + $0x290] sm:$0xf]
        %v1247 = vld [vmem:[%s1033 + $0x294] sm:$0xf]
        %v1248 = vld [vmem:[%s1033 + $0x298] sm:$0xf]
        %v1249 = vld [vmem:[%s1033 + $0x29c] sm:$0xf]
        %v1250 = vld [vmem:[%s1033 + $0x2a0] sm:$0xf]
        %v1251 = vld [vmem:[%s1033 + $0x2a4] sm:$0xf]
        %v1252 = vld [vmem:[%s1033 + $0x2a8] sm:$0xf]
        %v1253 = vld [vmem:[%s1033 + $0x2ac] sm:$0xf]
        %v1254 = vld [vmem:[%s1033 + $0x2b0] sm:$0xf]
        %v1255 = vld [vmem:[%s1033 + $0x2b4] sm:$0xf]
        %v1256 = vld [vmem:[%s1033 + $0x2b8] sm:$0xf]
        %v1257 = vld [vmem:[%s1033 + $0x2bc] sm:$0xf]
        %v1258 = vld [vmem:[%s1033 + $0x2c0] sm:$0xf]
        %v1259 = vld [vmem:[%s1033 + $0x2c4] sm:$0xf]
        %v1260 = vld [vmem:[%s1033 + $0x2c8] sm:$0xf]
        %v1261 = vld [vmem:[%s1033 + $0x2cc] sm:$0xf]
        %v1262 = vld [vmem:[%s1033 + $0x2d0] sm:$0xf]
        %v1263 = vld [vmem:[%s1033 + $0x2d4] sm:$0xf]
        %v1264 = vld [vmem:[%s1033 + $0x2d8] sm:$0xf]
        %v1265 = vld [vmem:[%s1033 + $0x2dc] sm:$0xf]
        %v1266 = vld [vmem:[%s1033 + $0x2e0] sm:$0xf]
        %v1267 = vld [vmem:[%s1033 + $0x2e4] sm:$0xf]
        %v1268 = vld [vmem:[%s1033 + $0x2e8] sm:$0xf]
        %v1269 = vld [vmem:[%s1033 + $0x2ec] sm:$0xf]
        %v1270 = vld [vmem:[%s1033 + $0x2f0] sm:$0xf]
        %v1271 = vld [vmem:[%s1033 + $0x2f4] sm:$0xf]
        %v1272 = vld [vmem:[%s1033 + $0x2f8] sm:$0xf]
        %v1273 = vld [vmem:[%s1033 + $0x2fc] sm:$0xf]
        %v1274 = vld [vmem:[%s1033 + $0x300] sm:$0xf]
        %v1275 = vld [vmem:[%s1033 + $0x304] sm:$0xf]
        %v1276 = vld [vmem:[%s1033 + $0x308] sm:$0xf]
        %v1277 = vld [vmem:[%s1033 + $0x30c] sm:$0xf]
        %v1278 = vld [vmem:[%s1063] sm:$0x1]
        %v1280 = vperm.slane %v1278, 0
        %1283 = vst [vmem:[#allocation1] ss:$9 sm:$0xff] %v1080
        %v1284 = vld [vmem:[#allocation1] sm:$0xff]
        %v1285 = vld [vmem:[#allocation1 + $0x9] sm:$0xff]
        %v1286 = vld [vmem:[#allocation1 + $0x12] sm:$0xff]
        %v1287 = vld [vmem:[#allocation1 + $0x1b] sm:$0xff]
        %v1288 = vld [vmem:[#allocation1 + $0x24] sm:$0xff]
        %v1289 = vld [vmem:[#allocation1 + $0x2d] sm:$0xff]
        %v1290 = vld [vmem:[#allocation1 + $0x36] sm:$0xff]
        %v1291 = vld [vmem:[#allocation1 + $0x3f] sm:$0xff]
        %1293 = vst [vmem:[#allocation1] ss:$9 sm:$0xff] %v1081
        %v1294 = vld [vmem:[#allocation1] sm:$0xff]
        %v1295 = vld [vmem:[#allocation1 + $0x9] sm:$0xff]
        %v1296 = vld [vmem:[#allocation1 + $0x12] sm:$0xff]
        %v1297 = vld [vmem:[#allocation1 + $0x1b] sm:$0xff]
        %v1298 = vld [vmem:[#allocation1 + $0x24] sm:$0xff]
        %v1507 = vunpack.c.l.b16 %v1082
        %v1508 = vunpack.c.l.b16 %v1083
        %v1509 = vunpack.c.l.b16 %v1084
        %v1510 = vunpack.c.l.b16 %v1085
        %v1511 = vunpack.c.l.b16 %v1086
        %v1512 = vunpack.c.l.b16 %v1087
        %v1513 = vunpack.c.l.b16 %v1088
        %v1514 = vunpack.c.l.b16 %v1089
        %v1515 = vunpack.c.l.b16 %v1090
        %v1516 = vunpack.c.l.b16 %v1091
        %v1517 = vunpack.c.l.b16 %v1092
        %v1518 = vunpack.c.l.b16 %v1093
        %v1519 = vunpack.c.l.b16 %v1094
        %v1520 = vunpack.c.l.b16 %v1095
        %v1521 = vunpack.c.l.b16 %v1096
        %v1522 = vunpack.c.l.b16 %v1097
        %v1523 = vunpack.c.l.b16 %v1098
        %v1524 = vunpack.c.l.b16 %v1099
        %v1525 = vunpack.c.l.b16 %v1100
        %v1526 = vunpack.c.l.b16 %v1101
        %v1527 = vunpack.c.l.b16 %v1102
        %v1528 = vunpack.c.l.b16 %v1103
        %v1529 = vunpack.c.l.b16 %v1104
        %v1530 = vunpack.c.l.b16 %v1105
        %v1531 = vunpack.c.l.b16 %v1106
        %v1532 = vunpack.c.l.b16 %v1107
        %v1533 = vunpack.c.l.b16 %v1108
        %v1534 = vunpack.c.l.b16 %v1109
        %v1535 = vunpack.c.l.b16 %v1110
        %v1536 = vunpack.c.l.b16 %v1111
        %v1537 = vunpack.c.l.b16 %v1112
        %v1538 = vunpack.c.l.b16 %v1113
        %v1539 = vunpack.c.l.b16 %v1114
        %v1540 = vunpack.c.l.b16 %v1115
        %v1541 = vunpack.c.l.b16 %v1116
        %v1542 = vunpack.c.l.b16 %v1117
        %v1543 = vunpack.c.l.b16 %v1118
        %v1544 = vunpack.c.l.b16 %v1119
        %v1545 = vunpack.c.l.b16 %v1120
        %v1546 = vunpack.c.l.b16 %v1121
        %v1547 = vunpack.c.l.b16 %v1122
        %v1548 = vunpack.c.l.b16 %v1123
        %v1549 = vunpack.c.l.b16 %v1124
        %v1550 = vunpack.c.l.b16 %v1125
        %v1551 = vunpack.c.l.b16 %v1126
        %v1552 = vunpack.c.l.b16 %v1127
        %v1553 = vunpack.c.l.b16 %v1128
        %v1554 = vunpack.c.l.b16 %v1129
        %v1555 = vunpack.c.l.b16 %v1130
        %v1556 = vunpack.c.l.b16 %v1131
        %v1557 = vunpack.c.l.b16 %v1132
        %v1558 = vunpack.c.l.b16 %v1133
        %v1559 = vunpack.c.l.b16 %v1134
        %v1560 = vunpack.c.l.b16 %v1135
        %v1561 = vunpack.c.l.b16 %v1136
        %v1562 = vunpack.c.l.b16 %v1137
        %v1563 = vunpack.c.l.b16 %v1138
        %v1564 = vunpack.c.l.b16 %v1139
        %v1565 = vunpack.c.l.b16 %v1140
        %v1566 = vunpack.c.l.b16 %v1141
        %v1567 = vunpack.c.l.b16 %v1142
        %v1568 = vunpack.c.l.b16 %v1143
        %v1569 = vunpack.c.l.b16 %v1144
        %v1570 = vunpack.c.l.b16 %v1145
        %v1571 = vunpack.c.l.b16 %v1146
        %v1572 = vunpack.c.l.b16 %v1147
        %v1573 = vunpack.c.l.b16 %v1148
        %v1574 = vunpack.c.l.b16 %v1149
        %v1575 = vunpack.c.l.b16 %v1150
        %v1576 = vunpack.c.l.b16 %v1151
        %v1577 = vunpack.c.l.b16 %v1152
        %v1578 = vunpack.c.l.b16 %v1153
        %v1579 = vunpack.c.l.b16 %v1154
        %v1580 = vunpack.c.l.b16 %v1155
        %v1581 = vunpack.c.l.b16 %v1156
        %v1582 = vunpack.c.l.b16 %v1157
        %v1583 = vunpack.c.l.b16 %v1158
        %v1584 = vunpack.c.l.b16 %v1159
        %v1585 = vunpack.c.l.b16 %v1160
        %v1586 = vunpack.c.l.b16 %v1161
        %v1587 = vunpack.c.l.b16 %v1162
        %v1588 = vunpack.c.l.b16 %v1163
        %v1589 = vunpack.c.l.b16 %v1164
        %v1590 = vunpack.c.l.b16 %v1165
        %v1591 = vunpack.c.l.b16 %v1166
        %v1592 = vunpack.c.l.b16 %v1167
        %v1593 = vunpack.c.l.b16 %v1168
        %v1594 = vunpack.c.l.b16 %v1169
        %v1595 = vunpack.c.l.b16 %v1170
        %v1596 = vunpack.c.l.b16 %v1171
        %v1597 = vunpack.c.l.b16 %v1172
        %v1598 = vunpack.c.l.b16 %v1173
        %v1599 = vunpack.c.l.b16 %v1174
        %v1600 = vunpack.c.l.b16 %v1175
        %v1601 = vunpack.c.l.b16 %v1176
        %v1602 = vunpack.c.l.b16 %v1177
        %v1603 = vunpack.c.l.b16 %v1178
        %v1604 = vunpack.c.l.b16 %v1179
        %v1605 = vunpack.c.l.b16 %v1180
        %v1606 = vunpack.c.l.b16 %v1181
        %v1607 = vunpack.c.l.b16 %v1182
        %v1608 = vunpack.c.l.b16 %v1183
        %v1609 = vunpack.c.l.b16 %v1184
        %v1610 = vunpack.c.l.b16 %v1185
        %v1611 = vunpack.c.l.b16 %v1186
        %v1612 = vunpack.c.l.b16 %v1187
        %v1613 = vunpack.c.l.b16 %v1188
        %v1614 = vunpack.c.l.b16 %v1189
        %v1615 = vunpack.c.l.b16 %v1190
        %v1616 = vunpack.c.l.b16 %v1191
        %v1617 = vunpack.c.l.b16 %v1192
        %v1618 = vunpack.c.l.b16 %v1193
        %v1619 = vunpack.c.l.b16 %v1194
        %v1620 = vunpack.c.l.b16 %v1195
        %v1621 = vunpack.c.l.b16 %v1196
        %v1622 = vunpack.c.l.b16 %v1197
        %v1623 = vunpack.c.l.b16 %v1198
        %v1624 = vunpack.c.l.b16 %v1199
        %v1625 = vunpack.c.l.b16 %v1200
        %v1626 = vunpack.c.l.b16 %v1201
        %v1627 = vunpack.c.l.b16 %v1202
        %v1628 = vunpack.c.l.b16 %v1203
        %v1629 = vunpack.c.l.b16 %v1204
        %v1630 = vunpack.c.l.b16 %v1205
        %v1631 = vunpack.c.l.b16 %v1206
        %v1632 = vunpack.c.l.b16 %v1207
        %v1633 = vunpack.c.l.b16 %v1208
        %v1634 = vunpack.c.l.b16 %v1209
        %v1635 = vunpack.c.l.b16 %v1210
        %v1636 = vunpack.c.l.b16 %v1211
        %v1637 = vunpack.c.l.b16 %v1212
        %v1638 = vunpack.c.l.b16 %v1213
        %v1639 = vunpack.c.l.b16 %v1214
        %v1640 = vunpack.c.l.b16 %v1215
        %v1641 = vunpack.c.l.b16 %v1216
        %v1642 = vunpack.c.l.b16 %v1217
        %v1643 = vunpack.c.l.b16 %v1218
        %v1644 = vunpack.c.l.b16 %v1219
        %v1645 = vunpack.c.l.b16 %v1220
        %v1646 = vunpack.c.l.b16 %v1221
        %v1647 = vunpack.c.l.b16 %v1222
        %v1648 = vunpack.c.l.b16 %v1223
        %v1649 = vunpack.c.l.b16 %v1224
        %v1650 = vunpack.c.l.b16 %v1225
        %v1651 = vunpack.c.l.b16 %v1226
        %v1652 = vunpack.c.l.b16 %v1227
        %v1653 = vunpack.c.l.b16 %v1228
        %v1654 = vunpack.c.l.b16 %v1229
        %v1655 = vunpack.c.l.b16 %v1230
        %v1656 = vunpack.c.l.b16 %v1231
        %v1657 = vunpack.c.l.b16 %v1232
        %v1658 = vunpack.c.l.b16 %v1233
        %v1659 = vunpack.c.l.b16 %v1234
        %v1660 = vunpack.c.l.b16 %v1235
        %v1661 = vunpack.c.l.b16 %v1236
        %v1662 = vunpack.c.l.b16 %v1237
        %v1663 = vunpack.c.l.b16 %v1238
        %v1664 = vunpack.c.l.b16 %v1239
        %v1665 = vunpack.c.l.b16 %v1240
        %v1666 = vunpack.c.l.b16 %v1241
        %v1667 = vunpack.c.l.b16 %v1242
        %v1668 = vunpack.c.l.b16 %v1243
        %v1669 = vunpack.c.l.b16 %v1244
        %v1670 = vunpack.c.l.b16 %v1245
        %v1671 = vunpack.c.l.b16 %v1246
        %v1672 = vunpack.c.l.b16 %v1247
        %v1673 = vunpack.c.l.b16 %v1248
        %v1674 = vunpack.c.l.b16 %v1249
        %v1675 = vunpack.c.l.b16 %v1250
        %v1676 = vunpack.c.l.b16 %v1251
        %v1677 = vunpack.c.l.b16 %v1252
        %v1678 = vunpack.c.l.b16 %v1253
        %v1679 = vunpack.c.l.b16 %v1254
        %v1680 = vunpack.c.l.b16 %v1255
        %v1681 = vunpack.c.l.b16 %v1256
        %v1682 = vunpack.c.l.b16 %v1257
        %v1683 = vunpack.c.l.b16 %v1258
        %v1684 = vunpack.c.l.b16 %v1259
        %v1685 = vunpack.c.l.b16 %v1260
        %v1686 = vunpack.c.l.b16 %v1261
        %v1687 = vunpack.c.l.b16 %v1262
        %v1688 = vunpack.c.l.b16 %v1263
        %v1689 = vunpack.c.l.b16 %v1264
        %v1690 = vunpack.c.l.b16 %v1265
        %v1691 = vunpack.c.l.b16 %v1266
        %v1692 = vunpack.c.l.b16 %v1267
        %v1693 = vunpack.c.l.b16 %v1268
        %v1694 = vunpack.c.l.b16 %v1269
        %v1695 = vunpack.c.l.b16 %v1270
        %v1696 = vunpack.c.l.b16 %v1271
        %v1697 = vunpack.c.l.b16 %v1272
        %v1698 = vunpack.c.l.b16 %v1273
        %v1699 = vunpack.c.l.b16 %v1274
        %v1700 = vunpack.c.l.b16 %v1275
        %v1701 = vunpack.c.l.b16 %v1276
        %v1702 = vunpack.c.l.b16 %v1277
        %v1703 = vpack.c.b16 %v1508, %v1507
        %v1704 = vpack.c.b16 %v1510, %v1509
        %v1705 = vpack.c.b16 %v1512, %v1511
        %v1706 = vpack.c.b16 %v1514, %v1513
        %v1707 = vpack.c.b16 %v1516, %v1515
        %v1708 = vpack.c.b16 %v1518, %v1517
        %v1709 = vpack.c.b16 %v1520, %v1519
        %v1710 = vpack.c.b16 %v1522, %v1521
        %v1711 = vpack.c.b16 %v1524, %v1523
        %v1712 = vpack.c.b16 %v1526, %v1525
        %v1713 = vpack.c.b16 %v1528, %v1527
        %v1714 = vpack.c.b16 %v1530, %v1529
        %v1715 = vpack.c.b16 %v1532, %v1531
        %v1716 = vpack.c.b16 %v1534, %v1533
        %v1717 = vpack.c.b16 %v1536, %v1535
        %v1718 = vpack.c.b16 %v1538, %v1537
        %v1719 = vpack.c.b16 %v1540, %v1539
        %v1720 = vpack.c.b16 %v1542, %v1541
        %v1721 = vpack.c.b16 %v1544, %v1543
        %v1722 = vpack.c.b16 %v1546, %v1545
        %v1723 = vpack.c.b16 %v1548, %v1547
        %v1724 = vpack.c.b16 %v1550, %v1549
        %v1725 = vpack.c.b16 %v1552, %v1551
        %v1726 = vpack.c.b16 %v1554, %v1553
        %v1727 = vpack.c.b16 %v1556, %v1555
        %v1728 = vpack.c.b16 %v1558, %v1557
        %v1729 = vpack.c.b16 %v1560, %v1559
        %v1730 = vpack.c.b16 %v1562, %v1561
        %v1731 = vpack.c.b16 %v1564, %v1563
        %v1732 = vpack.c.b16 %v1566, %v1565
        %v1733 = vpack.c.b16 %v1568, %v1567
        %v1734 = vpack.c.b16 %v1570, %v1569
        %v1735 = vpack.c.b16 %v1572, %v1571
        %v1736 = vpack.c.b16 %v1574, %v1573
        %v1737 = vpack.c.b16 %v1576, %v1575
        %v1738 = vpack.c.b16 %v1578, %v1577
        %v1739 = vpack.c.b16 %v1580, %v1579
        %v1740 = vpack.c.b16 %v1582, %v1581
        %v1741 = vpack.c.b16 %v1584, %v1583
        %v1742 = vpack.c.b16 %v1586, %v1585
        %v1743 = vpack.c.b16 %v1588, %v1587
        %v1744 = vpack.c.b16 %v1590, %v1589
        %v1745 = vpack.c.b16 %v1592, %v1591
        %v1746 = vpack.c.b16 %v1594, %v1593
        %v1747 = vpack.c.b16 %v1596, %v1595
        %v1748 = vpack.c.b16 %v1598, %v1597
        %v1749 = vpack.c.b16 %v1600, %v1599
        %v1750 = vpack.c.b16 %v1602, %v1601
        %v1751 = vpack.c.b16 %v1604, %v1603
        %v1752 = vpack.c.b16 %v1606, %v1605
        %v1753 = vpack.c.b16 %v1608, %v1607
        %v1754 = vpack.c.b16 %v1610, %v1609
        %v1755 = vpack.c.b16 %v1612, %v1611
        %v1756 = vpack.c.b16 %v1614, %v1613
        %v1757 = vpack.c.b16 %v1616, %v1615
        %v1758 = vpack.c.b16 %v1618, %v1617
        %v1759 = vpack.c.b16 %v1620, %v1619
        %v1760 = vpack.c.b16 %v1622, %v1621
        %v1761 = vpack.c.b16 %v1624, %v1623
        %v1762 = vpack.c.b16 %v1626, %v1625
        %v1763 = vpack.c.b16 %v1628, %v1627
        %v1764 = vpack.c.b16 %v1630, %v1629
        %v1765 = vpack.c.b16 %v1632, %v1631
        %v1766 = vpack.c.b16 %v1634, %v1633
        %v1767 = vpack.c.b16 %v1636, %v1635
        %v1768 = vpack.c.b16 %v1638, %v1637
        %v1769 = vpack.c.b16 %v1640, %v1639
        %v1770 = vpack.c.b16 %v1642, %v1641
        %v1771 = vpack.c.b16 %v1644, %v1643
        %v1772 = vpack.c.b16 %v1646, %v1645
        %v1773 = vpack.c.b16 %v1648, %v1647
        %v1774 = vpack.c.b16 %v1650, %v1649
        %v1775 = vpack.c.b16 %v1652, %v1651
        %v1776 = vpack.c.b16 %v1654, %v1653
        %v1777 = vpack.c.b16 %v1656, %v1655
        %v1778 = vpack.c.b16 %v1658, %v1657
        %v1779 = vpack.c.b16 %v1660, %v1659
        %v1780 = vpack.c.b16 %v1662, %v1661
        %v1781 = vpack.c.b16 %v1664, %v1663
        %v1782 = vpack.c.b16 %v1666, %v1665
        %v1783 = vpack.c.b16 %v1668, %v1667
        %v1784 = vpack.c.b16 %v1670, %v1669
        %v1785 = vpack.c.b16 %v1672, %v1671
        %v1786 = vpack.c.b16 %v1674, %v1673
        %v1787 = vpack.c.b16 %v1676, %v1675
        %v1788 = vpack.c.b16 %v1678, %v1677
        %v1789 = vpack.c.b16 %v1680, %v1679
        %v1790 = vpack.c.b16 %v1682, %v1681
        %v1791 = vpack.c.b16 %v1684, %v1683
        %v1792 = vpack.c.b16 %v1686, %v1685
        %v1793 = vpack.c.b16 %v1688, %v1687
        %v1794 = vpack.c.b16 %v1690, %v1689
        %v1795 = vpack.c.b16 %v1692, %v1691
        %v1796 = vpack.c.b16 %v1694, %v1693
        %v1797 = vpack.c.b16 %v1696, %v1695
        %v1798 = vpack.c.b16 %v1698, %v1697
        %v1799 = vpack.c.b16 %v1700, %v1699
        %v1800 = vpack.c.b16 %v1702, %v1701
        %vm1899 = vcmask 261120
        %v1900 = vsel %vm1899, %v1298, 0
        %1902 = vmatpush.bf16.msra.mxu0 %v1710
        %1903 = vmatpush.bf16.msra.mxu0 %v1709
        %1904 = vmatpush.bf16.msra.mxu0 %v1708
        %1905 = vmatpush.bf16.msra.mxu0 %v1707
        %1906 = vmatpush.bf16.msra.mxu0 %v1706
        %1907 = vmatpush.bf16.msra.mxu0 %v1705
        %1908 = vmatpush.bf16.msra.mxu0 %v1704
        %1909 = vmatpush.bf16.msra.mxu0 %v1703
        %1910 = vmatmul.bf16.gmra.mxu0 %v1284
        %v1911 = vpop.f32.mrf.mxu0
        %v1912 = vadd.f32 %v1280, %v1911
        %v1913 = vpop.f32.mrf.mxu0
        %1914 = vdwg.mxu0
        %1915 = vmatpush.bf16.msra.mxu0 %v1718
        %1916 = vmatpush.bf16.msra.mxu0 %v1717
        %1917 = vmatpush.bf16.msra.mxu0 %v1716
        %1918 = vmatpush.bf16.msra.mxu0 %v1715
        %1919 = vmatpush.bf16.msra.mxu0 %v1714
        %1920 = vmatpush.bf16.msra.mxu0 %v1713
        %1921 = vmatpush.bf16.msra.mxu0 %v1712
        %1922 = vmatpush.bf16.msra.mxu0 %v1711
        %1923 = vmatmul.bf16.gmra.mxu0 %v1285
        %v1924 = vpop.f32.mrf.mxu0
        %v1925 = vadd.f32 %v1912, %v1924
        %v1926 = vpop.f32.mrf.mxu0
        %1927 = vdwg.mxu0
        %1928 = vmatpush.bf16.msra.mxu0 %v1726
        %1929 = vmatpush.bf16.msra.mxu0 %v1725
        %1930 = vmatpush.bf16.msra.mxu0 %v1724
        %1931 = vmatpush.bf16.msra.mxu0 %v1723
        %1932 = vmatpush.bf16.msra.mxu0 %v1722
        %1933 = vmatpush.bf16.msra.mxu0 %v1721
        %1934 = vmatpush.bf16.msra.mxu0 %v1720
        %1935 = vmatpush.bf16.msra.mxu0 %v1719
        %1936 = vmatmul.bf16.gmra.mxu0 %v1286
        %v1937 = vpop.f32.mrf.mxu0
        %v1938 = vadd.f32 %v1925, %v1937
        %v1939 = vpop.f32.mrf.mxu0
        %1940 = vdwg.mxu0
        %1941 = vmatpush.bf16.msra.mxu0 %v1734
        %1942 = vmatpush.bf16.msra.mxu0 %v1733
        %1943 = vmatpush.bf16.msra.mxu0 %v1732
        %1944 = vmatpush.bf16.msra.mxu0 %v1731
        %1945 = vmatpush.bf16.msra.mxu0 %v1730
        %1946 = vmatpush.bf16.msra.mxu0 %v1729
        %1947 = vmatpush.bf16.msra.mxu0 %v1728
        %1948 = vmatpush.bf16.msra.mxu0 %v1727
        %1949 = vmatmul.bf16.gmra.mxu0 %v1287
        %v1950 = vpop.f32.mrf.mxu0
        %v1951 = vadd.f32 %v1938, %v1950
        %v1952 = vpop.f32.mrf.mxu0
        %1953 = vdwg.mxu0
        %1954 = vmatpush.bf16.msra.mxu0 %v1742
        %1955 = vmatpush.bf16.msra.mxu0 %v1741
        %1956 = vmatpush.bf16.msra.mxu0 %v1740
        %1957 = vmatpush.bf16.msra.mxu0 %v1739
        %1958 = vmatpush.bf16.msra.mxu0 %v1738
        %1959 = vmatpush.bf16.msra.mxu0 %v1737
        %1960 = vmatpush.bf16.msra.mxu0 %v1736
        %1961 = vmatpush.bf16.msra.mxu0 %v1735
        %1962 = vmatmul.bf16.gmra.mxu0 %v1288
        %v1963 = vpop.f32.mrf.mxu0
        %v1964 = vadd.f32 %v1951, %v1963
        %v1965 = vpop.f32.mrf.mxu0
        %1966 = vdwg.mxu0
        %1967 = vmatpush.bf16.msra.mxu0 %v1750
        %1968 = vmatpush.bf16.msra.mxu0 %v1749
        %1969 = vmatpush.bf16.msra.mxu0 %v1748
        %1970 = vmatpush.bf16.msra.mxu0 %v1747
        %1971 = vmatpush.bf16.msra.mxu0 %v1746
        %1972 = vmatpush.bf16.msra.mxu0 %v1745
        %1973 = vmatpush.bf16.msra.mxu0 %v1744
        %1974 = vmatpush.bf16.msra.mxu0 %v1743
        %1975 = vmatmul.bf16.gmra.mxu0 %v1289
        %v1976 = vpop.f32.mrf.mxu0
        %v1977 = vadd.f32 %v1964, %v1976
        %v1978 = vpop.f32.mrf.mxu0
        %1979 = vdwg.mxu0
        %1980 = vmatpush.bf16.msra.mxu0 %v1758
        %1981 = vmatpush.bf16.msra.mxu0 %v1757
        %1982 = vmatpush.bf16.msra.mxu0 %v1756
        %1983 = vmatpush.bf16.msra.mxu0 %v1755
        %1984 = vmatpush.bf16.msra.mxu0 %v1754
        %1985 = vmatpush.bf16.msra.mxu0 %v1753
        %1986 = vmatpush.bf16.msra.mxu0 %v1752
        %1987 = vmatpush.bf16.msra.mxu0 %v1751
        %1988 = vmatmul.bf16.gmra.mxu0 %v1290
        %v1989 = vpop.f32.mrf.mxu0
        %v1990 = vadd.f32 %v1977, %v1989
        %v1991 = vpop.f32.mrf.mxu0
        %1992 = vdwg.mxu0
        %1993 = vmatpush.bf16.msra.mxu0 %v1766
        %1994 = vmatpush.bf16.msra.mxu0 %v1765
        %1995 = vmatpush.bf16.msra.mxu0 %v1764
        %1996 = vmatpush.bf16.msra.mxu0 %v1763
        %1997 = vmatpush.bf16.msra.mxu0 %v1762
        %1998 = vmatpush.bf16.msra.mxu0 %v1761
        %1999 = vmatpush.bf16.msra.mxu0 %v1760
        %2000 = vmatpush.bf16.msra.mxu0 %v1759
        %2001 = vmatmul.bf16.gmra.mxu0 %v1291
        %v2002 = vpop.f32.mrf.mxu0
        %v2003 = vadd.f32 %v1990, %v2002
        %v2004 = vpop.f32.mrf.mxu0
        %2005 = vdwg.mxu0
        %2006 = vmatpush.bf16.msra.mxu0 %v1774
        %2007 = vmatpush.bf16.msra.mxu0 %v1773
        %2008 = vmatpush.bf16.msra.mxu0 %v1772
        %2009 = vmatpush.bf16.msra.mxu0 %v1771
        %2010 = vmatpush.bf16.msra.mxu0 %v1770
        %2011 = vmatpush.bf16.msra.mxu0 %v1769
        %2012 = vmatpush.bf16.msra.mxu0 %v1768
        %2013 = vmatpush.bf16.msra.mxu0 %v1767
        %2014 = vmatmul.bf16.gmra.mxu0 %v1294
        %v2015 = vpop.f32.mrf.mxu0
        %v2016 = vadd.f32 %v2003, %v2015
        %v2017 = vpop.f32.mrf.mxu0
        %2018 = vdwg.mxu0
        %2019 = vmatpush.bf16.msra.mxu0 %v1782
        %2020 = vmatpush.bf16.msra.mxu0 %v1781
        %2021 = vmatpush.bf16.msra.mxu0 %v1780
        %2022 = vmatpush.bf16.msra.mxu0 %v1779
        %2023 = vmatpush.bf16.msra.mxu0 %v1778
        %2024 = vmatpush.bf16.msra.mxu0 %v1777
        %2025 = vmatpush.bf16.msra.mxu0 %v1776
        %2026 = vmatpush.bf16.msra.mxu0 %v1775
        %2027 = vmatmul.bf16.gmra.mxu0 %v1295
        %v2028 = vpop.f32.mrf.mxu0
        %v2029 = vadd.f32 %v2016, %v2028
        %v2030 = vpop.f32.mrf.mxu0
        %2031 = vdwg.mxu0
        %2032 = vmatpush.bf16.msra.mxu0 %v1790
        %2033 = vmatpush.bf16.msra.mxu0 %v1789
        %2034 = vmatpush.bf16.msra.mxu0 %v1788
        %2035 = vmatpush.bf16.msra.mxu0 %v1787
        %2036 = vmatpush.bf16.msra.mxu0 %v1786
        %2037 = vmatpush.bf16.msra.mxu0 %v1785
        %2038 = vmatpush.bf16.msra.mxu0 %v1784
        %2039 = vmatpush.bf16.msra.mxu0 %v1783
        %2040 = vmatmul.bf16.gmra.mxu0 %v1296
        %v2041 = vpop.f32.mrf.mxu0
        %v2042 = vadd.f32 %v2029, %v2041
        %v2043 = vpop.f32.mrf.mxu0
        %2044 = vdwg.mxu0
        %2045 = vmatpush.bf16.msra.mxu0 %v1798
        %2046 = vmatpush.bf16.msra.mxu0 %v1797
        %2047 = vmatpush.bf16.msra.mxu0 %v1796
        %2048 = vmatpush.bf16.msra.mxu0 %v1795
        %2049 = vmatpush.bf16.msra.mxu0 %v1794
        %2050 = vmatpush.bf16.msra.mxu0 %v1793
        %2051 = vmatpush.bf16.msra.mxu0 %v1792
        %2052 = vmatpush.bf16.msra.mxu0 %v1791
        %2053 = vmatmul.bf16.gmra.mxu0 %v1297
        %v2054 = vpop.f32.mrf.mxu0
        %v2055 = vadd.f32 %v2042, %v2054
        %v2056 = vpop.f32.mrf.mxu0
        %2057 = vdwg.mxu0
        %2058 = vmatpush.bf16.msra.mxu0 0
        %2059 = vmatpush.bf16.msra.mxu0 0
        %2060 = vmatpush.bf16.msra.mxu0 0
        %2061 = vmatpush.bf16.msra.mxu0 0
        %2062 = vmatpush.bf16.msra.mxu0 0
        %2063 = vmatpush.bf16.msra.mxu0 0
        %2064 = vmatpush.bf16.msra.mxu0 %v1800
        %2065 = vmatpush.bf16.msra.mxu0 %v1799
        %2066 = vmatmul.bf16.gmra.mxu0 %v1900
        %v2067 = vpop.f32.mrf.mxu0
        %v2068 = vadd.f32 %v2055, %v2067
        %v2069 = vpop.f32.mrf.mxu0
        %2070 = vdwg.mxu0
        %v2071 = vmax.f32 %v2068, 0.0
        %v2072 = vld [vmem:[#allocation3] sm:$0x3]
        %v2073 = vpack.c.bf16 %v2071, %v2071
        %v2074 = vld [vmem:[%s1068] sm:$0xf]
        %v2075 = vld [vmem:[%s1068 + $0x4] sm:$0xf]
        %v2076 = vld [vmem:[%s1068 + $0x8] sm:$0xf]
        %v2077 = vld [vmem:[%s1068 + $0xc] sm:$0xf]
        %v2078 = vld [vmem:[%s1068 + $0x10] sm:$0xf]
        %v2079 = vld [vmem:[%s1068 + $0x14] sm:$0xf]
        %v2080 = vld [vmem:[%s1068 + $0x18] sm:$0xf]
        %v2081 = vld [vmem:[%s1068 + $0x1c] sm:$0xf]
        %v2082 = vld [vmem:[%s1068 + $0x20] sm:$0xf]
        %v2083 = vld [vmem:[%s1068 + $0x24] sm:$0xf]
        %v2084 = vld [vmem:[%s1068 + $0x28] sm:$0xf]
        %v2085 = vld [vmem:[%s1068 + $0x2c] sm:$0xf]
        %v2086 = vld [vmem:[%s1068 + $0x30] sm:$0xf]
        %v2087 = vld [vmem:[%s1068 + $0x34] sm:$0xf]
        %v2088 = vld [vmem:[%s1068 + $0x38] sm:$0xf]
        %v2089 = vld [vmem:[%s1068 + $0x3c] sm:$0xf]
        %v2106 = vunpack.c.l.b16 %v2074
        %v2107 = vunpack.c.l.b16 %v2075
        %v2108 = vunpack.c.l.b16 %v2076
        %v2109 = vunpack.c.l.b16 %v2077
        %v2110 = vunpack.c.l.b16 %v2078
        %v2111 = vunpack.c.l.b16 %v2079
        %v2112 = vunpack.c.l.b16 %v2080
        %v2113 = vunpack.c.l.b16 %v2081
        %v2114 = vunpack.c.l.b16 %v2082
        %v2115 = vunpack.c.l.b16 %v2083
        %v2116 = vunpack.c.l.b16 %v2084
        %v2117 = vunpack.c.l.b16 %v2085
        %v2118 = vunpack.c.l.b16 %v2086
        %v2119 = vunpack.c.l.b16 %v2087
        %v2120 = vunpack.c.l.b16 %v2088
        %v2121 = vunpack.c.l.b16 %v2089
        %v2122 = vpack.c.b16 %v2107, %v2106
        %v2123 = vpack.c.b16 %v2109, %v2108
        %v2124 = vpack.c.b16 %v2111, %v2110
        %v2125 = vpack.c.b16 %v2113, %v2112
        %v2126 = vpack.c.b16 %v2115, %v2114
        %v2127 = vpack.c.b16 %v2117, %v2116
        %v2128 = vpack.c.b16 %v2119, %v2118
        %v2129 = vpack.c.b16 %v2121, %v2120
        %2138 = vmatpush.bf16.msra.mxu0 %v2129
        %2139 = vmatpush.bf16.msra.mxu0 %v2128
        %2140 = vmatpush.bf16.msra.mxu0 %v2127
        %2141 = vmatpush.bf16.msra.mxu0 %v2126
        %2142 = vmatpush.bf16.msra.mxu0 %v2125
        %2143 = vmatpush.bf16.msra.mxu0 %v2124
        %2144 = vmatpush.bf16.msra.mxu0 %v2123
        %2145 = vmatpush.bf16.msra.mxu0 %v2122
        %2146 = vmatmul.bf16.gmra.mxu0 %v2073
        %v2147 = vpop.f32.mrf.mxu0
        %v2148 = vadd.f32 0.0, %v2147
        %v2149 = vpop.f32.mrf.mxu0
        %2150 = vdwg.mxu0
        %v2151 = vadd.f32 %v2072, %v2148
        %2152 = vst [vmem:[#allocation3] sm:$0x3] %v2151
        // Predicated region
        $region86: #{dqn_forward.7} parent=76 // pred_check
          %p2153 = pneg %p150
        $region87: #{dqn_forward.7} parent=76 // pred_check_branch
          %2155 = sbr.rel (%p2153) target = $region89
        $region88: #{dqn_forward.7} parent=76 // pred_region
          %2157 = vsyncadd [#allocation4], 0
          %s2159 = sshll.u32 [#allocation3], 4
          %s2160 = int_to_ptr.vmem [resolvable:$true] %s2159
          %s2161 = sshll.u32 %s5, 4
          %s2162 = int_to_ptr.hbm [resolvable:$true] %s2161
          %2164 = dma.vmem_to_hbm [thread:$0]  %s2160, 32, %s2162, [#allocation4]
        $region89: #{dqn_forward.7} parent=76 // pred_fallthru
          _
        // Predicated region
        $region90: #{dqn_forward.7} parent=76 // pred_check
          %p2165 = pneg %p150
        $region91: #{dqn_forward.7} parent=76 // pred_check_branch
          %2167 = sbr.rel (%p2165) target = $region93
        $region92: #{dqn_forward.7} parent=76 // pred_region
          %2169 = dma.done [#allocation4], 32
        $region93: #{dqn_forward.7} parent=76 // pred_fallthru
          _
      $region77: #{dqn_forward.7} parent=5 // pred_fallthru
        _
      %p2170 = scmp.le.s32.totalorder 2, %s12
      // Predicated region
      $region94: #{dqn_forward.7} parent=5 // pred_check
        %p2171 = pneg %p2170
      $region95: #{dqn_forward.7} parent=5 // pred_check_branch
        %2173 = sbr.rel (%p2171) target = $region97
      $region96: #{dqn_forward.7} parent=5 // pred_region
        %s2174 = ssub.s32 %s12, 2
      $region97: #{dqn_forward.7} parent=5 // pred_fallthru
        _
    $region6: #{dqn_forward.7} parent=1 // loop_footer
      %s16 = sadd.s32 1, %s12
    $region7: #{dqn_forward.7} parent=1 // loop_footer_branch
      %11 = sbr.rel target = $region3
    $region8: #{dqn_forward.7} parent=1 // loop_exit
      _
    %2175 = vsyncpa [#allocation4], 1
    %s2176 = scalar_lea.sflag [#allocation4], 1
    %2177 = vsyncpa %s2176, 1

</llo_original>
